<compile_context>
chip_gen: v7x
topology: tpu7x:2x2x1
jax: 0.10.0
libtpu: 0.0.40
codegen_flags: <defaults>
</compile_context>

<pallas_src>
import functools

import jax
import jax.numpy as jnp
import numpy as np
from jax.experimental import pallas as pl
from jax.experimental.pallas import tpu as pltpu


# ------------------------------- fused kernel -------------------------------

def _fused_inverted_residual_kernel(
    *refs, expand, skip, has_halo, td, H, W, cin, hidden, planes):
  """One grid step = one (batch, depth-tile): expand + DW 3x3x3 + project."""
  i = 0
  xc_ref = refs[i]; i += 1
  if has_halo:
    xp_ref, xn_ref = refs[i], refs[i + 1]; i += 2
  if expand:
    we_ref, b1_ref = refs[i], refs[i + 1]; i += 2
  wdw_ref, b2_ref, wp_ref, b3_ref, o_ref, hpad_ref = refs[i:i + 6]

  dt = pl.program_id(1)
  nd = pl.num_programs(1)

  Wc = W * cin
  Wh = W * hidden
  f32 = jnp.float32

  def expand2d(v2d):
    # (rows, W*cin) -> (rows, W*hidden): BN1-folded 1x1x1 conv + ReLU6 routed
    # through the MXU via a block-diagonal weight so the result stays in the
    # fused (W, channel) lane layout.
    if expand:
      y = jnp.dot(v2d, we_ref[...], preferred_element_type=f32,
                  precision=jax.lax.Precision.HIGHEST)
      return jnp.clip(y + b1_ref[...], 0.0, 6.0)
    return v2d.astype(f32)

  # ---- stage 1: expanded activation into the zero-padded VMEM scratch ------
  # Zero only the 1-deep rim (H rows 0 / H+1 and W lane groups 0 / W+1); the
  # interior is fully overwritten below.
  hpad_ref[:, 0:1, :] = jnp.zeros((td + 2, 1, (W + 2) * hidden), f32)
  hpad_ref[:, H + 1:H + 2, :] = jnp.zeros((td + 2, 1, (W + 2) * hidden), f32)
  hpad_ref[:, :, 0:hidden] = jnp.zeros((td + 2, H + 2, hidden), f32)
  hpad_ref[:, :, (W + 1) * hidden:(W + 2) * hidden] = jnp.zeros(
      (td + 2, H + 2, hidden), f32)

  xc = xc_ref[0]                                             # (td, H, W*cin)
  centre = expand2d(xc.reshape(td * H, Wc)).reshape(td, H, Wh)
  hpad_ref[1:1 + td, 1:1 + H, hidden:(W + 1) * hidden] = centre

  # Depth halo faces: expanded neighbour rows inside the volume, zeros at the
  # volume boundary.  pl.when means boundary tiles never pay for an expansion
  # that would be multiplied by zero.
  zero_face = jnp.zeros((H, Wh), f32)
  if has_halo:
    @pl.when(dt > 0)
    def _():
      hpad_ref[0, 1:1 + H, hidden:(W + 1) * hidden] = expand2d(xp_ref[0, 0])

    @pl.when(dt == 0)
    def _():
      hpad_ref[0, 1:1 + H, hidden:(W + 1) * hidden] = zero_face

    @pl.when(dt < nd - 1)
    def _():
      hpad_ref[1 + td, 1:1 + H, hidden:(W + 1) * hidden] = expand2d(xn_ref[0, 0])

    @pl.when(dt == nd - 1)
    def _():
      hpad_ref[1 + td, 1:1 + H, hidden:(W + 1) * hidden] = zero_face
  else:
    hpad_ref[0, 1:1 + H, hidden:(W + 1) * hidden] = zero_face
    hpad_ref[1 + td, 1:1 + H, hidden:(W + 1) * hidden] = zero_face

  # ---- stage 2: depthwise 3x3x3 (BN2 folded) + shift + ReLU6 ---------------
  # TODO(synk): only stride (1,1,1) is supported by the fused lane layout;
  #             strided depthwise would need lane-group decimation.
  acc = jnp.zeros((td, H, Wh), f32)
  wdw = wdw_ref[...]                                         # (27, W*hidden)
  for kd in range(3):
    for kh in range(3):
      for kw in range(3):
        win = hpad_ref[kd:kd + td, kh:kh + H,
                       kw * hidden:(kw + W) * hidden]
        acc = acc + win * wdw[kd * 9 + kh * 3 + kw]
  acc = jnp.clip(acc + b2_ref[...], 0.0, 6.0)

  # ---- stage 3: 1x1x1 projection (BN3 folded) + optional residual ----------
  proj = jnp.dot(acc.reshape(td * H, Wh), wp_ref[...],
                 preferred_element_type=f32,
                 precision=jax.lax.Precision.HIGHEST)        # (td*H, W*planes)
  proj = proj + b3_ref[...]
  if skip:
    proj = proj + xc.reshape(td * H, Wc).astype(f32)
  o_ref[0] = proj.reshape(td, H, W * planes).astype(o_ref.dtype)


# ------------------------------- host helpers -------------------------------

def _block_diag(w, reps):
  """(cin, cout) -> (reps*cin, reps*cout) block-diagonal (exact broadcasting)."""
  cin, cout = w.shape
  eye = jnp.eye(reps, dtype=w.dtype)
  return (eye[:, None, :, None] * w[None, :, None, :]).reshape(
      reps * cin, reps * cout)


def _padded_f32_bytes(shape):
  """f32 VMEM footprint of `shape` with (8, 128) padding on the minor dims."""
  lead = 1
  for s in shape[:-2]:
    lead *= int(s)
  sub = -(-int(shape[-2]) // 8) * 8
  lane = -(-int(shape[-1]) // 128) * 128
  return lead * sub * lane * 4


# ------------------------------- host wrapper --------------------------------

def inverted_residual_forward(x, params, stride, expand_ratio, skip,
                              *, depth_tile=None):
  """x: (N, D, H, W, Cin) float32 channels-last. Returns (N, D, H, W, planes)."""
  N, D, H, W, cin = x.shape
  if tuple(stride) != (1, 1, 1):
    # TODO(synk): strided depthwise path not supported by the fused kernel.
    raise NotImplementedError("fused InvertedResidual kernel: stride must be (1,1,1)")

  expand = expand_ratio != 1
  hidden = params["w_dw"].shape[-1]
  planes = params["w_project"].shape[1]

  # Fold BN scales into the conv weights (eval mode) and pre-tile them into the
  # fused (W, channel) lane layout.
  s2, b2 = params["bn2"]
  wdw = jnp.tile((params["w_dw"] * s2).reshape(27, hidden).astype(jnp.float32),
                 (1, W))                                      # (27, W*hidden)
  b2_t = jnp.tile(b2.astype(jnp.float32), W).reshape(1, W * hidden)

  s3, b3 = params["bn3"]
  wp_bd = _block_diag((params["w_project"] * s3[None, :]).astype(jnp.float32), W)
  b3_t = jnp.tile(b3.astype(jnp.float32), W).reshape(1, W * planes)

  if expand:
    s1, b1 = params["bn1"]
    we_bd = _block_diag((params["w_expand"] * s1[None, :]).astype(jnp.float32), W)
    b1_t = jnp.tile(b1.astype(jnp.float32), W).reshape(1, W * hidden)

  # Lane-dense activations: merge W with channels at the pallas_call boundary.
  x_flat = x.reshape(N, D, H, W * cin)

  # Depth-tile selection: largest divisor of D that fits the VMEM budget while
  # keeping >= 2 "parallel" grid steps (dual-TensorCore chips).
  try:
    vmem_cap = int(pltpu.get_tpu_info().vmem_capacity_bytes)
  except Exception:
    vmem_cap = 64 * 1024 * 1024          # conservative (v7x physical) fallback
  budget = min(vmem_cap // 2, 48 * 1024 * 1024)

  weight_bytes = 2 * (_padded_f32_bytes((27, W * hidden))
                      + _padded_f32_bytes((1, W * hidden))
                      + _padded_f32_bytes((W * hidden, W * planes))
                      + _padded_f32_bytes((1, W * planes)))
  if expand:
    weight_bytes += 2 * (_padded_f32_bytes((W * cin, W * hidden))
                         + _padded_f32_bytes((1, W * hidden)))

  def vmem_need(td_):
    scratch = _padded_f32_bytes((td_ + 2, H + 2, (W + 2) * hidden))
    blocks = 2 * (_padded_f32_bytes((1, td_, H, W * cin))
                  + 2 * _padded_f32_bytes((1, 1, H, W * cin))
                  + _padded_f32_bytes((1, td_, H, W * planes)))
    return scratch + blocks + weight_bytes

  if depth_tile is not None:
    assert D % depth_tile == 0
    td = depth_tile
  else:
    td = 1
    for cand in sorted((d for d in range(1, D + 1) if D % d == 0), reverse=True):
      nd_ = D // cand
      if N * nd_ < 2 and nd_ < D:
        continue                          # keep both TensorCores busy (v7x)
      if vmem_need(cand) <= budget:
        td = cand
        break
  nd = D // td
  has_halo = nd > 1

  grid = (N, nd)

  def wspec(shp):
    return pl.BlockSpec(shp, lambda n, d: (0, 0))

  in_specs = [pl.BlockSpec((1, td, H, W * cin), lambda n, d: (n, d, 0, 0))]
  inputs = [x_flat]
  if has_halo:
    in_specs += [
        pl.BlockSpec((1, 1, H, W * cin),
                     lambda n, d: (n, jnp.maximum(d * td - 1, 0), 0, 0)),
        pl.BlockSpec((1, 1, H, W * cin),
                     lambda n, d: (n, jnp.minimum((d + 1) * td, D - 1), 0, 0)),
    ]
    inputs += [x_flat, x_flat]
  if expand:
    in_specs += [wspec((W * cin, W * hidden)), wspec((1, W * hidden))]
    inputs += [we_bd, b1_t]
  in_specs += [wspec((27, W * hidden)), wspec((1, W * hidden)),
               wspec((W * hidden, W * planes)), wspec((1, W * planes))]
  inputs += [wdw, b2_t, wp_bd, b3_t]

  out_spec = pl.BlockSpec((1, td, H, W * planes), lambda n, d: (n, d, 0, 0))
  out_shape = jax.ShapeDtypeStruct((N, D, H, W * planes), jnp.float32)

  kernel = functools.partial(
      _fused_inverted_residual_kernel,
      expand=expand, skip=skip, has_halo=has_halo,
      td=td, H=H, W=W, cin=cin, hidden=hidden, planes=planes)

  vmem_limit = int(min(max(vmem_cap - (8 << 20), 16 << 20),
                       max(3 * vmem_need(td), 32 << 20)))

  out = pl.pallas_call(
      kernel,
      grid=grid,
      in_specs=in_specs,
      out_specs=out_spec,
      out_shape=out_shape,
      scratch_shapes=[pltpu.VMEM((td + 2, H + 2, (W + 2) * hidden),
                                 jnp.float32)],
      compiler_params=pltpu.CompilerParams(
          dimension_semantics=("parallel", "parallel"),
          vmem_limit_bytes=vmem_limit),
  )(*inputs)
  return out.reshape(N, D, H, W, planes)


# ----------------------------- pure-JAX reference ---------------------------

def ref_forward(x, params, stride, expand_ratio, skip):
  hi = jax.lax.Precision.HIGHEST

  def bn(y, sb):
    s, b = sb
    return y * s + b

  h = x
  if expand_ratio != 1:
    h = jnp.einsum("ndhwc,co->ndhwo", x, params["w_expand"], precision=hi)
    h = jnp.clip(bn(h, params["bn1"]), 0.0, 6.0)
  C = h.shape[-1]
  rhs = params["w_dw"][..., None, :]                      # (3,3,3,1,C)
  h = jax.lax.conv_general_dilated(
      h, rhs, window_strides=stride, padding=[(1, 1)] * 3,
      dimension_numbers=("NDHWC", "DHWIO", "NDHWC"),
      feature_group_count=C, precision=hi)
  h = jnp.clip(bn(h, params["bn2"]), 0.0, 6.0)
  h = jnp.einsum("ndhwc,co->ndhwo", h, params["w_project"], precision=hi)
  h = bn(h, params["bn3"])
  if skip:
    h = h + x
  return h


# ----------------------------------- main -----------------------------------

if __name__ == "__main__":
  key = jax.random.PRNGKey(0)

  def bn_params(k, c):
    k1, k2, k3, k4 = jax.random.split(k, 4)
    gamma = jax.random.uniform(k1, (c,), jnp.float32, 0.5, 1.5)
    beta = 0.1 * jax.random.normal(k2, (c,), jnp.float32)
    mean = 0.1 * jax.random.normal(k3, (c,), jnp.float32)
    var = jax.random.uniform(k4, (c,), jnp.float32, 0.5, 1.5)
    eps = 1e-5
    scale = gamma / jnp.sqrt(var + eps)
    shift = beta - mean * scale
    return scale, shift

  def make_case(k, N, Cin, planes, D, H, W, expand_ratio, stride):
    keys = jax.random.split(k, 8)
    hidden = round(Cin * expand_ratio)
    skip = (stride == (1, 1, 1)) and (Cin == planes)
    # PyTorch-layout input (NCDHW), transposed to NDHWC for the kernel.
    x_ncdhw = jax.random.normal(keys[0], (N, Cin, D, H, W), jnp.float32)
    x = jnp.transpose(x_ncdhw, (0, 2, 3, 4, 1))
    params = {
        "w_dw": 0.1 * jax.random.normal(keys[3], (3, 3, 3, hidden), jnp.float32),
        "bn2": bn_params(keys[4], hidden),
        "w_project": 0.1 * jax.random.normal(keys[5], (hidden, planes), jnp.float32),
        "bn3": bn_params(keys[6], planes),
    }
    if expand_ratio != 1:
      params["w_expand"] = 0.1 * jax.random.normal(keys[1], (Cin, hidden), jnp.float32)
      params["bn1"] = bn_params(keys[2], hidden)
    return x, params, stride, expand_ratio, skip

  cases = [
      # InvertedResidual(in_planes=4, planes=4, stride=(1,1,1), expand_ratio=2)
      # -> expansion + skip connection; auto tiling picks one full-depth tile.
      (make_case(jax.random.fold_in(key, 0), 2, 4, 4, 16, 8, 8, 2, (1, 1, 1)), None),
      # InvertedResidual(in_planes=4, planes=8, stride=(1,1,1), expand_ratio=1)
      # -> no expansion layer, no skip connection.
      (make_case(jax.random.fold_in(key, 1), 2, 4, 8, 16, 8, 8, 1, (1, 1, 1)), None),
      # Same as the first case but with an explicit depth tile of 8 so the
      # halo-exchange (pl.when) path is exercised too.
      (make_case(jax.random.fold_in(key, 0), 2, 4, 4, 16, 8, 8, 2, (1, 1, 1)), 8),
  ]

  for (x, params, stride, expand_ratio, skip), depth_tile in cases:
    out = inverted_residual_forward(x, params, stride, expand_ratio, skip,
                                    depth_tile=depth_tile)
    out = jax.block_until_ready(out)
    ref = ref_forward(x, params, stride, expand_ratio, skip)
    np.testing.assert_allclose(np.asarray(out), np.asarray(ref),
                               rtol=5e-4, atol=5e-4)

  print("KERNEL_OK")
</pallas_src>

<mosaic_0001>
module attributes {stable_mosaic.version = 11 : i64} {
  func.func @_fused_inverted_residual_kernel(%arg0: i32, %arg1: i32, %arg2: memref<1x16x8x32xf32, #tpu.memory_space<vmem>>, %arg3: memref<32x64xf32, #tpu.memory_space<vmem>>, %arg4: memref<1x64xf32, #tpu.memory_space<vmem>>, %arg5: memref<27x64xf32, #tpu.memory_space<vmem>>, %arg6: memref<1x64xf32, #tpu.memory_space<vmem>>, %arg7: memref<64x32xf32, #tpu.memory_space<vmem>>, %arg8: memref<1x32xf32, #tpu.memory_space<vmem>>, %arg9: memref<1x16x8x32xf32, #tpu.memory_space<vmem>>, %arg10: memref<18x10x80xf32, #tpu.memory_space<vmem>>) attributes {dimension_semantics = [#tpu.dimension_semantics<parallel>, #tpu.dimension_semantics<parallel>], iteration_bounds = array<i64: 2, 1>, scalar_prefetch = 0 : i64, scratch_operands = 1 : i64, tpu.core_type = #tpu.core_type<tc>, window_params = [{transform_indices = @transform_0, window_bounds = array<i64: 1, 16, 8, 32>}, {pipeline_mode = #tpu.pipeline_mode<synchronous>, transform_indices = @transform_1, window_bounds = array<i64: 32, 64>}, {pipeline_mode = #tpu.pipeline_mode<synchronous>, transform_indices = @transform_2, window_bounds = array<i64: 1, 64>}, {pipeline_mode = #tpu.pipeline_mode<synchronous>, transform_indices = @transform_3, window_bounds = array<i64: 27, 64>}, {pipeline_mode = #tpu.pipeline_mode<synchronous>, transform_indices = @transform_4, window_bounds = array<i64: 1, 64>}, {pipeline_mode = #tpu.pipeline_mode<synchronous>, transform_indices = @transform_5, window_bounds = array<i64: 64, 32>}, {pipeline_mode = #tpu.pipeline_mode<synchronous>, transform_indices = @transform_6, window_bounds = array<i64: 1, 32>}, {transform_indices = @transform_7, window_bounds = array<i64: 1, 16, 8, 32>}]} {
    %cst = arith.constant 0.000000e+00 : f32
    %0 = vector.broadcast %cst : f32 to vector<18x1x80xf32>
    %c0 = arith.constant 0 : index
    %c0_0 = arith.constant 0 : index
    %c0_1 = arith.constant 0 : index
    %1 = vector.load %arg10[%c0, %c0_0, %c0_1] : memref<18x10x80xf32, #tpu.memory_space<vmem>>, vector<18x1x80xf32>
    tpu.vector_store %arg10[%c0, %c0_0, %c0_1], %0 {strides = array<i32>} : memref<18x10x80xf32, #tpu.memory_space<vmem>>, vector<18x1x80xf32>,
    %cst_2 = arith.constant 0.000000e+00 : f32
    %2 = vector.broadcast %cst_2 : f32 to vector<18x1x80xf32>
    %c0_3 = arith.constant 0 : index
    %c9 = arith.constant 9 : index
    %c0_4 = arith.constant 0 : index
    %3 = vector.load %arg10[%c0_3, %c9, %c0_4] : memref<18x10x80xf32, #tpu.memory_space<vmem>>, vector<18x1x80xf32>
    tpu.vector_store %arg10[%c0_3, %c9, %c0_4], %2 {strides = array<i32>} : memref<18x10x80xf32, #tpu.memory_space<vmem>>, vector<18x1x80xf32>,
    %cst_5 = arith.constant 0.000000e+00 : f32
    %4 = vector.broadcast %cst_5 : f32 to vector<18x10x8xf32>
    %c0_6 = arith.constant 0 : index
    %c0_7 = arith.constant 0 : index
    %c0_8 = arith.constant 0 : index
    %5 = vector.load %arg10[%c0_6, %c0_7, %c0_8] : memref<18x10x80xf32, #tpu.memory_space<vmem>>, vector<18x10x8xf32>
    tpu.vector_store %arg10[%c0_6, %c0_7, %c0_8], %4 {strides = array<i32>} : memref<18x10x80xf32, #tpu.memory_space<vmem>>, vector<18x10x8xf32>,
    %cst_9 = arith.constant 0.000000e+00 : f32
    %6 = vector.broadcast %cst_9 : f32 to vector<18x10x8xf32>
    %c0_10 = arith.constant 0 : index
    %c0_11 = arith.constant 0 : index
    %c72 = arith.constant 72 : index
    %7 = vector.load %arg10[%c0_10, %c0_11, %c72] : memref<18x10x80xf32, #tpu.memory_space<vmem>>, vector<18x10x8xf32>
    tpu.vector_store %arg10[%c0_10, %c0_11, %c72], %6 {strides = array<i32>} : memref<18x10x80xf32, #tpu.memory_space<vmem>>, vector<18x10x8xf32>,
    %c0_12 = arith.constant 0 : index
    %c0_13 = arith.constant 0 : index
    %c0_14 = arith.constant 0 : index
    %c0_15 = arith.constant 0 : index
    %8 = vector.load %arg2[%c0_12, %c0_13, %c0_14, %c0_15] : memref<1x16x8x32xf32, #tpu.memory_space<vmem>>, vector<1x16x8x32xf32>
    %9 = vector.shape_cast %8 : vector<1x16x8x32xf32> to vector<16x8x32xf32>
    %10 = vector.shape_cast %9 : vector<16x8x32xf32> to vector<128x32xf32>
    %c0_16 = arith.constant 0 : index
    %c0_17 = arith.constant 0 : index
    %11 = vector.load %arg3[%c0_16, %c0_17] : memref<32x64xf32, #tpu.memory_space<vmem>>, vector<32x64xf32>
    %cst_18 = arith.constant dense<0.000000e+00> : vector<128x64xf32>
    %12 = tpu.matmul %10, %11, %cst_18 {dimension_numbers = #tpu.dot_dimension_numbers<[1], [0], [0], [1], [0, 0, 1, 1], [], []>, precision = #tpu.contract_precision<fp32>} : vector<128x32xf32>, vector<32x64xf32>, vector<128x64xf32> -> vector<128x64xf32>
    %c0_19 = arith.constant 0 : index
    %c0_20 = arith.constant 0 : index
    %13 = vector.load %arg4[%c0_19, %c0_20] : memref<1x64xf32, #tpu.memory_space<vmem>>, vector<1x64xf32>
    %14 = vector.broadcast %13 : vector<1x64xf32> to vector<128x64xf32>
    %15 = arith.addf %12, %14 : vector<128x64xf32>
    %cst_21 = arith.constant 0.000000e+00 : f32
    %cst_22 = arith.constant 6.000000e+00 : f32
    %16 = vector.broadcast %cst_21 : f32 to vector<128x64xf32>
    %17 = arith.maximumf %16, %15 : vector<128x64xf32>
    %18 = vector.broadcast %cst_22 : f32 to vector<128x64xf32>
    %19 = arith.minimumf %18, %17 : vector<128x64xf32>
    %20 = vector.shape_cast %19 : vector<128x64xf32> to vector<16x8x64xf32>
    %c1 = arith.constant 1 : index
    %c1_23 = arith.constant 1 : index
    %c8 = arith.constant 8 : index
    %21 = vector.load %arg10[%c1, %c1_23, %c8] : memref<18x10x80xf32, #tpu.memory_space<vmem>>, vector<16x8x64xf32>
    tpu.vector_store %arg10[%c1, %c1_23, %c8], %20 {strides = array<i32>} : memref<18x10x80xf32, #tpu.memory_space<vmem>>, vector<16x8x64xf32>,
    %cst_24 = arith.constant 0.000000e+00 : f32
    %22 = vector.broadcast %cst_24 : f32 to vector<8x64xf32>
    %c0_25 = arith.constant 0 : index
    %c1_26 = arith.constant 1 : index
    %c8_27 = arith.constant 8 : index
    %23 = vector.load %arg10[%c0_25, %c1_26, %c8_27] : memref<18x10x80xf32, #tpu.memory_space<vmem>>, vector<1x8x64xf32>
    %24 = vector.shape_cast %23 : vector<1x8x64xf32> to vector<8x64xf32>
    %25 = vector.shape_cast %22 : vector<8x64xf32> to vector<1x8x64xf32>
    tpu.vector_store %arg10[%c0_25, %c1_26, %c8_27], %25 {strides = array<i32>} : memref<18x10x80xf32, #tpu.memory_space<vmem>>, vector<1x8x64xf32>,
    %c17 = arith.constant 17 : index
    %c1_28 = arith.constant 1 : index
    %c8_29 = arith.constant 8 : index
    %26 = vector.load %arg10[%c17, %c1_28, %c8_29] : memref<18x10x80xf32, #tpu.memory_space<vmem>>, vector<1x8x64xf32>
    %27 = vector.shape_cast %26 : vector<1x8x64xf32> to vector<8x64xf32>
    %28 = vector.shape_cast %22 : vector<8x64xf32> to vector<1x8x64xf32>
    tpu.vector_store %arg10[%c17, %c1_28, %c8_29], %28 {strides = array<i32>} : memref<18x10x80xf32, #tpu.memory_space<vmem>>, vector<1x8x64xf32>,
    %cst_30 = arith.constant 0.000000e+00 : f32
    %29 = vector.broadcast %cst_30 : f32 to vector<16x8x64xf32>
    %c0_31 = arith.constant 0 : index
    %c0_32 = arith.constant 0 : index
    %30 = vector.load %arg5[%c0_31, %c0_32] : memref<27x64xf32, #tpu.memory_space<vmem>>, vector<27x64xf32>
    %c0_33 = arith.constant 0 : index
    %c0_34 = arith.constant 0 : index
    %c0_35 = arith.constant 0 : index
    %31 = vector.load %arg10[%c0_33, %c0_34, %c0_35] : memref<18x10x80xf32, #tpu.memory_space<vmem>>, vector<16x8x64xf32>
    %32 = vector.extract_strided_slice %30 {offsets = [0, 0], sizes = [1, 64], strides = [1, 1]} : vector<27x64xf32> to vector<1x64xf32>
    %33 = vector.shape_cast %32 : vector<1x64xf32> to vector<64xf32>
    %34 = vector.shape_cast %33 : vector<64xf32> to vector<1x1x64xf32>
    %35 = vector.broadcast %34 : vector<1x1x64xf32> to vector<16x8x64xf32>
    %36 = arith.mulf %31, %35 : vector<16x8x64xf32>
    %37 = arith.addf %29, %36 : vector<16x8x64xf32>
    %c0_36 = arith.constant 0 : index
    %c0_37 = arith.constant 0 : index
    %c8_38 = arith.constant 8 : index
    %38 = vector.load %arg10[%c0_36, %c0_37, %c8_38] : memref<18x10x80xf32, #tpu.memory_space<vmem>>, vector<16x8x64xf32>
    %39 = vector.extract_strided_slice %30 {offsets = [1, 0], sizes = [1, 64], strides = [1, 1]} : vector<27x64xf32> to vector<1x64xf32>
    %40 = vector.shape_cast %39 : vector<1x64xf32> to vector<64xf32>
    %41 = vector.shape_cast %40 : vector<64xf32> to vector<1x1x64xf32>
    %42 = vector.broadcast %41 : vector<1x1x64xf32> to vector<16x8x64xf32>
    %43 = arith.mulf %38, %42 : vector<16x8x64xf32>
    %44 = arith.addf %37, %43 : vector<16x8x64xf32>
    %c0_39 = arith.constant 0 : index
    %c0_40 = arith.constant 0 : index
    %c16 = arith.constant 16 : index
    %45 = vector.load %arg10[%c0_39, %c0_40, %c16] : memref<18x10x80xf32, #tpu.memory_space<vmem>>, vector<16x8x64xf32>
    %46 = vector.extract_strided_slice %30 {offsets = [2, 0], sizes = [1, 64], strides = [1, 1]} : vector<27x64xf32> to vector<1x64xf32>
    %47 = vector.shape_cast %46 : vector<1x64xf32> to vector<64xf32>
    %48 = vector.shape_cast %47 : vector<64xf32> to vector<1x1x64xf32>
    %49 = vector.broadcast %48 : vector<1x1x64xf32> to vector<16x8x64xf32>
    %50 = arith.mulf %45, %49 : vector<16x8x64xf32>
    %51 = arith.addf %44, %50 : vector<16x8x64xf32>
    %c0_41 = arith.constant 0 : index
    %c1_42 = arith.constant 1 : index
    %c0_43 = arith.constant 0 : index
    %52 = vector.load %arg10[%c0_41, %c1_42, %c0_43] : memref<18x10x80xf32, #tpu.memory_space<vmem>>, vector<16x8x64xf32>
    %53 = vector.extract_strided_slice %30 {offsets = [3, 0], sizes = [1, 64], strides = [1, 1]} : vector<27x64xf32> to vector<1x64xf32>
    %54 = vector.shape_cast %53 : vector<1x64xf32> to vector<64xf32>
    %55 = vector.shape_cast %54 : vector<64xf32> to vector<1x1x64xf32>
    %56 = vector.broadcast %55 : vector<1x1x64xf32> to vector<16x8x64xf32>
    %57 = arith.mulf %52, %56 : vector<16x8x64xf32>
    %58 = arith.addf %51, %57 : vector<16x8x64xf32>
    %c0_44 = arith.constant 0 : index
    %c1_45 = arith.constant 1 : index
    %c8_46 = arith.constant 8 : index
    %59 = vector.load %arg10[%c0_44, %c1_45, %c8_46] : memref<18x10x80xf32, #tpu.memory_space<vmem>>, vector<16x8x64xf32>
    %60 = vector.extract_strided_slice %30 {offsets = [4, 0], sizes = [1, 64], strides = [1, 1]} : vector<27x64xf32> to vector<1x64xf32>
    %61 = vector.shape_cast %60 : vector<1x64xf32> to vector<64xf32>
    %62 = vector.shape_cast %61 : vector<64xf32> to vector<1x1x64xf32>
    %63 = vector.broadcast %62 : vector<1x1x64xf32> to vector<16x8x64xf32>
    %64 = arith.mulf %59, %63 : vector<16x8x64xf32>
    %65 = arith.addf %58, %64 : vector<16x8x64xf32>
    %c0_47 = arith.constant 0 : index
    %c1_48 = arith.constant 1 : index
    %c16_49 = arith.constant 16 : index
    %66 = vector.load %arg10[%c0_47, %c1_48, %c16_49] : memref<18x10x80xf32, #tpu.memory_space<vmem>>, vector<16x8x64xf32>
    %67 = vector.extract_strided_slice %30 {offsets = [5, 0], sizes = [1, 64], strides = [1, 1]} : vector<27x64xf32> to vector<1x64xf32>
    %68 = vector.shape_cast %67 : vector<1x64xf32> to vector<64xf32>
    %69 = vector.shape_cast %68 : vector<64xf32> to vector<1x1x64xf32>
    %70 = vector.broadcast %69 : vector<1x1x64xf32> to vector<16x8x64xf32>
    %71 = arith.mulf %66, %70 : vector<16x8x64xf32>
    %72 = arith.addf %65, %71 : vector<16x8x64xf32>
    %c0_50 = arith.constant 0 : index
    %c2 = arith.constant 2 : index
    %c0_51 = arith.constant 0 : index
    %73 = vector.load %arg10[%c0_50, %c2, %c0_51] : memref<18x10x80xf32, #tpu.memory_space<vmem>>, vector<16x8x64xf32>
    %74 = vector.extract_strided_slice %30 {offsets = [6, 0], sizes = [1, 64], strides = [1, 1]} : vector<27x64xf32> to vector<1x64xf32>
    %75 = vector.shape_cast %74 : vector<1x64xf32> to vector<64xf32>
    %76 = vector.shape_cast %75 : vector<64xf32> to vector<1x1x64xf32>
    %77 = vector.broadcast %76 : vector<1x1x64xf32> to vector<16x8x64xf32>
    %78 = arith.mulf %73, %77 : vector<16x8x64xf32>
    %79 = arith.addf %72, %78 : vector<16x8x64xf32>
    %c0_52 = arith.constant 0 : index
    %c2_53 = arith.constant 2 : index
    %c8_54 = arith.constant 8 : index
    %80 = vector.load %arg10[%c0_52, %c2_53, %c8_54] : memref<18x10x80xf32, #tpu.memory_space<vmem>>, vector<16x8x64xf32>
    %81 = vector.extract_strided_slice %30 {offsets = [7, 0], sizes = [1, 64], strides = [1, 1]} : vector<27x64xf32> to vector<1x64xf32>
    %82 = vector.shape_cast %81 : vector<1x64xf32> to vector<64xf32>
    %83 = vector.shape_cast %82 : vector<64xf32> to vector<1x1x64xf32>
    %84 = vector.broadcast %83 : vector<1x1x64xf32> to vector<16x8x64xf32>
    %85 = arith.mulf %80, %84 : vector<16x8x64xf32>
    %86 = arith.addf %79, %85 : vector<16x8x64xf32>
    %c0_55 = arith.constant 0 : index
    %c2_56 = arith.constant 2 : index
    %c16_57 = arith.constant 16 : index
    %87 = vector.load %arg10[%c0_55, %c2_56, %c16_57] : memref<18x10x80xf32, #tpu.memory_space<vmem>>, vector<16x8x64xf32>
    %88 = vector.extract_strided_slice %30 {offsets = [8, 0], sizes = [1, 64], strides = [1, 1]} : vector<27x64xf32> to vector<1x64xf32>
    %89 = vector.shape_cast %88 : vector<1x64xf32> to vector<64xf32>
    %90 = vector.shape_cast %89 : vector<64xf32> to vector<1x1x64xf32>
    %91 = vector.broadcast %90 : vector<1x1x64xf32> to vector<16x8x64xf32>
    %92 = arith.mulf %87, %91 : vector<16x8x64xf32>
    %93 = arith.addf %86, %92 : vector<16x8x64xf32>
    %c1_58 = arith.constant 1 : index
    %c0_59 = arith.constant 0 : index
    %c0_60 = arith.constant 0 : index
    %94 = vector.load %arg10[%c1_58, %c0_59, %c0_60] : memref<18x10x80xf32, #tpu.memory_space<vmem>>, vector<16x8x64xf32>
    %95 = vector.extract_strided_slice %30 {offsets = [9, 0], sizes = [1, 64], strides = [1, 1]} : vector<27x64xf32> to vector<1x64xf32>
    %96 = vector.shape_cast %95 : vector<1x64xf32> to vector<64xf32>
    %97 = vector.shape_cast %96 : vector<64xf32> to vector<1x1x64xf32>
    %98 = vector.broadcast %97 : vector<1x1x64xf32> to vector<16x8x64xf32>
    %99 = arith.mulf %94, %98 : vector<16x8x64xf32>
    %100 = arith.addf %93, %99 : vector<16x8x64xf32>
    %c1_61 = arith.constant 1 : index
    %c0_62 = arith.constant 0 : index
    %c8_63 = arith.constant 8 : index
    %101 = vector.load %arg10[%c1_61, %c0_62, %c8_63] : memref<18x10x80xf32, #tpu.memory_space<vmem>>, vector<16x8x64xf32>
    %102 = vector.extract_strided_slice %30 {offsets = [10, 0], sizes = [1, 64], strides = [1, 1]} : vector<27x64xf32> to vector<1x64xf32>
    %103 = vector.shape_cast %102 : vector<1x64xf32> to vector<64xf32>
    %104 = vector.shape_cast %103 : vector<64xf32> to vector<1x1x64xf32>
    %105 = vector.broadcast %104 : vector<1x1x64xf32> to vector<16x8x64xf32>
    %106 = arith.mulf %101, %105 : vector<16x8x64xf32>
    %107 = arith.addf %100, %106 : vector<16x8x64xf32>
    %c1_64 = arith.constant 1 : index
    %c0_65 = arith.constant 0 : index
    %c16_66 = arith.constant 16 : index
    %108 = vector.load %arg10[%c1_64, %c0_65, %c16_66] : memref<18x10x80xf32, #tpu.memory_space<vmem>>, vector<16x8x64xf32>
    %109 = vector.extract_strided_slice %30 {offsets = [11, 0], sizes = [1, 64], strides = [1, 1]} : vector<27x64xf32> to vector<1x64xf32>
    %110 = vector.shape_cast %109 : vector<1x64xf32> to vector<64xf32>
    %111 = vector.shape_cast %110 : vector<64xf32> to vector<1x1x64xf32>
    %112 = vector.broadcast %111 : vector<1x1x64xf32> to vector<16x8x64xf32>
    %113 = arith.mulf %108, %112 : vector<16x8x64xf32>
    %114 = arith.addf %107, %113 : vector<16x8x64xf32>
    %c1_67 = arith.constant 1 : index
    %c1_68 = arith.constant 1 : index
    %c0_69 = arith.constant 0 : index
    %115 = vector.load %arg10[%c1_67, %c1_68, %c0_69] : memref<18x10x80xf32, #tpu.memory_space<vmem>>, vector<16x8x64xf32>
    %116 = vector.extract_strided_slice %30 {offsets = [12, 0], sizes = [1, 64], strides = [1, 1]} : vector<27x64xf32> to vector<1x64xf32>
    %117 = vector.shape_cast %116 : vector<1x64xf32> to vector<64xf32>
    %118 = vector.shape_cast %117 : vector<64xf32> to vector<1x1x64xf32>
    %119 = vector.broadcast %118 : vector<1x1x64xf32> to vector<16x8x64xf32>
    %120 = arith.mulf %115, %119 : vector<16x8x64xf32>
    %121 = arith.addf %114, %120 : vector<16x8x64xf32>
    %c1_70 = arith.constant 1 : index
    %c1_71 = arith.constant 1 : index
    %c8_72 = arith.constant 8 : index
    %122 = vector.load %arg10[%c1_70, %c1_71, %c8_72] : memref<18x10x80xf32, #tpu.memory_space<vmem>>, vector<16x8x64xf32>
    %123 = vector.extract_strided_slice %30 {offsets = [13, 0], sizes = [1, 64], strides = [1, 1]} : vector<27x64xf32> to vector<1x64xf32>
    %124 = vector.shape_cast %123 : vector<1x64xf32> to vector<64xf32>
    %125 = vector.shape_cast %124 : vector<64xf32> to vector<1x1x64xf32>
    %126 = vector.broadcast %125 : vector<1x1x64xf32> to vector<16x8x64xf32>
    %127 = arith.mulf %122, %126 : vector<16x8x64xf32>
    %128 = arith.addf %121, %127 : vector<16x8x64xf32>
    %c1_73 = arith.constant 1 : index
    %c1_74 = arith.constant 1 : index
    %c16_75 = arith.constant 16 : index
    %129 = vector.load %arg10[%c1_73, %c1_74, %c16_75] : memref<18x10x80xf32, #tpu.memory_space<vmem>>, vector<16x8x64xf32>
    %130 = vector.extract_strided_slice %30 {offsets = [14, 0], sizes = [1, 64], strides = [1, 1]} : vector<27x64xf32> to vector<1x64xf32>
    %131 = vector.shape_cast %130 : vector<1x64xf32> to vector<64xf32>
    %132 = vector.shape_cast %131 : vector<64xf32> to vector<1x1x64xf32>
    %133 = vector.broadcast %132 : vector<1x1x64xf32> to vector<16x8x64xf32>
    %134 = arith.mulf %129, %133 : vector<16x8x64xf32>
    %135 = arith.addf %128, %134 : vector<16x8x64xf32>
    %c1_76 = arith.constant 1 : index
    %c2_77 = arith.constant 2 : index
    %c0_78 = arith.constant 0 : index
    %136 = vector.load %arg10[%c1_76, %c2_77, %c0_78] : memref<18x10x80xf32, #tpu.memory_space<vmem>>, vector<16x8x64xf32>
    %137 = vector.extract_strided_slice %30 {offsets = [15, 0], sizes = [1, 64], strides = [1, 1]} : vector<27x64xf32> to vector<1x64xf32>
    %138 = vector.shape_cast %137 : vector<1x64xf32> to vector<64xf32>
    %139 = vector.shape_cast %138 : vector<64xf32> to vector<1x1x64xf32>
    %140 = vector.broadcast %139 : vector<1x1x64xf32> to vector<16x8x64xf32>
    %141 = arith.mulf %136, %140 : vector<16x8x64xf32>
    %142 = arith.addf %135, %141 : vector<16x8x64xf32>
    %c1_79 = arith.constant 1 : index
    %c2_80 = arith.constant 2 : index
    %c8_81 = arith.constant 8 : index
    %143 = vector.load %arg10[%c1_79, %c2_80, %c8_81] : memref<18x10x80xf32, #tpu.memory_space<vmem>>, vector<16x8x64xf32>
    %144 = vector.extract_strided_slice %30 {offsets = [16, 0], sizes = [1, 64], strides = [1, 1]} : vector<27x64xf32> to vector<1x64xf32>
    %145 = vector.shape_cast %144 : vector<1x64xf32> to vector<64xf32>
    %146 = vector.shape_cast %145 : vector<64xf32> to vector<1x1x64xf32>
    %147 = vector.broadcast %146 : vector<1x1x64xf32> to vector<16x8x64xf32>
    %148 = arith.mulf %143, %147 : vector<16x8x64xf32>
    %149 = arith.addf %142, %148 : vector<16x8x64xf32>
    %c1_82 = arith.constant 1 : index
    %c2_83 = arith.constant 2 : index
    %c16_84 = arith.constant 16 : index
    %150 = vector.load %arg10[%c1_82, %c2_83, %c16_84] : memref<18x10x80xf32, #tpu.memory_space<vmem>>, vector<16x8x64xf32>
    %151 = vector.extract_strided_slice %30 {offsets = [17, 0], sizes = [1, 64], strides = [1, 1]} : vector<27x64xf32> to vector<1x64xf32>
    %152 = vector.shape_cast %151 : vector<1x64xf32> to vector<64xf32>
    %153 = vector.shape_cast %152 : vector<64xf32> to vector<1x1x64xf32>
    %154 = vector.broadcast %153 : vector<1x1x64xf32> to vector<16x8x64xf32>
    %155 = arith.mulf %150, %154 : vector<16x8x64xf32>
    %156 = arith.addf %149, %155 : vector<16x8x64xf32>
    %c2_85 = arith.constant 2 : index
    %c0_86 = arith.constant 0 : index
    %c0_87 = arith.constant 0 : index
    %157 = vector.load %arg10[%c2_85, %c0_86, %c0_87] : memref<18x10x80xf32, #tpu.memory_space<vmem>>, vector<16x8x64xf32>
    %158 = vector.extract_strided_slice %30 {offsets = [18, 0], sizes = [1, 64], strides = [1, 1]} : vector<27x64xf32> to vector<1x64xf32>
    %159 = vector.shape_cast %158 : vector<1x64xf32> to vector<64xf32>
    %160 = vector.shape_cast %159 : vector<64xf32> to vector<1x1x64xf32>
    %161 = vector.broadcast %160 : vector<1x1x64xf32> to vector<16x8x64xf32>
    %162 = arith.mulf %157, %161 : vector<16x8x64xf32>
    %163 = arith.addf %156, %162 : vector<16x8x64xf32>
    %c2_88 = arith.constant 2 : index
    %c0_89 = arith.constant 0 : index
    %c8_90 = arith.constant 8 : index
    %164 = vector.load %arg10[%c2_88, %c0_89, %c8_90] : memref<18x10x80xf32, #tpu.memory_space<vmem>>, vector<16x8x64xf32>
    %165 = vector.extract_strided_slice %30 {offsets = [19, 0], sizes = [1, 64], strides = [1, 1]} : vector<27x64xf32> to vector<1x64xf32>
    %166 = vector.shape_cast %165 : vector<1x64xf32> to vector<64xf32>
    %167 = vector.shape_cast %166 : vector<64xf32> to vector<1x1x64xf32>
    %168 = vector.broadcast %167 : vector<1x1x64xf32> to vector<16x8x64xf32>
    %169 = arith.mulf %164, %168 : vector<16x8x64xf32>
    %170 = arith.addf %163, %169 : vector<16x8x64xf32>
    %c2_91 = arith.constant 2 : index
    %c0_92 = arith.constant 0 : index
    %c16_93 = arith.constant 16 : index
    %171 = vector.load %arg10[%c2_91, %c0_92, %c16_93] : memref<18x10x80xf32, #tpu.memory_space<vmem>>, vector<16x8x64xf32>
    %172 = vector.extract_strided_slice %30 {offsets = [20, 0], sizes = [1, 64], strides = [1, 1]} : vector<27x64xf32> to vector<1x64xf32>
    %173 = vector.shape_cast %172 : vector<1x64xf32> to vector<64xf32>
    %174 = vector.shape_cast %173 : vector<64xf32> to vector<1x1x64xf32>
    %175 = vector.broadcast %174 : vector<1x1x64xf32> to vector<16x8x64xf32>
    %176 = arith.mulf %171, %175 : vector<16x8x64xf32>
    %177 = arith.addf %170, %176 : vector<16x8x64xf32>
    %c2_94 = arith.constant 2 : index
    %c1_95 = arith.constant 1 : index
    %c0_96 = arith.constant 0 : index
    %178 = vector.load %arg10[%c2_94, %c1_95, %c0_96] : memref<18x10x80xf32, #tpu.memory_space<vmem>>, vector<16x8x64xf32>
    %179 = vector.extract_strided_slice %30 {offsets = [21, 0], sizes = [1, 64], strides = [1, 1]} : vector<27x64xf32> to vector<1x64xf32>
    %180 = vector.shape_cast %179 : vector<1x64xf32> to vector<64xf32>
    %181 = vector.shape_cast %180 : vector<64xf32> to vector<1x1x64xf32>
    %182 = vector.broadcast %181 : vector<1x1x64xf32> to vector<16x8x64xf32>
    %183 = arith.mulf %178, %182 : vector<16x8x64xf32>
    %184 = arith.addf %177, %183 : vector<16x8x64xf32>
    %c2_97 = arith.constant 2 : index
    %c1_98 = arith.constant 1 : index
    %c8_99 = arith.constant 8 : index
    %185 = vector.load %arg10[%c2_97, %c1_98, %c8_99] : memref<18x10x80xf32, #tpu.memory_space<vmem>>, vector<16x8x64xf32>
    %186 = vector.extract_strided_slice %30 {offsets = [22, 0], sizes = [1, 64], strides = [1, 1]} : vector<27x64xf32> to vector<1x64xf32>
    %187 = vector.shape_cast %186 : vector<1x64xf32> to vector<64xf32>
    %188 = vector.shape_cast %187 : vector<64xf32> to vector<1x1x64xf32>
    %189 = vector.broadcast %188 : vector<1x1x64xf32> to vector<16x8x64xf32>
    %190 = arith.mulf %185, %189 : vector<16x8x64xf32>
    %191 = arith.addf %184, %190 : vector<16x8x64xf32>
    %c2_100 = arith.constant 2 : index
    %c1_101 = arith.constant 1 : index
    %c16_102 = arith.constant 16 : index
    %192 = vector.load %arg10[%c2_100, %c1_101, %c16_102] : memref<18x10x80xf32, #tpu.memory_space<vmem>>, vector<16x8x64xf32>
    %193 = vector.extract_strided_slice %30 {offsets = [23, 0], sizes = [1, 64], strides = [1, 1]} : vector<27x64xf32> to vector<1x64xf32>
    %194 = vector.shape_cast %193 : vector<1x64xf32> to vector<64xf32>
    %195 = vector.shape_cast %194 : vector<64xf32> to vector<1x1x64xf32>
    %196 = vector.broadcast %195 : vector<1x1x64xf32> to vector<16x8x64xf32>
    %197 = arith.mulf %192, %196 : vector<16x8x64xf32>
    %198 = arith.addf %191, %197 : vector<16x8x64xf32>
    %c2_103 = arith.constant 2 : index
    %c2_104 = arith.constant 2 : index
    %c0_105 = arith.constant 0 : index
    %199 = vector.load %arg10[%c2_103, %c2_104, %c0_105] : memref<18x10x80xf32, #tpu.memory_space<vmem>>, vector<16x8x64xf32>
    %200 = vector.extract_strided_slice %30 {offsets = [24, 0], sizes = [1, 64], strides = [1, 1]} : vector<27x64xf32> to vector<1x64xf32>
    %201 = vector.shape_cast %200 : vector<1x64xf32> to vector<64xf32>
    %202 = vector.shape_cast %201 : vector<64xf32> to vector<1x1x64xf32>
    %203 = vector.broadcast %202 : vector<1x1x64xf32> to vector<16x8x64xf32>
    %204 = arith.mulf %199, %203 : vector<16x8x64xf32>
    %205 = arith.addf %198, %204 : vector<16x8x64xf32>
    %c2_106 = arith.constant 2 : index
    %c2_107 = arith.constant 2 : index
    %c8_108 = arith.constant 8 : index
    %206 = vector.load %arg10[%c2_106, %c2_107, %c8_108] : memref<18x10x80xf32, #tpu.memory_space<vmem>>, vector<16x8x64xf32>
    %207 = vector.extract_strided_slice %30 {offsets = [25, 0], sizes = [1, 64], strides = [1, 1]} : vector<27x64xf32> to vector<1x64xf32>
    %208 = vector.shape_cast %207 : vector<1x64xf32> to vector<64xf32>
    %209 = vector.shape_cast %208 : vector<64xf32> to vector<1x1x64xf32>
    %210 = vector.broadcast %209 : vector<1x1x64xf32> to vector<16x8x64xf32>
    %211 = arith.mulf %206, %210 : vector<16x8x64xf32>
    %212 = arith.addf %205, %211 : vector<16x8x64xf32>
    %c2_109 = arith.constant 2 : index
    %c2_110 = arith.constant 2 : index
    %c16_111 = arith.constant 16 : index
    %213 = vector.load %arg10[%c2_109, %c2_110, %c16_111] : memref<18x10x80xf32, #tpu.memory_space<vmem>>, vector<16x8x64xf32>
    %214 = vector.extract_strided_slice %30 {offsets = [26, 0], sizes = [1, 64], strides = [1, 1]} : vector<27x64xf32> to vector<1x64xf32>
    %215 = vector.shape_cast %214 : vector<1x64xf32> to vector<64xf32>
    %216 = vector.shape_cast %215 : vector<64xf32> to vector<1x1x64xf32>
    %217 = vector.broadcast %216 : vector<1x1x64xf32> to vector<16x8x64xf32>
    %218 = arith.mulf %213, %217 : vector<16x8x64xf32>
    %219 = arith.addf %212, %218 : vector<16x8x64xf32>
    %c0_112 = arith.constant 0 : index
    %c0_113 = arith.constant 0 : index
    %220 = vector.load %arg6[%c0_112, %c0_113] : memref<1x64xf32, #tpu.memory_space<vmem>>, vector<1x64xf32>
    %221 = vector.shape_cast %220 : vector<1x64xf32> to vector<1x1x64xf32>
    %222 = vector.broadcast %221 : vector<1x1x64xf32> to vector<16x8x64xf32>
    %223 = arith.addf %219, %222 : vector<16x8x64xf32>
    %cst_114 = arith.constant 0.000000e+00 : f32
    %cst_115 = arith.constant 6.000000e+00 : f32
    %224 = vector.broadcast %cst_114 : f32 to vector<16x8x64xf32>
    %225 = arith.maximumf %224, %223 : vector<16x8x64xf32>
    %226 = vector.broadcast %cst_115 : f32 to vector<16x8x64xf32>
    %227 = arith.minimumf %226, %225 : vector<16x8x64xf32>
    %228 = vector.shape_cast %227 : vector<16x8x64xf32> to vector<128x64xf32>
    %c0_116 = arith.constant 0 : index
    %c0_117 = arith.constant 0 : index
    %229 = vector.load %arg7[%c0_116, %c0_117] : memref<64x32xf32, #tpu.memory_space<vmem>>, vector<64x32xf32>
    %cst_118 = arith.constant dense<0.000000e+00> : vector<128x32xf32>
    %230 = tpu.matmul %228, %229, %cst_118 {dimension_numbers = #tpu.dot_dimension_numbers<[1], [0], [0], [1], [0, 0, 1, 1], [], []>, precision = #tpu.contract_precision<fp32>} : vector<128x64xf32>, vector<64x32xf32>, vector<128x32xf32> -> vector<128x32xf32>
    %c0_119 = arith.constant 0 : index
    %c0_120 = arith.constant 0 : index
    %231 = vector.load %arg8[%c0_119, %c0_120] : memref<1x32xf32, #tpu.memory_space<vmem>>, vector<1x32xf32>
    %232 = vector.broadcast %231 : vector<1x32xf32> to vector<128x32xf32>
    %233 = arith.addf %230, %232 : vector<128x32xf32>
    %234 = vector.shape_cast %9 : vector<16x8x32xf32> to vector<128x32xf32>
    %235 = arith.addf %233, %234 : vector<128x32xf32>
    %236 = vector.shape_cast %235 : vector<128x32xf32> to vector<16x8x32xf32>
    %c0_121 = arith.constant 0 : index
    %c0_122 = arith.constant 0 : index
    %c0_123 = arith.constant 0 : index
    %c0_124 = arith.constant 0 : index
    %237 = vector.load %arg9[%c0_121, %c0_122, %c0_123, %c0_124] : memref<1x16x8x32xf32, #tpu.memory_space<vmem>>, vector<1x16x8x32xf32>
    %238 = vector.shape_cast %237 : vector<1x16x8x32xf32> to vector<16x8x32xf32>
    %239 = vector.shape_cast %236 : vector<16x8x32xf32> to vector<1x16x8x32xf32>
    tpu.vector_store %arg9[%c0_121, %c0_122, %c0_123, %c0_124], %239 {strides = array<i32>} : memref<1x16x8x32xf32, #tpu.memory_space<vmem>>, vector<1x16x8x32xf32>,
    return
  }
  func.func @transform_0(%arg0: i32, %arg1: i32) -> (i32, i32, i32, i32) {
    %c0_i32 = arith.constant 0 : i32
    %c0_i32_0 = arith.constant 0 : i32
    %c0_i32_1 = arith.constant 0 : i32
    return %arg0, %arg1, %c0_i32, %c0_i32_0 : i32, i32, i32, i32
  }
  func.func @transform_1(%arg0: i32, %arg1: i32) -> (i32, i32) {
    %c0_i32 = arith.constant 0 : i32
    %c0_i32_0 = arith.constant 0 : i32
    %c0_i32_1 = arith.constant 0 : i32
    return %c0_i32, %c0_i32_0 : i32, i32
  }
  func.func @transform_2(%arg0: i32, %arg1: i32) -> (i32, i32) {
    %c0_i32 = arith.constant 0 : i32
    %c0_i32_0 = arith.constant 0 : i32
    %c0_i32_1 = arith.constant 0 : i32
    return %c0_i32, %c0_i32_0 : i32, i32
  }
  func.func @transform_3(%arg0: i32, %arg1: i32) -> (i32, i32) {
    %c0_i32 = arith.constant 0 : i32
    %c0_i32_0 = arith.constant 0 : i32
    %c0_i32_1 = arith.constant 0 : i32
    return %c0_i32, %c0_i32_0 : i32, i32
  }
  func.func @transform_4(%arg0: i32, %arg1: i32) -> (i32, i32) {
    %c0_i32 = arith.constant 0 : i32
    %c0_i32_0 = arith.constant 0 : i32
    %c0_i32_1 = arith.constant 0 : i32
    return %c0_i32, %c0_i32_0 : i32, i32
  }
  func.func @transform_5(%arg0: i32, %arg1: i32) -> (i32, i32) {
    %c0_i32 = arith.constant 0 : i32
    %c0_i32_0 = arith.constant 0 : i32
    %c0_i32_1 = arith.constant 0 : i32
    return %c0_i32, %c0_i32_0 : i32, i32
  }
  func.func @transform_6(%arg0: i32, %arg1: i32) -> (i32, i32) {
    %c0_i32 = arith.constant 0 : i32
    %c0_i32_0 = arith.constant 0 : i32
    %c0_i32_1 = arith.constant 0 : i32
    return %c0_i32, %c0_i32_0 : i32, i32
  }
  func.func @transform_7(%arg0: i32, %arg1: i32) -> (i32, i32, i32, i32) {
    %c0_i32 = arith.constant 0 : i32
    %c0_i32_0 = arith.constant 0 : i32
    %c0_i32_1 = arith.constant 0 : i32
    return %arg0, %arg1, %c0_i32, %c0_i32_0 : i32, i32, i32, i32
  }
}

</mosaic_0001>

<llo_original>
// kernel: tpu_custom_call.1
$region0: #{tpu_custom_call.1}
  #allocation0 [shape = 'u32[]', space=smem, size = 0x4, offset = 0x4, fixed_abs, tag = 'smem constant byte address 0x4 - core index']
  #allocation1 [shape = 'u32[144,128]{1,0:T(1,128)}', space=vmem, size = 0x12000, scoped, tag = 'internal scratch']
  #allocation2 [shape = 'f32[18,10,80]{2,1,0:T(8,128)}', space=vmem, size = 0x24000, scoped, tag = 'scratch operand']
  %s0 = inlined_call_operand.hbm [shape: f32[2,16,8,32], index: 0, kind: input, shape index: {}]
  %s1 = inlined_call_operand.vmem [shape: f32[32,64], index: 1, kind: input, shape index: {}]
  %s2 = inlined_call_operand.vmem [shape: f32[1,64], index: 2, kind: input, shape index: {}]
  %s3 = inlined_call_operand.vmem [shape: f32[27,64], index: 3, kind: input, shape index: {}]
  %s4 = inlined_call_operand.vmem [shape: f32[1,64], index: 4, kind: input, shape index: {}]
  %s5 = inlined_call_operand.vmem [shape: f32[64,32], index: 5, kind: input, shape index: {}]
  %s6 = inlined_call_operand.vmem [shape: f32[1,32], index: 6, kind: input, shape index: {}]
  %s7 = inlined_call_operand.hbm [shape: f32[2,16,8,32], index: 7, kind: output, shape index: {}]
  %s8 = sld [smem:[#allocation0]]
  $region65: #{tpu_custom_call.1} parent=0
    _
  %s10 = ssub.s32 1, %s8
  %s11 = scalar_select 0, %s10, %s8
  $region1: #{tpu_custom_call.1} parent=0
    #allocation3 [shape = 'u8[131072]{0}', space=vmem, size = 0x20000, scoped, tag = 'input window, operand 0']
    #allocation4 [shape = 's32[2]{0}', space=sflag, size = 0x8, scoped, tag = 'scoped memory for tpu_custom_call.1']
    #allocation5 [shape = 's32[2]{0}', space=sflag, size = 0x8, scoped, tag = 'scoped memory for tpu_custom_call.1']
    #allocation6 [shape = 'u8[131072]{0}', space=vmem, size = 0x20000, scoped, tag = 'output window, operand 0']
    %12 = vsyncpa [#allocation4], 0
    %s13 = scalar_lea.sflag [#allocation4], 1
    %14 = vsyncpa %s13, 0
    %15 = vsyncpa [#allocation5], 0
    %s16 = scalar_lea.sflag [#allocation5], 1
    %17 = vsyncpa %s16, 0
    loop: start=0, step=1, limit=4
    $region2: #{tpu_custom_call.1} parent=1 // loop_pre_header
      _
    $region3: #{tpu_custom_call.1} parent=1 // loop_header
      %s19 = sphi 0, %s23
      %p20 = scmp.ge.s32.totalorder %s19, 4
      %s26 = sphi 0, %s38
      %s27 = sphi 0, %s34
      %s28 = sphi 0, %s26
      %s29 = sphi 0, %s27
      %s30 = sphi 0, %s28
      %s31 = sphi 0, %s29
      %s43 = sphi 0, %s45
      %s46 = sphi 0, %s43
      %s47 = sphi 0, %s46
      %s63 = sphi 0, %s47
      %s67 = sphi 0, %s67
      %s69 = sphi 0, %s67
      %s70 = sphi 0, %s69
      %s84 = sphi 0, %s70
      %s88 = sphi 0, %s88
      %s90 = sphi 0, %s88
      %s91 = sphi 0, %s90
      %s105 = sphi 0, %s91
      %s109 = sphi 0, %s109
      %s111 = sphi 0, %s109
      %s112 = sphi 0, %s111
      %s126 = sphi 0, %s112
      %s130 = sphi 0, %s130
      %s132 = sphi 0, %s130
      %s133 = sphi 0, %s132
      %s147 = sphi 0, %s133
      %s151 = sphi 0, %s151
      %s153 = sphi 0, %s151
      %s154 = sphi 0, %s153
      %s168 = sphi 0, %s154
      %s172 = sphi 0, %s172
      %s174 = sphi 0, %s172
      %s175 = sphi 0, %s174
      %s189 = sphi 0, %s175
      %s197 = sphi 0, %s199
      %s200 = sphi 0, %s197
      %s201 = sphi 0, %s200
      %s217 = sphi 0, %s201
    $region4: #{tpu_custom_call.1} parent=1 // loop_header_branch
      %22 = sbr.rel (%p20) target = $region8
    $region5: #{tpu_custom_call.1} parent=1 // loop_body
      %s24 = ssub.s32 %s19, 1
      %s25 = ssub.s32 %s19, 2
      %s32 = sadd.s32 1, %s27
      %p33 = scmp.ge.s32.totalorder %s32, 1
      %s34 = scalar_select %p33, 0, %s32
      %s35 = sadd.s32 1, %s26
      %s36 = scalar_select %p33, %s35, %s26
      %p37 = scmp.ge.s32.totalorder %s36, 2
      %s38 = scalar_select %p37, 0, %s36
      %s39 = ssub.s32 %s26, %s38
      %s40 = ssub.s32 %s27, %s34
      %s41 = sor.u32 %s39, %s40
      %p42 = scmp.eq.s32.totalorder %s41, 0
      %s44 = sadd.s32 %s43, 1
      %s45 = scalar_select %p42, %s43, %s44
      %p48 = pneg %p42
      %p49 = scmp.eq.s32.totalorder %s19, 1
      %p50 = por %p48, %p49
      %p51 = scmp.ne.s32.totalorder %s43, %s46
      %p52 = scmp.eq.s32.totalorder %s19, 0
      %p53 = por %p51, %p52
      %p54 = scmp.ne.s32.totalorder %s43, %s46
      %p55 = scmp.eq.s32.totalorder %s24, 1
      %p56 = por %p54, %p55
      %p57 = scmp.ne.s32.totalorder %s46, %s47
      %p58 = scmp.eq.s32.totalorder %s24, 0
      %p59 = por %p57, %p58
      %p60 = scmp.ne.s32.totalorder %s46, %s47
      %p61 = scmp.eq.s32.totalorder %s25, 1
      %p62 = por %p60, %p61
      %p64 = scmp.ne.s32.totalorder %s47, %s63
      %p65 = scmp.eq.s32.totalorder %s25, 0
      %p66 = por %p64, %p65
      %s68 = sadd.s32 %s67, 1
      %p71 = scmp.eq.s32.totalorder %s19, 1
      %p72 = scmp.ne.s32.totalorder %s67, %s69
      %p73 = scmp.eq.s32.totalorder %s19, 0
      %p74 = por %p72, %p73
      %p75 = scmp.ne.s32.totalorder %s67, %s69
      %p76 = scmp.eq.s32.totalorder %s24, 1
      %p77 = por %p75, %p76
      %p78 = scmp.ne.s32.totalorder %s69, %s70
      %p79 = scmp.eq.s32.totalorder %s24, 0
      %p80 = por %p78, %p79
      %p81 = scmp.ne.s32.totalorder %s69, %s70
      %p82 = scmp.eq.s32.totalorder %s25, 1
      %p83 = por %p81, %p82
      %p85 = scmp.ne.s32.totalorder %s70, %s84
      %p86 = scmp.eq.s32.totalorder %s25, 0
      %p87 = por %p85, %p86
      %s89 = sadd.s32 %s88, 1
      %p92 = scmp.eq.s32.totalorder %s19, 1
      %p93 = scmp.ne.s32.totalorder %s88, %s90
      %p94 = scmp.eq.s32.totalorder %s19, 0
      %p95 = por %p93, %p94
      %p96 = scmp.ne.s32.totalorder %s88, %s90
      %p97 = scmp.eq.s32.totalorder %s24, 1
      %p98 = por %p96, %p97
      %p99 = scmp.ne.s32.totalorder %s90, %s91
      %p100 = scmp.eq.s32.totalorder %s24, 0
      %p101 = por %p99, %p100
      %p102 = scmp.ne.s32.totalorder %s90, %s91
      %p103 = scmp.eq.s32.totalorder %s25, 1
      %p104 = por %p102, %p103
      %p106 = scmp.ne.s32.totalorder %s91, %s105
      %p107 = scmp.eq.s32.totalorder %s25, 0
      %p108 = por %p106, %p107
      %s110 = sadd.s32 %s109, 1
      %p113 = scmp.eq.s32.totalorder %s19, 1
      %p114 = scmp.ne.s32.totalorder %s109, %s111
      %p115 = scmp.eq.s32.totalorder %s19, 0
      %p116 = por %p114, %p115
      %p117 = scmp.ne.s32.totalorder %s109, %s111
      %p118 = scmp.eq.s32.totalorder %s24, 1
      %p119 = por %p117, %p118
      %p120 = scmp.ne.s32.totalorder %s111, %s112
      %p121 = scmp.eq.s32.totalorder %s24, 0
      %p122 = por %p120, %p121
      %p123 = scmp.ne.s32.totalorder %s111, %s112
      %p124 = scmp.eq.s32.totalorder %s25, 1
      %p125 = por %p123, %p124
      %p127 = scmp.ne.s32.totalorder %s112, %s126
      %p128 = scmp.eq.s32.totalorder %s25, 0
      %p129 = por %p127, %p128
      %s131 = sadd.s32 %s130, 1
      %p134 = scmp.eq.s32.totalorder %s19, 1
      %p135 = scmp.ne.s32.totalorder %s130, %s132
      %p136 = scmp.eq.s32.totalorder %s19, 0
      %p137 = por %p135, %p136
      %p138 = scmp.ne.s32.totalorder %s130, %s132
      %p139 = scmp.eq.s32.totalorder %s24, 1
      %p140 = por %p138, %p139
      %p141 = scmp.ne.s32.totalorder %s132, %s133
      %p142 = scmp.eq.s32.totalorder %s24, 0
      %p143 = por %p141, %p142
      %p144 = scmp.ne.s32.totalorder %s132, %s133
      %p145 = scmp.eq.s32.totalorder %s25, 1
      %p146 = por %p144, %p145
      %p148 = scmp.ne.s32.totalorder %s133, %s147
      %p149 = scmp.eq.s32.totalorder %s25, 0
      %p150 = por %p148, %p149
      %s152 = sadd.s32 %s151, 1
      %p155 = scmp.eq.s32.totalorder %s19, 1
      %p156 = scmp.ne.s32.totalorder %s151, %s153
      %p157 = scmp.eq.s32.totalorder %s19, 0
      %p158 = por %p156, %p157
      %p159 = scmp.ne.s32.totalorder %s151, %s153
      %p160 = scmp.eq.s32.totalorder %s24, 1
      %p161 = por %p159, %p160
      %p162 = scmp.ne.s32.totalorder %s153, %s154
      %p163 = scmp.eq.s32.totalorder %s24, 0
      %p164 = por %p162, %p163
      %p165 = scmp.ne.s32.totalorder %s153, %s154
      %p166 = scmp.eq.s32.totalorder %s25, 1
      %p167 = por %p165, %p166
      %p169 = scmp.ne.s32.totalorder %s154, %s168
      %p170 = scmp.eq.s32.totalorder %s25, 0
      %p171 = por %p169, %p170
      %s173 = sadd.s32 %s172, 1
      %p176 = scmp.eq.s32.totalorder %s19, 1
      %p177 = scmp.ne.s32.totalorder %s172, %s174
      %p178 = scmp.eq.s32.totalorder %s19, 0
      %p179 = por %p177, %p178
      %p180 = scmp.ne.s32.totalorder %s172, %s174
      %p181 = scmp.eq.s32.totalorder %s24, 1
      %p182 = por %p180, %p181
      %p183 = scmp.ne.s32.totalorder %s174, %s175
      %p184 = scmp.eq.s32.totalorder %s24, 0
      %p185 = por %p183, %p184
      %p186 = scmp.ne.s32.totalorder %s174, %s175
      %p187 = scmp.eq.s32.totalorder %s25, 1
      %p188 = por %p186, %p187
      %p190 = scmp.ne.s32.totalorder %s175, %s189
      %p191 = scmp.eq.s32.totalorder %s25, 0
      %p192 = por %p190, %p191
      %s193 = ssub.s32 %s26, %s38
      %s194 = ssub.s32 %s27, %s34
      %s195 = sor.u32 %s193, %s194
      %p196 = scmp.eq.s32.totalorder %s195, 0
      %s198 = sadd.s32 %s197, 1
      %s199 = scalar_select %p196, %s197, %s198
      %p202 = pneg %p196
      %p203 = scmp.eq.s32.totalorder %s19, 1
      %p204 = por %p202, %p203
      %p205 = scmp.ne.s32.totalorder %s197, %s200
      %p206 = scmp.eq.s32.totalorder %s19, 0
      %p207 = por %p205, %p206
      %p208 = scmp.ne.s32.totalorder %s197, %s200
      %p209 = scmp.eq.s32.totalorder %s24, 1
      %p210 = por %p208, %p209
      %p211 = scmp.ne.s32.totalorder %s200, %s201
      %p212 = scmp.eq.s32.totalorder %s24, 0
      %p213 = por %p211, %p212
      %p214 = scmp.ne.s32.totalorder %s200, %s201
      %p215 = scmp.eq.s32.totalorder %s25, 1
      %p216 = por %p214, %p215
      %p218 = scmp.ne.s32.totalorder %s201, %s217
      %p219 = scmp.eq.s32.totalorder %s25, 0
      %p220 = por %p218, %p219
      %p221 = scmp.le.s32.totalorder 1, %s19
      %p222 = scmp.lt.s32.totalorder %s19, 3
      %p223 = pnand %p221, %p222
      %p224 = pneg %p223
      // Predicated region
      $region9: #{tpu_custom_call.1} parent=5 // pred_check
        _
      $region10: #{tpu_custom_call.1} parent=5 // pred_check_branch
        %226 = sbr.rel (%p223) target = $region12
      $region11: #{tpu_custom_call.1} parent=5 // pred_region
        %s227 = ssub.s32 %s19, 1
        // Predicated region
        $region13: #{tpu_custom_call.1} parent=11 // pred_check
          %p228 = pneg %p80
        $region14: #{tpu_custom_call.1} parent=11 // pred_check_branch
          %230 = sbr.rel (%p228) target = $region16
        $region15: #{tpu_custom_call.1} parent=11 // pred_region
          _
        $region16: #{tpu_custom_call.1} parent=11 // pred_fallthru
          _
        // Predicated region
        $region17: #{tpu_custom_call.1} parent=11 // pred_check
          %p231 = pneg %p101
        $region18: #{tpu_custom_call.1} parent=11 // pred_check_branch
          %233 = sbr.rel (%p231) target = $region20
        $region19: #{tpu_custom_call.1} parent=11 // pred_region
          _
        $region20: #{tpu_custom_call.1} parent=11 // pred_fallthru
          _
        // Predicated region
        $region21: #{tpu_custom_call.1} parent=11 // pred_check
          %p234 = pneg %p122
        $region22: #{tpu_custom_call.1} parent=11 // pred_check_branch
          %236 = sbr.rel (%p234) target = $region24
        $region23: #{tpu_custom_call.1} parent=11 // pred_region
          _
        $region24: #{tpu_custom_call.1} parent=11 // pred_fallthru
          _
        // Predicated region
        $region25: #{tpu_custom_call.1} parent=11 // pred_check
          %p237 = pneg %p143
        $region26: #{tpu_custom_call.1} parent=11 // pred_check_branch
          %239 = sbr.rel (%p237) target = $region28
        $region27: #{tpu_custom_call.1} parent=11 // pred_region
          _
        $region28: #{tpu_custom_call.1} parent=11 // pred_fallthru
          _
        // Predicated region
        $region29: #{tpu_custom_call.1} parent=11 // pred_check
          %p240 = pneg %p164
        $region30: #{tpu_custom_call.1} parent=11 // pred_check_branch
          %242 = sbr.rel (%p240) target = $region32
        $region31: #{tpu_custom_call.1} parent=11 // pred_region
          _
        $region32: #{tpu_custom_call.1} parent=11 // pred_fallthru
          _
        // Predicated region
        $region33: #{tpu_custom_call.1} parent=11 // pred_check
          %p243 = pneg %p185
        $region34: #{tpu_custom_call.1} parent=11 // pred_check_branch
          %245 = sbr.rel (%p243) target = $region36
        $region35: #{tpu_custom_call.1} parent=11 // pred_region
          _
        $region36: #{tpu_custom_call.1} parent=11 // pred_fallthru
          _
      $region12: #{tpu_custom_call.1} parent=5 // pred_fallthru
        _
      %p246 = scmp.lt.s32.totalorder %s19, 2
      // Predicated region
      $region37: #{tpu_custom_call.1} parent=5 // pred_check
        %p247 = pneg %p246
      $region38: #{tpu_custom_call.1} parent=5 // pred_check_branch
        %249 = sbr.rel (%p247) target = $region40
      $region39: #{tpu_custom_call.1} parent=5 // pred_region
        // Predicated region
        $region41: #{tpu_custom_call.1} parent=39 // pred_check
          %p250 = pneg %p53
        $region42: #{tpu_custom_call.1} parent=39 // pred_check_branch
          %252 = sbr.rel (%p250) target = $region44
        $region43: #{tpu_custom_call.1} parent=39 // pred_region
          %s253 = sand.u32 %s43, 1
          %s254 = scalar_lea.sflag [#allocation4], %s253
          %s255 = sand.u32 %s43, 1
          %s256 = smul.addr %s255, 128
          %s257 = scalar_lea.vmem [#allocation3], %s256
          %s258 = smul.u32 16, %s27
          %s260 = ssub.s32 2048, 2048
          %261 = vsyncadd %s254, %s260
          %s262 = smul.addr %s26, 16
          %s263 = sadd.s32 %s258, %s262
          %s264 = smul.addr %s263, 128
          %s265 = scalar_lea.hbm %s0, %s264
          %s266 = sshll.u32 %s257, 4
          %s267 = int_to_ptr.vmem [resolvable:$true] %s266
          %272 = dma.hbm_to_vmem [thread:$0]  %s265, 2048, %s267, %s254, 128, 128, 8
        $region44: #{tpu_custom_call.1} parent=39 // pred_fallthru
          _
      $region40: #{tpu_custom_call.1} parent=5 // pred_fallthru
        _
      %p273 = scmp.le.s32.totalorder 1, %s19
      %p274 = scmp.lt.s32.totalorder %s19, 3
      %p275 = pnand %p273, %p274
      %p276 = pneg %p275
      // Predicated region
      $region45: #{tpu_custom_call.1} parent=5 // pred_check
        _
      $region46: #{tpu_custom_call.1} parent=5 // pred_check_branch
        %278 = sbr.rel (%p275) target = $region48
      $region47: #{tpu_custom_call.1} parent=5 // pred_region
        %s279 = ssub.s32 %s19, 1
        %s280 = sand.u32 %s46, 1
        %s281 = scalar_lea.sflag [#allocation4], %s280
        %s282 = sand.u32 %s46, 1
        %s283 = smul.addr %s282, 128
        %s284 = scalar_lea.vmem [#allocation3], %s283
        // Predicated region
        $region49: #{tpu_custom_call.1} parent=47 // pred_check
          %p285 = pneg %p59
        $region50: #{tpu_custom_call.1} parent=47 // pred_check_branch
          %287 = sbr.rel (%p285) target = $region52
        $region51: #{tpu_custom_call.1} parent=47 // pred_region
          %288 = dma.done %s281, 2048
        $region52: #{tpu_custom_call.1} parent=47 // pred_fallthru
          _
        %s289 = sand.u32 %s46, 1
        %s290 = scalar_lea.sflag [#allocation4], %s289
        %s291 = sand.u32 %s46, 1
        %s292 = smul.addr %s291, 128
        %s293 = scalar_lea.vmem [#allocation3], %s292
        %p294 = pneg %p59
        %p295 = pneg %p56
        %p296 = pneg %p80
        %p297 = pneg %p77
        %p298 = pneg %p101
        %p299 = pneg %p98
        %p300 = pneg %p122
        %p301 = pneg %p119
        %p302 = pneg %p143
        %p303 = pneg %p140
        %p304 = pneg %p164
        %p305 = pneg %p161
        %p306 = pneg %p185
        %p307 = pneg %p182
        %p308 = pneg %p213
        %p309 = pneg %p210
        %s310 = sand.u32 %s200, 1
        %s311 = scalar_lea.sflag [#allocation5], %s310
        %s312 = sand.u32 %s200, 1
        %s313 = smul.addr %s312, 128
        %s314 = scalar_lea.vmem [#allocation6], %s313
        %s315 = smul.u32 16, %s29
        %s316 = smul.u32 16, %s29
        %vm317 = vcmask 647168
        %318 = vst.msk [vmem:[#allocation2] sm:$0x1] %vm317, 0.0
        %319 = vst.msk [vmem:[#allocation2 + $0x10] sm:$0x1] %vm317, 0.0
        %320 = vst.msk [vmem:[#allocation2 + $0x20] sm:$0x1] %vm317, 0.0
        %321 = vst.msk [vmem:[#allocation2 + $0x30] sm:$0x1] %vm317, 0.0
        %322 = vst.msk [vmem:[#allocation2 + $0x40] sm:$0x1] %vm317, 0.0
        %323 = vst.msk [vmem:[#allocation2 + $0x50] sm:$0x1] %vm317, 0.0
        %324 = vst.msk [vmem:[#allocation2 + $0x60] sm:$0x1] %vm317, 0.0
        %325 = vst.msk [vmem:[#allocation2 + $0x70] sm:$0x1] %vm317, 0.0
        %326 = vst.msk [vmem:[#allocation2 + $0x80] sm:$0x1] %vm317, 0.0
        %327 = vst.msk [vmem:[#allocation2 + $0x90] sm:$0x1] %vm317, 0.0
        %328 = vst.msk [vmem:[#allocation2 + $0xa0] sm:$0x1] %vm317, 0.0
        %329 = vst.msk [vmem:[#allocation2 + $0xb0] sm:$0x1] %vm317, 0.0
        %330 = vst.msk [vmem:[#allocation2 + $0xc0] sm:$0x1] %vm317, 0.0
        %331 = vst.msk [vmem:[#allocation2 + $0xd0] sm:$0x1] %vm317, 0.0
        %332 = vst.msk [vmem:[#allocation2 + $0xe0] sm:$0x1] %vm317, 0.0
        %333 = vst.msk [vmem:[#allocation2 + $0xf0] sm:$0x1] %vm317, 0.0
        %334 = vst.msk [vmem:[#allocation2 + $0x100] sm:$0x1] %vm317, 0.0
        %335 = vst.msk [vmem:[#allocation2 + $0x110] sm:$0x1] %vm317, 0.0
        %336 = vst.msk [vmem:[#allocation2 + $0x9] sm:$0x1] %vm317, 0.0
        %337 = vst.msk [vmem:[#allocation2 + $0x19] sm:$0x1] %vm317, 0.0
        %338 = vst.msk [vmem:[#allocation2 + $0x29] sm:$0x1] %vm317, 0.0
        %339 = vst.msk [vmem:[#allocation2 + $0x39] sm:$0x1] %vm317, 0.0
        %340 = vst.msk [vmem:[#allocation2 + $0x49] sm:$0x1] %vm317, 0.0
        %341 = vst.msk [vmem:[#allocation2 + $0x59] sm:$0x1] %vm317, 0.0
        %342 = vst.msk [vmem:[#allocation2 + $0x69] sm:$0x1] %vm317, 0.0
        %343 = vst.msk [vmem:[#allocation2 + $0x79] sm:$0x1] %vm317, 0.0
        %344 = vst.msk [vmem:[#allocation2 + $0x89] sm:$0x1] %vm317, 0.0
        %345 = vst.msk [vmem:[#allocation2 + $0x99] sm:$0x1] %vm317, 0.0
        %346 = vst.msk [vmem:[#allocation2 + $0xa9] sm:$0x1] %vm317, 0.0
        %347 = vst.msk [vmem:[#allocation2 + $0xb9] sm:$0x1] %vm317, 0.0
        %348 = vst.msk [vmem:[#allocation2 + $0xc9] sm:$0x1] %vm317, 0.0
        %349 = vst.msk [vmem:[#allocation2 + $0xd9] sm:$0x1] %vm317, 0.0
        %350 = vst.msk [vmem:[#allocation2 + $0xe9] sm:$0x1] %vm317, 0.0
        %351 = vst.msk [vmem:[#allocation2 + $0xf9] sm:$0x1] %vm317, 0.0
        %352 = vst.msk [vmem:[#allocation2 + $0x109] sm:$0x1] %vm317, 0.0
        %353 = vst.msk [vmem:[#allocation2 + $0x119] sm:$0x1] %vm317, 0.0
        %vm354 = vcmask 64512
        %355 = vst.msk [vmem:[#allocation2] sm:$0xff] %vm354, 0.0
        %vm356 = vcmask 58368
        %357 = vst.msk [vmem:[#allocation2 + $0x8] sm:$0x3] %vm356, 0.0
        %358 = vst.msk [vmem:[#allocation2 + $0x10] sm:$0xff] %vm354, 0.0
        %359 = vst.msk [vmem:[#allocation2 + $0x18] sm:$0x3] %vm356, 0.0
        %360 = vst.msk [vmem:[#allocation2 + $0x20] sm:$0xff] %vm354, 0.0
        %361 = vst.msk [vmem:[#allocation2 + $0x28] sm:$0x3] %vm356, 0.0
        %362 = vst.msk [vmem:[#allocation2 + $0x30] sm:$0xff] %vm354, 0.0
        %363 = vst.msk [vmem:[#allocation2 + $0x38] sm:$0x3] %vm356, 0.0
        %364 = vst.msk [vmem:[#allocation2 + $0x40] sm:$0xff] %vm354, 0.0
        %365 = vst.msk [vmem:[#allocation2 + $0x48] sm:$0x3] %vm356, 0.0
        %366 = vst.msk [vmem:[#allocation2 + $0x50] sm:$0xff] %vm354, 0.0
        %367 = vst.msk [vmem:[#allocation2 + $0x58] sm:$0x3] %vm356, 0.0
        %368 = vst.msk [vmem:[#allocation2 + $0x60] sm:$0xff] %vm354, 0.0
        %369 = vst.msk [vmem:[#allocation2 + $0x68] sm:$0x3] %vm356, 0.0
        %370 = vst.msk [vmem:[#allocation2 + $0x70] sm:$0xff] %vm354, 0.0
        %371 = vst.msk [vmem:[#allocation2 + $0x78] sm:$0x3] %vm356, 0.0
        %372 = vst.msk [vmem:[#allocation2 + $0x80] sm:$0xff] %vm354, 0.0
        %373 = vst.msk [vmem:[#allocation2 + $0x88] sm:$0x3] %vm356, 0.0
        %374 = vst.msk [vmem:[#allocation2 + $0x90] sm:$0xff] %vm354, 0.0
        %375 = vst.msk [vmem:[#allocation2 + $0x98] sm:$0x3] %vm356, 0.0
        %376 = vst.msk [vmem:[#allocation2 + $0xa0] sm:$0xff] %vm354, 0.0
        %377 = vst.msk [vmem:[#allocation2 + $0xa8] sm:$0x3] %vm356, 0.0
        %378 = vst.msk [vmem:[#allocation2 + $0xb0] sm:$0xff] %vm354, 0.0
        %379 = vst.msk [vmem:[#allocation2 + $0xb8] sm:$0x3] %vm356, 0.0
        %380 = vst.msk [vmem:[#allocation2 + $0xc0] sm:$0xff] %vm354, 0.0
        %381 = vst.msk [vmem:[#allocation2 + $0xc8] sm:$0x3] %vm356, 0.0
        %382 = vst.msk [vmem:[#allocation2 + $0xd0] sm:$0xff] %vm354, 0.0
        %383 = vst.msk [vmem:[#allocation2 + $0xd8] sm:$0x3] %vm356, 0.0
        %384 = vst.msk [vmem:[#allocation2 + $0xe0] sm:$0xff] %vm354, 0.0
        %385 = vst.msk [vmem:[#allocation2 + $0xe8] sm:$0x3] %vm356, 0.0
        %386 = vst.msk [vmem:[#allocation2 + $0xf0] sm:$0xff] %vm354, 0.0
        %387 = vst.msk [vmem:[#allocation2 + $0xf8] sm:$0x3] %vm356, 0.0
        %388 = vst.msk [vmem:[#allocation2 + $0x100] sm:$0xff] %vm354, 0.0
        %389 = vst.msk [vmem:[#allocation2 + $0x108] sm:$0x3] %vm356, 0.0
        %390 = vst.msk [vmem:[#allocation2 + $0x110] sm:$0xff] %vm354, 0.0
        %391 = vst.msk [vmem:[#allocation2 + $0x118] sm:$0x3] %vm356, 0.0
        %vm392 = vcmask 654912
        %393 = vst.msk [vmem:[#allocation2] sm:$0xff] %vm392, 0.0
        %vm394 = vcmask 648768
        %395 = vst.msk [vmem:[#allocation2 + $0x8] sm:$0x3] %vm394, 0.0
        %396 = vst.msk [vmem:[#allocation2 + $0x10] sm:$0xff] %vm392, 0.0
        %397 = vst.msk [vmem:[#allocation2 + $0x18] sm:$0x3] %vm394, 0.0
        %398 = vst.msk [vmem:[#allocation2 + $0x20] sm:$0xff] %vm392, 0.0
        %399 = vst.msk [vmem:[#allocation2 + $0x28] sm:$0x3] %vm394, 0.0
        %400 = vst.msk [vmem:[#allocation2 + $0x30] sm:$0xff] %vm392, 0.0
        %401 = vst.msk [vmem:[#allocation2 + $0x38] sm:$0x3] %vm394, 0.0
        %402 = vst.msk [vmem:[#allocation2 + $0x40] sm:$0xff] %vm392, 0.0
        %403 = vst.msk [vmem:[#allocation2 + $0x48] sm:$0x3] %vm394, 0.0
        %404 = vst.msk [vmem:[#allocation2 + $0x50] sm:$0xff] %vm392, 0.0
        %405 = vst.msk [vmem:[#allocation2 + $0x58] sm:$0x3] %vm394, 0.0
        %406 = vst.msk [vmem:[#allocation2 + $0x60] sm:$0xff] %vm392, 0.0
        %407 = vst.msk [vmem:[#allocation2 + $0x68] sm:$0x3] %vm394, 0.0
        %408 = vst.msk [vmem:[#allocation2 + $0x70] sm:$0xff] %vm392, 0.0
        %409 = vst.msk [vmem:[#allocation2 + $0x78] sm:$0x3] %vm394, 0.0
        %410 = vst.msk [vmem:[#allocation2 + $0x80] sm:$0xff] %vm392, 0.0
        %411 = vst.msk [vmem:[#allocation2 + $0x88] sm:$0x3] %vm394, 0.0
        %412 = vst.msk [vmem:[#allocation2 + $0x90] sm:$0xff] %vm392, 0.0
        %413 = vst.msk [vmem:[#allocation2 + $0x98] sm:$0x3] %vm394, 0.0
        %414 = vst.msk [vmem:[#allocation2 + $0xa0] sm:$0xff] %vm392, 0.0
        %415 = vst.msk [vmem:[#allocation2 + $0xa8] sm:$0x3] %vm394, 0.0
        %416 = vst.msk [vmem:[#allocation2 + $0xb0] sm:$0xff] %vm392, 0.0
        %417 = vst.msk [vmem:[#allocation2 + $0xb8] sm:$0x3] %vm394, 0.0
        %418 = vst.msk [vmem:[#allocation2 + $0xc0] sm:$0xff] %vm392, 0.0
        %419 = vst.msk [vmem:[#allocation2 + $0xc8] sm:$0x3] %vm394, 0.0
        %420 = vst.msk [vmem:[#allocation2 + $0xd0] sm:$0xff] %vm392, 0.0
        %421 = vst.msk [vmem:[#allocation2 + $0xd8] sm:$0x3] %vm394, 0.0
        %422 = vst.msk [vmem:[#allocation2 + $0xe0] sm:$0xff] %vm392, 0.0
        %423 = vst.msk [vmem:[#allocation2 + $0xe8] sm:$0x3] %vm394, 0.0
        %424 = vst.msk [vmem:[#allocation2 + $0xf0] sm:$0xff] %vm392, 0.0
        %425 = vst.msk [vmem:[#allocation2 + $0xf8] sm:$0x3] %vm394, 0.0
        %426 = vst.msk [vmem:[#allocation2 + $0x100] sm:$0xff] %vm392, 0.0
        %427 = vst.msk [vmem:[#allocation2 + $0x108] sm:$0x3] %vm394, 0.0
        %428 = vst.msk [vmem:[#allocation2 + $0x110] sm:$0xff] %vm392, 0.0
        %429 = vst.msk [vmem:[#allocation2 + $0x118] sm:$0x3] %vm394, 0.0
        %v430 = vld [vmem:[%s284] sm:$0xff]
        %v431 = vld [vmem:[%s284 + $0x8] sm:$0xff]
        %v432 = vld [vmem:[%s284 + $0x10] sm:$0xff]
        %v433 = vld [vmem:[%s284 + $0x18] sm:$0xff]
        %v434 = vld [vmem:[%s284 + $0x20] sm:$0xff]
        %v435 = vld [vmem:[%s284 + $0x28] sm:$0xff]
        %v436 = vld [vmem:[%s284 + $0x30] sm:$0xff]
        %v437 = vld [vmem:[%s284 + $0x38] sm:$0xff]
        %v438 = vld [vmem:[%s284 + $0x40] sm:$0xff]
        %v439 = vld [vmem:[%s284 + $0x48] sm:$0xff]
        %v440 = vld [vmem:[%s284 + $0x50] sm:$0xff]
        %v441 = vld [vmem:[%s284 + $0x58] sm:$0xff]
        %v442 = vld [vmem:[%s284 + $0x60] sm:$0xff]
        %v443 = vld [vmem:[%s284 + $0x68] sm:$0xff]
        %v444 = vld [vmem:[%s284 + $0x70] sm:$0xff]
        %v445 = vld [vmem:[%s284 + $0x78] sm:$0xff]
        %v446 = vld [vmem:[%s1] sm:$0xff]
        %v447 = vld [vmem:[%s1 + $0x8] sm:$0xff]
        %v448 = vld [vmem:[%s1 + $0x10] sm:$0xff]
        %v449 = vld [vmem:[%s1 + $0x18] sm:$0xff]
        %v450 = vld [vmem:[%s2] sm:$0x1]
        %v452 = vlaneseq
        %v453 = vshrl.u32 %v452, 7
        %v454 = vsub.s32 0, %v453
        %v455 = vrot.slane %v450, %v454
        %vm457 = vcmask 261120
        %v459 = vsel %vm457, %v430, 0
        %v462 = vsel %vm457, %v431, 0
        %v465 = vsel %vm457, %v432, 0
        %v468 = vsel %vm457, %v433, 0
        %v471 = vsel %vm457, %v434, 0
        %v474 = vsel %vm457, %v435, 0
        %v477 = vsel %vm457, %v436, 0
        %v480 = vsel %vm457, %v437, 0
        %v483 = vsel %vm457, %v438, 0
        %v486 = vsel %vm457, %v439, 0
        %v489 = vsel %vm457, %v440, 0
        %v492 = vsel %vm457, %v441, 0
        %v495 = vsel %vm457, %v442, 0
        %v498 = vsel %vm457, %v443, 0
        %v501 = vsel %vm457, %v444, 0
        %v504 = vsel %vm457, %v445, 0
        %506 = vmatprep.subr.mxu0 0.0
        %v507 = vand.u32 %v446, 4294901760
        %508 = vmatpush1.msra.mxu0 %v507
        %509 = vmatprep.subr.mxu0 0.0
        %v510 = vand.u32 %v447, 4294901760
        %511 = vmatpush1.msra.mxu0 %v510
        %512 = vmatprep.subr.mxu0 0.0
        %v513 = vand.u32 %v448, 4294901760
        %514 = vmatpush1.msra.mxu0 %v513
        %515 = vmatprep.subr.mxu0 0.0
        %v516 = vand.u32 %v449, 4294901760
        %517 = vmatpush1.msra.mxu0 %v516
        %518 = vmatprep.subr.mxu0 0.0
        %519 = vmatpush1.msra.mxu0 0.0
        %520 = vmatprep.subr.mxu0 0.0
        %521 = vmatpush1.msra.mxu0 0.0
        %522 = vmatprep.subr.mxu0 0.0
        %523 = vmatpush1.msra.mxu0 0.0
        %524 = vmatprep.subr.mxu0 0.0
        %525 = vmatpush1.msra.mxu0 0.0
        %526 = vmatprep.subr.mxu0 0.0
        %527 = vmatpush1.msra.mxu0 0.0
        %528 = vmatprep.subr.mxu0 0.0
        %529 = vmatpush1.msra.mxu0 0.0
        %530 = vmatprep.subr.mxu0 0.0
        %531 = vmatpush1.msra.mxu0 0.0
        %532 = vmatprep.subr.mxu0 0.0
        %533 = vmatpush1.msra.mxu0 0.0
        %534 = vmatprep.subr.mxu0 0.0
        %535 = vmatpush1.msra.mxu0 0.0
        %536 = vmatprep.subr.mxu0 0.0
        %537 = vmatpush1.msra.mxu0 0.0
        %538 = vmatprep.subr.mxu0 0.0
        %539 = vmatpush1.msra.mxu0 0.0
        %540 = vmatprep.subr.mxu0 0.0
        %541 = vmatpush1.msra.mxu0 0.0
        %542 = vmatprep.subr.mxu0 0.0
        %543 = vmatpush1.msra.mxu0 0.0
        %544 = vmatprep.subr.mxu0 0.0
        %545 = vmatpush1.msra.mxu0 0.0
        %546 = vmatprep.subr.mxu0 0.0
        %547 = vmatpush1.msra.mxu0 0.0
        %548 = vmatprep.subr.mxu0 0.0
        %549 = vmatpush1.msra.mxu0 0.0
        %550 = vmatprep.subr.mxu0 0.0
        %551 = vmatpush1.msra.mxu0 0.0
        %552 = vmatprep.subr.mxu0 0.0
        %553 = vmatpush1.msra.mxu0 0.0
        %554 = vmatprep.subr.mxu0 0.0
        %555 = vmatpush1.msra.mxu0 0.0
        %556 = vmatprep.subr.mxu0 0.0
        %557 = vmatpush1.msra.mxu0 0.0
        %558 = vmatprep.subr.mxu0 0.0
        %559 = vmatpush1.msra.mxu0 0.0
        %560 = vmatprep.subr.mxu0 0.0
        %561 = vmatpush1.msra.mxu0 0.0
        %562 = vmatprep.subr.mxu0 0.0
        %563 = vmatpush1.msra.mxu0 0.0
        %564 = vmatprep.subr.mxu0 0.0
        %565 = vmatpush1.msra.mxu0 0.0
        %566 = vmatprep.subr.mxu0 0.0
        %567 = vmatpush1.msra.mxu0 0.0
        %568 = vmatprep.subr.mxu0 0.0
        %569 = vmatpush1.msra.mxu0 0.0
        %570 = vmatprep.subr.mxu0 0.0
        %571 = vmatpush1.msra.mxu0 0.0
        %572 = vmatprep.subr.mxu0 0.0
        %573 = vmatpush1.msra.mxu0 0.0
        %574 = vmatprep.mubr.f32.mxu0 0.0
        %v575 = vand.u32 %v459, 4294901760
        %v576 = vsub.f32 %v459, %v575
        %v577 = vand.u32 %v576, 4294901760
        %v578 = vsub.f32 %v576, %v577
        %v579 = vand.u32 %v578, 4294901760
        %580 = vmatmul.mubr.f32.gmra.mrb[0].mxu0 %v579
        %v581 = vpop.f32.mrb[0].mxu0
        %v582 = vadd.f32 %v455, %v581
        %v583 = vpop.f32.mrb[0].mxu0
        %584 = vmatprep.mubr.f32.mxu0 0.0
        %v585 = vand.u32 %v462, 4294901760
        %v586 = vsub.f32 %v462, %v585
        %v587 = vand.u32 %v586, 4294901760
        %v588 = vsub.f32 %v586, %v587
        %v589 = vand.u32 %v588, 4294901760
        %590 = vmatmul.mubr.f32.gmra.mrb[0].mxu0 %v589
        %v591 = vpop.f32.mrb[0].mxu0
        %v592 = vadd.f32 %v455, %v591
        %v593 = vpop.f32.mrb[0].mxu0
        %594 = vmatprep.mubr.f32.mxu0 0.0
        %v595 = vand.u32 %v465, 4294901760
        %v596 = vsub.f32 %v465, %v595
        %v597 = vand.u32 %v596, 4294901760
        %v598 = vsub.f32 %v596, %v597
        %v599 = vand.u32 %v598, 4294901760
        %600 = vmatmul.mubr.f32.gmra.mrb[0].mxu0 %v599
        %v601 = vpop.f32.mrb[0].mxu0
        %v602 = vadd.f32 %v455, %v601
        %v603 = vpop.f32.mrb[0].mxu0
        %604 = vmatprep.mubr.f32.mxu0 0.0
        %v605 = vand.u32 %v468, 4294901760
        %v606 = vsub.f32 %v468, %v605
        %v607 = vand.u32 %v606, 4294901760
        %v608 = vsub.f32 %v606, %v607
        %v609 = vand.u32 %v608, 4294901760
        %610 = vmatmul.mubr.f32.gmra.mrb[0].mxu0 %v609
        %v611 = vpop.f32.mrb[0].mxu0
        %v612 = vadd.f32 %v455, %v611
        %v613 = vpop.f32.mrb[0].mxu0
        %614 = vmatprep.mubr.f32.mxu0 0.0
        %v615 = vand.u32 %v471, 4294901760
        %v616 = vsub.f32 %v471, %v615
        %v617 = vand.u32 %v616, 4294901760
        %v618 = vsub.f32 %v616, %v617
        %v619 = vand.u32 %v618, 4294901760
        %620 = vmatmul.mubr.f32.gmra.mrb[0].mxu0 %v619
        %v621 = vpop.f32.mrb[0].mxu0
        %v622 = vadd.f32 %v455, %v621
        %v623 = vpop.f32.mrb[0].mxu0
        %624 = vmatprep.mubr.f32.mxu0 0.0
        %v625 = vand.u32 %v474, 4294901760
        %v626 = vsub.f32 %v474, %v625
        %v627 = vand.u32 %v626, 4294901760
        %v628 = vsub.f32 %v626, %v627
        %v629 = vand.u32 %v628, 4294901760
        %630 = vmatmul.mubr.f32.gmra.mrb[0].mxu0 %v629
        %v631 = vpop.f32.mrb[0].mxu0
        %v632 = vadd.f32 %v455, %v631
        %v633 = vpop.f32.mrb[0].mxu0
        %634 = vmatprep.mubr.f32.mxu0 0.0
        %v635 = vand.u32 %v477, 4294901760
        %v636 = vsub.f32 %v477, %v635
        %v637 = vand.u32 %v636, 4294901760
        %v638 = vsub.f32 %v636, %v637
        %v639 = vand.u32 %v638, 4294901760
        %640 = vmatmul.mubr.f32.gmra.mrb[0].mxu0 %v639
        %v641 = vpop.f32.mrb[0].mxu0
        %v642 = vadd.f32 %v455, %v641
        %v643 = vpop.f32.mrb[0].mxu0
        %644 = vmatprep.mubr.f32.mxu0 0.0
        %v645 = vand.u32 %v480, 4294901760
        %v646 = vsub.f32 %v480, %v645
        %v647 = vand.u32 %v646, 4294901760
        %v648 = vsub.f32 %v646, %v647
        %v649 = vand.u32 %v648, 4294901760
        %650 = vmatmul.mubr.f32.gmra.mrb[0].mxu0 %v649
        %v651 = vpop.f32.mrb[0].mxu0
        %v652 = vadd.f32 %v455, %v651
        %v653 = vpop.f32.mrb[0].mxu0
        %654 = vmatprep.mubr.f32.mxu0 0.0
        %v655 = vand.u32 %v483, 4294901760
        %v656 = vsub.f32 %v483, %v655
        %v657 = vand.u32 %v656, 4294901760
        %v658 = vsub.f32 %v656, %v657
        %v659 = vand.u32 %v658, 4294901760
        %660 = vmatmul.mubr.f32.gmra.mrb[0].mxu0 %v659
        %v661 = vpop.f32.mrb[0].mxu0
        %v662 = vadd.f32 %v455, %v661
        %v663 = vpop.f32.mrb[0].mxu0
        %664 = vmatprep.mubr.f32.mxu0 0.0
        %v665 = vand.u32 %v486, 4294901760
        %v666 = vsub.f32 %v486, %v665
        %v667 = vand.u32 %v666, 4294901760
        %v668 = vsub.f32 %v666, %v667
        %v669 = vand.u32 %v668, 4294901760
        %670 = vmatmul.mubr.f32.gmra.mrb[0].mxu0 %v669
        %v671 = vpop.f32.mrb[0].mxu0
        %v672 = vadd.f32 %v455, %v671
        %v673 = vpop.f32.mrb[0].mxu0
        %674 = vmatprep.mubr.f32.mxu0 0.0
        %v675 = vand.u32 %v489, 4294901760
        %v676 = vsub.f32 %v489, %v675
        %v677 = vand.u32 %v676, 4294901760
        %v678 = vsub.f32 %v676, %v677
        %v679 = vand.u32 %v678, 4294901760
        %680 = vmatmul.mubr.f32.gmra.mrb[0].mxu0 %v679
        %v681 = vpop.f32.mrb[0].mxu0
        %v682 = vadd.f32 %v455, %v681
        %v683 = vpop.f32.mrb[0].mxu0
        %684 = vmatprep.mubr.f32.mxu0 0.0
        %v685 = vand.u32 %v492, 4294901760
        %v686 = vsub.f32 %v492, %v685
        %v687 = vand.u32 %v686, 4294901760
        %v688 = vsub.f32 %v686, %v687
        %v689 = vand.u32 %v688, 4294901760
        %690 = vmatmul.mubr.f32.gmra.mrb[0].mxu0 %v689
        %v691 = vpop.f32.mrb[0].mxu0
        %v692 = vadd.f32 %v455, %v691
        %v693 = vpop.f32.mrb[0].mxu0
        %694 = vmatprep.mubr.f32.mxu0 0.0
        %v695 = vand.u32 %v495, 4294901760
        %v696 = vsub.f32 %v495, %v695
        %v697 = vand.u32 %v696, 4294901760
        %v698 = vsub.f32 %v696, %v697
        %v699 = vand.u32 %v698, 4294901760
        %700 = vmatmul.mubr.f32.gmra.mrb[0].mxu0 %v699
        %v701 = vpop.f32.mrb[0].mxu0
        %v702 = vadd.f32 %v455, %v701
        %v703 = vpop.f32.mrb[0].mxu0
        %704 = vmatprep.mubr.f32.mxu0 0.0
        %v705 = vand.u32 %v498, 4294901760
        %v706 = vsub.f32 %v498, %v705
        %v707 = vand.u32 %v706, 4294901760
        %v708 = vsub.f32 %v706, %v707
        %v709 = vand.u32 %v708, 4294901760
        %710 = vmatmul.mubr.f32.gmra.mrb[0].mxu0 %v709
        %v711 = vpop.f32.mrb[0].mxu0
        %v712 = vadd.f32 %v455, %v711
        %v713 = vpop.f32.mrb[0].mxu0
        %714 = vmatprep.mubr.f32.mxu0 0.0
        %v715 = vand.u32 %v501, 4294901760
        %v716 = vsub.f32 %v501, %v715
        %v717 = vand.u32 %v716, 4294901760
        %v718 = vsub.f32 %v716, %v717
        %v719 = vand.u32 %v718, 4294901760
        %720 = vmatmul.mubr.f32.gmra.mrb[0].mxu0 %v719
        %v721 = vpop.f32.mrb[0].mxu0
        %v722 = vadd.f32 %v455, %v721
        %v723 = vpop.f32.mrb[0].mxu0
        %724 = vmatprep.mubr.f32.mxu0 0.0
        %v725 = vand.u32 %v504, 4294901760
        %v726 = vsub.f32 %v504, %v725
        %v727 = vand.u32 %v726, 4294901760
        %v728 = vsub.f32 %v726, %v727
        %v729 = vand.u32 %v728, 4294901760
        %730 = vmatmul.mubr.f32.gmra.mrb[0].mxu0 %v729
        %v731 = vpop.f32.mrb[0].mxu0
        %v732 = vadd.f32 %v455, %v731
        %v733 = vpop.f32.mrb[0].mxu0
        %734 = vdwg.mxu0
        %735 = vmatprep.subr.mxu0 0.0
        %v736 = vand.u32 %v446, 4294901760
        %v737 = vsub.f32 %v446, %v736
        %v738 = vand.u32 %v737, 4294901760
        %v739 = vsub.f32 %v737, %v738
        %v740 = vand.u32 %v739, 4294901760
        %741 = vmatpush1.msra.mxu0 %v740
        %742 = vmatprep.subr.mxu0 0.0
        %v743 = vand.u32 %v447, 4294901760
        %v744 = vsub.f32 %v447, %v743
        %v745 = vand.u32 %v744, 4294901760
        %v746 = vsub.f32 %v744, %v745
        %v747 = vand.u32 %v746, 4294901760
        %748 = vmatpush1.msra.mxu0 %v747
        %749 = vmatprep.subr.mxu0 0.0
        %v750 = vand.u32 %v448, 4294901760
        %v751 = vsub.f32 %v448, %v750
        %v752 = vand.u32 %v751, 4294901760
        %v753 = vsub.f32 %v751, %v752
        %v754 = vand.u32 %v753, 4294901760
        %755 = vmatpush1.msra.mxu0 %v754
        %756 = vmatprep.subr.mxu0 0.0
        %v757 = vand.u32 %v449, 4294901760
        %v758 = vsub.f32 %v449, %v757
        %v759 = vand.u32 %v758, 4294901760
        %v760 = vsub.f32 %v758, %v759
        %v761 = vand.u32 %v760, 4294901760
        %762 = vmatpush1.msra.mxu0 %v761
        %763 = vmatprep.subr.mxu0 0.0
        %764 = vmatpush1.msra.mxu0 0.0
        %765 = vmatprep.subr.mxu0 0.0
        %766 = vmatpush1.msra.mxu0 0.0
        %767 = vmatprep.subr.mxu0 0.0
        %768 = vmatpush1.msra.mxu0 0.0
        %769 = vmatprep.subr.mxu0 0.0
        %770 = vmatpush1.msra.mxu0 0.0
        %771 = vmatprep.subr.mxu0 0.0
        %772 = vmatpush1.msra.mxu0 0.0
        %773 = vmatprep.subr.mxu0 0.0
        %774 = vmatpush1.msra.mxu0 0.0
        %775 = vmatprep.subr.mxu0 0.0
        %776 = vmatpush1.msra.mxu0 0.0
        %777 = vmatprep.subr.mxu0 0.0
        %778 = vmatpush1.msra.mxu0 0.0
        %779 = vmatprep.subr.mxu0 0.0
        %780 = vmatpush1.msra.mxu0 0.0
        %781 = vmatprep.subr.mxu0 0.0
        %782 = vmatpush1.msra.mxu0 0.0
        %783 = vmatprep.subr.mxu0 0.0
        %784 = vmatpush1.msra.mxu0 0.0
        %785 = vmatprep.subr.mxu0 0.0
        %786 = vmatpush1.msra.mxu0 0.0
        %787 = vmatprep.subr.mxu0 0.0
        %788 = vmatpush1.msra.mxu0 0.0
        %789 = vmatprep.subr.mxu0 0.0
        %790 = vmatpush1.msra.mxu0 0.0
        %791 = vmatprep.subr.mxu0 0.0
        %792 = vmatpush1.msra.mxu0 0.0
        %793 = vmatprep.subr.mxu0 0.0
        %794 = vmatpush1.msra.mxu0 0.0
        %795 = vmatprep.subr.mxu0 0.0
        %796 = vmatpush1.msra.mxu0 0.0
        %797 = vmatprep.subr.mxu0 0.0
        %798 = vmatpush1.msra.mxu0 0.0
        %799 = vmatprep.subr.mxu0 0.0
        %800 = vmatpush1.msra.mxu0 0.0
        %801 = vmatprep.subr.mxu0 0.0
        %802 = vmatpush1.msra.mxu0 0.0
        %803 = vmatprep.subr.mxu0 0.0
        %804 = vmatpush1.msra.mxu0 0.0
        %805 = vmatprep.subr.mxu0 0.0
        %806 = vmatpush1.msra.mxu0 0.0
        %807 = vmatprep.subr.mxu0 0.0
        %808 = vmatpush1.msra.mxu0 0.0
        %809 = vmatprep.subr.mxu0 0.0
        %810 = vmatpush1.msra.mxu0 0.0
        %811 = vmatprep.subr.mxu0 0.0
        %812 = vmatpush1.msra.mxu0 0.0
        %813 = vmatprep.subr.mxu0 0.0
        %814 = vmatpush1.msra.mxu0 0.0
        %815 = vmatprep.subr.mxu0 0.0
        %816 = vmatpush1.msra.mxu0 0.0
        %817 = vmatprep.subr.mxu0 0.0
        %818 = vmatpush1.msra.mxu0 0.0
        %819 = vmatprep.mubr.f32.mxu0 0.0
        %v820 = vand.u32 %v459, 4294901760
        %821 = vmatmul.mubr.f32.gmra.mrb[0].mxu0 %v820
        %v822 = vpop.f32.mrb[0].mxu0
        %v823 = vadd.f32 %v582, %v822
        %v824 = vpop.f32.mrb[0].mxu0
        %825 = vmatprep.mubr.f32.mxu0 0.0
        %v826 = vand.u32 %v462, 4294901760
        %827 = vmatmul.mubr.f32.gmra.mrb[0].mxu0 %v826
        %v828 = vpop.f32.mrb[0].mxu0
        %v829 = vadd.f32 %v592, %v828
        %v830 = vpop.f32.mrb[0].mxu0
        %831 = vmatprep.mubr.f32.mxu0 0.0
        %v832 = vand.u32 %v465, 4294901760
        %833 = vmatmul.mubr.f32.gmra.mrb[0].mxu0 %v832
        %v834 = vpop.f32.mrb[0].mxu0
        %v835 = vadd.f32 %v602, %v834
        %v836 = vpop.f32.mrb[0].mxu0
        %837 = vmatprep.mubr.f32.mxu0 0.0
        %v838 = vand.u32 %v468, 4294901760
        %839 = vmatmul.mubr.f32.gmra.mrb[0].mxu0 %v838
        %v840 = vpop.f32.mrb[0].mxu0
        %v841 = vadd.f32 %v612, %v840
        %v842 = vpop.f32.mrb[0].mxu0
        %843 = vmatprep.mubr.f32.mxu0 0.0
        %v844 = vand.u32 %v471, 4294901760
        %845 = vmatmul.mubr.f32.gmra.mrb[0].mxu0 %v844
        %v846 = vpop.f32.mrb[0].mxu0
        %v847 = vadd.f32 %v622, %v846
        %v848 = vpop.f32.mrb[0].mxu0
        %849 = vmatprep.mubr.f32.mxu0 0.0
        %v850 = vand.u32 %v474, 4294901760
        %851 = vmatmul.mubr.f32.gmra.mrb[0].mxu0 %v850
        %v852 = vpop.f32.mrb[0].mxu0
        %v853 = vadd.f32 %v632, %v852
        %v854 = vpop.f32.mrb[0].mxu0
        %855 = vmatprep.mubr.f32.mxu0 0.0
        %v856 = vand.u32 %v477, 4294901760
        %857 = vmatmul.mubr.f32.gmra.mrb[0].mxu0 %v856
        %v858 = vpop.f32.mrb[0].mxu0
        %v859 = vadd.f32 %v642, %v858
        %v860 = vpop.f32.mrb[0].mxu0
        %861 = vmatprep.mubr.f32.mxu0 0.0
        %v862 = vand.u32 %v480, 4294901760
        %863 = vmatmul.mubr.f32.gmra.mrb[0].mxu0 %v862
        %v864 = vpop.f32.mrb[0].mxu0
        %v865 = vadd.f32 %v652, %v864
        %v866 = vpop.f32.mrb[0].mxu0
        %867 = vmatprep.mubr.f32.mxu0 0.0
        %v868 = vand.u32 %v483, 4294901760
        %869 = vmatmul.mubr.f32.gmra.mrb[0].mxu0 %v868
        %v870 = vpop.f32.mrb[0].mxu0
        %v871 = vadd.f32 %v662, %v870
        %v872 = vpop.f32.mrb[0].mxu0
        %873 = vmatprep.mubr.f32.mxu0 0.0
        %v874 = vand.u32 %v486, 4294901760
        %875 = vmatmul.mubr.f32.gmra.mrb[0].mxu0 %v874
        %v876 = vpop.f32.mrb[0].mxu0
        %v877 = vadd.f32 %v672, %v876
        %v878 = vpop.f32.mrb[0].mxu0
        %879 = vmatprep.mubr.f32.mxu0 0.0
        %v880 = vand.u32 %v489, 4294901760
        %881 = vmatmul.mubr.f32.gmra.mrb[0].mxu0 %v880
        %v882 = vpop.f32.mrb[0].mxu0
        %v883 = vadd.f32 %v682, %v882
        %v884 = vpop.f32.mrb[0].mxu0
        %885 = vmatprep.mubr.f32.mxu0 0.0
        %v886 = vand.u32 %v492, 4294901760
        %887 = vmatmul.mubr.f32.gmra.mrb[0].mxu0 %v886
        %v888 = vpop.f32.mrb[0].mxu0
        %v889 = vadd.f32 %v692, %v888
        %v890 = vpop.f32.mrb[0].mxu0
        %891 = vmatprep.mubr.f32.mxu0 0.0
        %v892 = vand.u32 %v495, 4294901760
        %893 = vmatmul.mubr.f32.gmra.mrb[0].mxu0 %v892
        %v894 = vpop.f32.mrb[0].mxu0
        %v895 = vadd.f32 %v702, %v894
        %v896 = vpop.f32.mrb[0].mxu0
        %897 = vmatprep.mubr.f32.mxu0 0.0
        %v898 = vand.u32 %v498, 4294901760
        %899 = vmatmul.mubr.f32.gmra.mrb[0].mxu0 %v898
        %v900 = vpop.f32.mrb[0].mxu0
        %v901 = vadd.f32 %v712, %v900
        %v902 = vpop.f32.mrb[0].mxu0
        %903 = vmatprep.mubr.f32.mxu0 0.0
        %v904 = vand.u32 %v501, 4294901760
        %905 = vmatmul.mubr.f32.gmra.mrb[0].mxu0 %v904
        %v906 = vpop.f32.mrb[0].mxu0
        %v907 = vadd.f32 %v722, %v906
        %v908 = vpop.f32.mrb[0].mxu0
        %909 = vmatprep.mubr.f32.mxu0 0.0
        %v910 = vand.u32 %v504, 4294901760
        %911 = vmatmul.mubr.f32.gmra.mrb[0].mxu0 %v910
        %v912 = vpop.f32.mrb[0].mxu0
        %v913 = vadd.f32 %v732, %v912
        %v914 = vpop.f32.mrb[0].mxu0
        %915 = vdwg.mxu0
        %916 = vmatprep.subr.mxu0 0.0
        %v917 = vand.u32 %v446, 4294901760
        %v918 = vsub.f32 %v446, %v917
        %919 = vmatpush1.msra.mxu0 %v918
        %920 = vmatprep.subr.mxu0 0.0
        %v921 = vand.u32 %v447, 4294901760
        %v922 = vsub.f32 %v447, %v921
        %923 = vmatpush1.msra.mxu0 %v922
        %924 = vmatprep.subr.mxu0 0.0
        %v925 = vand.u32 %v448, 4294901760
        %v926 = vsub.f32 %v448, %v925
        %927 = vmatpush1.msra.mxu0 %v926
        %928 = vmatprep.subr.mxu0 0.0
        %v929 = vand.u32 %v449, 4294901760
        %v930 = vsub.f32 %v449, %v929
        %931 = vmatpush1.msra.mxu0 %v930
        %932 = vmatprep.subr.mxu0 0.0
        %933 = vmatpush1.msra.mxu0 0.0
        %934 = vmatprep.subr.mxu0 0.0
        %935 = vmatpush1.msra.mxu0 0.0
        %936 = vmatprep.subr.mxu0 0.0
        %937 = vmatpush1.msra.mxu0 0.0
        %938 = vmatprep.subr.mxu0 0.0
        %939 = vmatpush1.msra.mxu0 0.0
        %940 = vmatprep.subr.mxu0 0.0
        %941 = vmatpush1.msra.mxu0 0.0
        %942 = vmatprep.subr.mxu0 0.0
        %943 = vmatpush1.msra.mxu0 0.0
        %944 = vmatprep.subr.mxu0 0.0
        %945 = vmatpush1.msra.mxu0 0.0
        %946 = vmatprep.subr.mxu0 0.0
        %947 = vmatpush1.msra.mxu0 0.0
        %948 = vmatprep.subr.mxu0 0.0
        %949 = vmatpush1.msra.mxu0 0.0
        %950 = vmatprep.subr.mxu0 0.0
        %951 = vmatpush1.msra.mxu0 0.0
        %952 = vmatprep.subr.mxu0 0.0
        %953 = vmatpush1.msra.mxu0 0.0
        %954 = vmatprep.subr.mxu0 0.0
        %955 = vmatpush1.msra.mxu0 0.0
        %956 = vmatprep.subr.mxu0 0.0
        %957 = vmatpush1.msra.mxu0 0.0
        %958 = vmatprep.subr.mxu0 0.0
        %959 = vmatpush1.msra.mxu0 0.0
        %960 = vmatprep.subr.mxu0 0.0
        %961 = vmatpush1.msra.mxu0 0.0
        %962 = vmatprep.subr.mxu0 0.0
        %963 = vmatpush1.msra.mxu0 0.0
        %964 = vmatprep.subr.mxu0 0.0
        %965 = vmatpush1.msra.mxu0 0.0
        %966 = vmatprep.subr.mxu0 0.0
        %967 = vmatpush1.msra.mxu0 0.0
        %968 = vmatprep.subr.mxu0 0.0
        %969 = vmatpush1.msra.mxu0 0.0
        %970 = vmatprep.subr.mxu0 0.0
        %971 = vmatpush1.msra.mxu0 0.0
        %972 = vmatprep.subr.mxu0 0.0
        %973 = vmatpush1.msra.mxu0 0.0
        %974 = vmatprep.subr.mxu0 0.0
        %975 = vmatpush1.msra.mxu0 0.0
        %976 = vmatprep.subr.mxu0 0.0
        %977 = vmatpush1.msra.mxu0 0.0
        %978 = vmatprep.subr.mxu0 0.0
        %979 = vmatpush1.msra.mxu0 0.0
        %980 = vmatprep.subr.mxu0 0.0
        %981 = vmatpush1.msra.mxu0 0.0
        %982 = vmatprep.subr.mxu0 0.0
        %983 = vmatpush1.msra.mxu0 0.0
        %984 = vmatprep.subr.mxu0 0.0
        %985 = vmatpush1.msra.mxu0 0.0
        %986 = vmatprep.subr.mxu0 0.0
        %987 = vmatpush1.msra.mxu0 0.0
        %988 = vmatprep.mubr.f32.mxu0 0.0
        %v989 = vand.u32 %v459, 4294901760
        %v990 = vsub.f32 %v459, %v989
        %991 = vmatmul.mubr.f32.gmra.mrb[0].mxu0 %v990
        %v992 = vpop.f32.mrb[0].mxu0
        %v993 = vadd.f32 %v823, %v992
        %v994 = vpop.f32.mrb[0].mxu0
        %995 = vmatprep.mubr.f32.mxu0 0.0
        %v996 = vand.u32 %v462, 4294901760
        %v997 = vsub.f32 %v462, %v996
        %998 = vmatmul.mubr.f32.gmra.mrb[0].mxu0 %v997
        %v999 = vpop.f32.mrb[0].mxu0
        %v1000 = vadd.f32 %v829, %v999
        %v1001 = vpop.f32.mrb[0].mxu0
        %1002 = vmatprep.mubr.f32.mxu0 0.0
        %v1003 = vand.u32 %v465, 4294901760
        %v1004 = vsub.f32 %v465, %v1003
        %1005 = vmatmul.mubr.f32.gmra.mrb[0].mxu0 %v1004
        %v1006 = vpop.f32.mrb[0].mxu0
        %v1007 = vadd.f32 %v835, %v1006
        %v1008 = vpop.f32.mrb[0].mxu0
        %1009 = vmatprep.mubr.f32.mxu0 0.0
        %v1010 = vand.u32 %v468, 4294901760
        %v1011 = vsub.f32 %v468, %v1010
        %1012 = vmatmul.mubr.f32.gmra.mrb[0].mxu0 %v1011
        %v1013 = vpop.f32.mrb[0].mxu0
        %v1014 = vadd.f32 %v841, %v1013
        %v1015 = vpop.f32.mrb[0].mxu0
        %1016 = vmatprep.mubr.f32.mxu0 0.0
        %v1017 = vand.u32 %v471, 4294901760
        %v1018 = vsub.f32 %v471, %v1017
        %1019 = vmatmul.mubr.f32.gmra.mrb[0].mxu0 %v1018
        %v1020 = vpop.f32.mrb[0].mxu0
        %v1021 = vadd.f32 %v847, %v1020
        %v1022 = vpop.f32.mrb[0].mxu0
        %1023 = vmatprep.mubr.f32.mxu0 0.0
        %v1024 = vand.u32 %v474, 4294901760
        %v1025 = vsub.f32 %v474, %v1024
        %1026 = vmatmul.mubr.f32.gmra.mrb[0].mxu0 %v1025
        %v1027 = vpop.f32.mrb[0].mxu0
        %v1028 = vadd.f32 %v853, %v1027
        %v1029 = vpop.f32.mrb[0].mxu0
        %1030 = vmatprep.mubr.f32.mxu0 0.0
        %v1031 = vand.u32 %v477, 4294901760
        %v1032 = vsub.f32 %v477, %v1031
        %1033 = vmatmul.mubr.f32.gmra.mrb[0].mxu0 %v1032
        %v1034 = vpop.f32.mrb[0].mxu0
        %v1035 = vadd.f32 %v859, %v1034
        %v1036 = vpop.f32.mrb[0].mxu0
        %1037 = vmatprep.mubr.f32.mxu0 0.0
        %v1038 = vand.u32 %v480, 4294901760
        %v1039 = vsub.f32 %v480, %v1038
        %1040 = vmatmul.mubr.f32.gmra.mrb[0].mxu0 %v1039
        %v1041 = vpop.f32.mrb[0].mxu0
        %v1042 = vadd.f32 %v865, %v1041
        %v1043 = vpop.f32.mrb[0].mxu0
        %1044 = vmatprep.mubr.f32.mxu0 0.0
        %v1045 = vand.u32 %v483, 4294901760
        %v1046 = vsub.f32 %v483, %v1045
        %1047 = vmatmul.mubr.f32.gmra.mrb[0].mxu0 %v1046
        %v1048 = vpop.f32.mrb[0].mxu0
        %v1049 = vadd.f32 %v871, %v1048
        %v1050 = vpop.f32.mrb[0].mxu0
        %1051 = vmatprep.mubr.f32.mxu0 0.0
        %v1052 = vand.u32 %v486, 4294901760
        %v1053 = vsub.f32 %v486, %v1052
        %1054 = vmatmul.mubr.f32.gmra.mrb[0].mxu0 %v1053
        %v1055 = vpop.f32.mrb[0].mxu0
        %v1056 = vadd.f32 %v877, %v1055
        %v1057 = vpop.f32.mrb[0].mxu0
        %1058 = vmatprep.mubr.f32.mxu0 0.0
        %v1059 = vand.u32 %v489, 4294901760
        %v1060 = vsub.f32 %v489, %v1059
        %1061 = vmatmul.mubr.f32.gmra.mrb[0].mxu0 %v1060
        %v1062 = vpop.f32.mrb[0].mxu0
        %v1063 = vadd.f32 %v883, %v1062
        %v1064 = vpop.f32.mrb[0].mxu0
        %1065 = vmatprep.mubr.f32.mxu0 0.0
        %v1066 = vand.u32 %v492, 4294901760
        %v1067 = vsub.f32 %v492, %v1066
        %1068 = vmatmul.mubr.f32.gmra.mrb[0].mxu0 %v1067
        %v1069 = vpop.f32.mrb[0].mxu0
        %v1070 = vadd.f32 %v889, %v1069
        %v1071 = vpop.f32.mrb[0].mxu0
        %1072 = vmatprep.mubr.f32.mxu0 0.0
        %v1073 = vand.u32 %v495, 4294901760
        %v1074 = vsub.f32 %v495, %v1073
        %1075 = vmatmul.mubr.f32.gmra.mrb[0].mxu0 %v1074
        %v1076 = vpop.f32.mrb[0].mxu0
        %v1077 = vadd.f32 %v895, %v1076
        %v1078 = vpop.f32.mrb[0].mxu0
        %1079 = vmatprep.mubr.f32.mxu0 0.0
        %v1080 = vand.u32 %v498, 4294901760
        %v1081 = vsub.f32 %v498, %v1080
        %1082 = vmatmul.mubr.f32.gmra.mrb[0].mxu0 %v1081
        %v1083 = vpop.f32.mrb[0].mxu0
        %v1084 = vadd.f32 %v901, %v1083
        %v1085 = vpop.f32.mrb[0].mxu0
        %1086 = vmatprep.mubr.f32.mxu0 0.0
        %v1087 = vand.u32 %v501, 4294901760
        %v1088 = vsub.f32 %v501, %v1087
        %1089 = vmatmul.mubr.f32.gmra.mrb[0].mxu0 %v1088
        %v1090 = vpop.f32.mrb[0].mxu0
        %v1091 = vadd.f32 %v907, %v1090
        %v1092 = vpop.f32.mrb[0].mxu0
        %1093 = vmatprep.mubr.f32.mxu0 0.0
        %v1094 = vand.u32 %v504, 4294901760
        %v1095 = vsub.f32 %v504, %v1094
        %1096 = vmatmul.mubr.f32.gmra.mrb[0].mxu0 %v1095
        %v1097 = vpop.f32.mrb[0].mxu0
        %v1098 = vadd.f32 %v913, %v1097
        %v1099 = vpop.f32.mrb[0].mxu0
        %1100 = vdwg.mxu0
        %1101 = vmatprep.subr.mxu0 0.0
        %v1102 = vand.u32 %v446, 4294901760
        %1103 = vmatpush1.msra.mxu0 %v1102
        %1104 = vmatprep.subr.mxu0 0.0
        %v1105 = vand.u32 %v447, 4294901760
        %1106 = vmatpush1.msra.mxu0 %v1105
        %1107 = vmatprep.subr.mxu0 0.0
        %v1108 = vand.u32 %v448, 4294901760
        %1109 = vmatpush1.msra.mxu0 %v1108
        %1110 = vmatprep.subr.mxu0 0.0
        %v1111 = vand.u32 %v449, 4294901760
        %1112 = vmatpush1.msra.mxu0 %v1111
        %1113 = vmatprep.subr.mxu0 0.0
        %1114 = vmatpush1.msra.mxu0 0.0
        %1115 = vmatprep.subr.mxu0 0.0
        %1116 = vmatpush1.msra.mxu0 0.0
        %1117 = vmatprep.subr.mxu0 0.0
        %1118 = vmatpush1.msra.mxu0 0.0
        %1119 = vmatprep.subr.mxu0 0.0
        %1120 = vmatpush1.msra.mxu0 0.0
        %1121 = vmatprep.subr.mxu0 0.0
        %1122 = vmatpush1.msra.mxu0 0.0
        %1123 = vmatprep.subr.mxu0 0.0
        %1124 = vmatpush1.msra.mxu0 0.0
        %1125 = vmatprep.subr.mxu0 0.0
        %1126 = vmatpush1.msra.mxu0 0.0
        %1127 = vmatprep.subr.mxu0 0.0
        %1128 = vmatpush1.msra.mxu0 0.0
        %1129 = vmatprep.subr.mxu0 0.0
        %1130 = vmatpush1.msra.mxu0 0.0
        %1131 = vmatprep.subr.mxu0 0.0
        %1132 = vmatpush1.msra.mxu0 0.0
        %1133 = vmatprep.subr.mxu0 0.0
        %1134 = vmatpush1.msra.mxu0 0.0
        %1135 = vmatprep.subr.mxu0 0.0
        %1136 = vmatpush1.msra.mxu0 0.0
        %1137 = vmatprep.subr.mxu0 0.0
        %1138 = vmatpush1.msra.mxu0 0.0
        %1139 = vmatprep.subr.mxu0 0.0
        %1140 = vmatpush1.msra.mxu0 0.0
        %1141 = vmatprep.subr.mxu0 0.0
        %1142 = vmatpush1.msra.mxu0 0.0
        %1143 = vmatprep.subr.mxu0 0.0
        %1144 = vmatpush1.msra.mxu0 0.0
        %1145 = vmatprep.subr.mxu0 0.0
        %1146 = vmatpush1.msra.mxu0 0.0
        %1147 = vmatprep.subr.mxu0 0.0
        %1148 = vmatpush1.msra.mxu0 0.0
        %1149 = vmatprep.subr.mxu0 0.0
        %1150 = vmatpush1.msra.mxu0 0.0
        %1151 = vmatprep.subr.mxu0 0.0
        %1152 = vmatpush1.msra.mxu0 0.0
        %1153 = vmatprep.subr.mxu0 0.0
        %1154 = vmatpush1.msra.mxu0 0.0
        %1155 = vmatprep.subr.mxu0 0.0
        %1156 = vmatpush1.msra.mxu0 0.0
        %1157 = vmatprep.subr.mxu0 0.0
        %1158 = vmatpush1.msra.mxu0 0.0
        %1159 = vmatprep.subr.mxu0 0.0
        %1160 = vmatpush1.msra.mxu0 0.0
        %1161 = vmatprep.subr.mxu0 0.0
        %1162 = vmatpush1.msra.mxu0 0.0
        %1163 = vmatprep.subr.mxu0 0.0
        %1164 = vmatpush1.msra.mxu0 0.0
        %1165 = vmatprep.subr.mxu0 0.0
        %1166 = vmatpush1.msra.mxu0 0.0
        %1167 = vmatprep.subr.mxu0 0.0
        %1168 = vmatpush1.msra.mxu0 0.0
        %1169 = vmatprep.mubr.f32.mxu0 0.0
        %v1170 = vand.u32 %v459, 4294901760
        %v1171 = vsub.f32 %v459, %v1170
        %v1172 = vand.u32 %v1171, 4294901760
        %1173 = vmatmul.mubr.f32.gmra.mrb[0].mxu0 %v1172
        %v1174 = vpop.f32.mrb[0].mxu0
        %v1175 = vadd.f32 %v993, %v1174
        %v1176 = vpop.f32.mrb[0].mxu0
        %1177 = vmatprep.mubr.f32.mxu0 0.0
        %v1178 = vand.u32 %v462, 4294901760
        %v1179 = vsub.f32 %v462, %v1178
        %v1180 = vand.u32 %v1179, 4294901760
        %1181 = vmatmul.mubr.f32.gmra.mrb[0].mxu0 %v1180
        %v1182 = vpop.f32.mrb[0].mxu0
        %v1183 = vadd.f32 %v1000, %v1182
        %v1184 = vpop.f32.mrb[0].mxu0
        %1185 = vmatprep.mubr.f32.mxu0 0.0
        %v1186 = vand.u32 %v465, 4294901760
        %v1187 = vsub.f32 %v465, %v1186
        %v1188 = vand.u32 %v1187, 4294901760
        %1189 = vmatmul.mubr.f32.gmra.mrb[0].mxu0 %v1188
        %v1190 = vpop.f32.mrb[0].mxu0
        %v1191 = vadd.f32 %v1007, %v1190
        %v1192 = vpop.f32.mrb[0].mxu0
        %1193 = vmatprep.mubr.f32.mxu0 0.0
        %v1194 = vand.u32 %v468, 4294901760
        %v1195 = vsub.f32 %v468, %v1194
        %v1196 = vand.u32 %v1195, 4294901760
        %1197 = vmatmul.mubr.f32.gmra.mrb[0].mxu0 %v1196
        %v1198 = vpop.f32.mrb[0].mxu0
        %v1199 = vadd.f32 %v1014, %v1198
        %v1200 = vpop.f32.mrb[0].mxu0
        %1201 = vmatprep.mubr.f32.mxu0 0.0
        %v1202 = vand.u32 %v471, 4294901760
        %v1203 = vsub.f32 %v471, %v1202
        %v1204 = vand.u32 %v1203, 4294901760
        %1205 = vmatmul.mubr.f32.gmra.mrb[0].mxu0 %v1204
        %v1206 = vpop.f32.mrb[0].mxu0
        %v1207 = vadd.f32 %v1021, %v1206
        %v1208 = vpop.f32.mrb[0].mxu0
        %1209 = vmatprep.mubr.f32.mxu0 0.0
        %v1210 = vand.u32 %v474, 4294901760
        %v1211 = vsub.f32 %v474, %v1210
        %v1212 = vand.u32 %v1211, 4294901760
        %1213 = vmatmul.mubr.f32.gmra.mrb[0].mxu0 %v1212
        %v1214 = vpop.f32.mrb[0].mxu0
        %v1215 = vadd.f32 %v1028, %v1214
        %v1216 = vpop.f32.mrb[0].mxu0
        %1217 = vmatprep.mubr.f32.mxu0 0.0
        %v1218 = vand.u32 %v477, 4294901760
        %v1219 = vsub.f32 %v477, %v1218
        %v1220 = vand.u32 %v1219, 4294901760
        %1221 = vmatmul.mubr.f32.gmra.mrb[0].mxu0 %v1220
        %v1222 = vpop.f32.mrb[0].mxu0
        %v1223 = vadd.f32 %v1035, %v1222
        %v1224 = vpop.f32.mrb[0].mxu0
        %1225 = vmatprep.mubr.f32.mxu0 0.0
        %v1226 = vand.u32 %v480, 4294901760
        %v1227 = vsub.f32 %v480, %v1226
        %v1228 = vand.u32 %v1227, 4294901760
        %1229 = vmatmul.mubr.f32.gmra.mrb[0].mxu0 %v1228
        %v1230 = vpop.f32.mrb[0].mxu0
        %v1231 = vadd.f32 %v1042, %v1230
        %v1232 = vpop.f32.mrb[0].mxu0
        %1233 = vmatprep.mubr.f32.mxu0 0.0
        %v1234 = vand.u32 %v483, 4294901760
        %v1235 = vsub.f32 %v483, %v1234
        %v1236 = vand.u32 %v1235, 4294901760
        %1237 = vmatmul.mubr.f32.gmra.mrb[0].mxu0 %v1236
        %v1238 = vpop.f32.mrb[0].mxu0
        %v1239 = vadd.f32 %v1049, %v1238
        %v1240 = vpop.f32.mrb[0].mxu0
        %1241 = vmatprep.mubr.f32.mxu0 0.0
        %v1242 = vand.u32 %v486, 4294901760
        %v1243 = vsub.f32 %v486, %v1242
        %v1244 = vand.u32 %v1243, 4294901760
        %1245 = vmatmul.mubr.f32.gmra.mrb[0].mxu0 %v1244
        %v1246 = vpop.f32.mrb[0].mxu0
        %v1247 = vadd.f32 %v1056, %v1246
        %v1248 = vpop.f32.mrb[0].mxu0
        %1249 = vmatprep.mubr.f32.mxu0 0.0
        %v1250 = vand.u32 %v489, 4294901760
        %v1251 = vsub.f32 %v489, %v1250
        %v1252 = vand.u32 %v1251, 4294901760
        %1253 = vmatmul.mubr.f32.gmra.mrb[0].mxu0 %v1252
        %v1254 = vpop.f32.mrb[0].mxu0
        %v1255 = vadd.f32 %v1063, %v1254
        %v1256 = vpop.f32.mrb[0].mxu0
        %1257 = vmatprep.mubr.f32.mxu0 0.0
        %v1258 = vand.u32 %v492, 4294901760
        %v1259 = vsub.f32 %v492, %v1258
        %v1260 = vand.u32 %v1259, 4294901760
        %1261 = vmatmul.mubr.f32.gmra.mrb[0].mxu0 %v1260
        %v1262 = vpop.f32.mrb[0].mxu0
        %v1263 = vadd.f32 %v1070, %v1262
        %v1264 = vpop.f32.mrb[0].mxu0
        %1265 = vmatprep.mubr.f32.mxu0 0.0
        %v1266 = vand.u32 %v495, 4294901760
        %v1267 = vsub.f32 %v495, %v1266
        %v1268 = vand.u32 %v1267, 4294901760
        %1269 = vmatmul.mubr.f32.gmra.mrb[0].mxu0 %v1268
        %v1270 = vpop.f32.mrb[0].mxu0
        %v1271 = vadd.f32 %v1077, %v1270
        %v1272 = vpop.f32.mrb[0].mxu0
        %1273 = vmatprep.mubr.f32.mxu0 0.0
        %v1274 = vand.u32 %v498, 4294901760
        %v1275 = vsub.f32 %v498, %v1274
        %v1276 = vand.u32 %v1275, 4294901760
        %1277 = vmatmul.mubr.f32.gmra.mrb[0].mxu0 %v1276
        %v1278 = vpop.f32.mrb[0].mxu0
        %v1279 = vadd.f32 %v1084, %v1278
        %v1280 = vpop.f32.mrb[0].mxu0
        %1281 = vmatprep.mubr.f32.mxu0 0.0
        %v1282 = vand.u32 %v501, 4294901760
        %v1283 = vsub.f32 %v501, %v1282
        %v1284 = vand.u32 %v1283, 4294901760
        %1285 = vmatmul.mubr.f32.gmra.mrb[0].mxu0 %v1284
        %v1286 = vpop.f32.mrb[0].mxu0
        %v1287 = vadd.f32 %v1091, %v1286
        %v1288 = vpop.f32.mrb[0].mxu0
        %1289 = vmatprep.mubr.f32.mxu0 0.0
        %v1290 = vand.u32 %v504, 4294901760
        %v1291 = vsub.f32 %v504, %v1290
        %v1292 = vand.u32 %v1291, 4294901760
        %1293 = vmatmul.mubr.f32.gmra.mrb[0].mxu0 %v1292
        %v1294 = vpop.f32.mrb[0].mxu0
        %v1295 = vadd.f32 %v1098, %v1294
        %v1296 = vpop.f32.mrb[0].mxu0
        %1297 = vdwg.mxu0
        %1298 = vmatprep.subr.mxu0 0.0
        %v1299 = vand.u32 %v446, 4294901760
        %v1300 = vsub.f32 %v446, %v1299
        %v1301 = vand.u32 %v1300, 4294901760
        %1302 = vmatpush1.msra.mxu0 %v1301
        %1303 = vmatprep.subr.mxu0 0.0
        %v1304 = vand.u32 %v447, 4294901760
        %v1305 = vsub.f32 %v447, %v1304
        %v1306 = vand.u32 %v1305, 4294901760
        %1307 = vmatpush1.msra.mxu0 %v1306
        %1308 = vmatprep.subr.mxu0 0.0
        %v1309 = vand.u32 %v448, 4294901760
        %v1310 = vsub.f32 %v448, %v1309
        %v1311 = vand.u32 %v1310, 4294901760
        %1312 = vmatpush1.msra.mxu0 %v1311
        %1313 = vmatprep.subr.mxu0 0.0
        %v1314 = vand.u32 %v449, 4294901760
        %v1315 = vsub.f32 %v449, %v1314
        %v1316 = vand.u32 %v1315, 4294901760
        %1317 = vmatpush1.msra.mxu0 %v1316
        %1318 = vmatprep.subr.mxu0 0.0
        %1319 = vmatpush1.msra.mxu0 0.0
        %1320 = vmatprep.subr.mxu0 0.0
        %1321 = vmatpush1.msra.mxu0 0.0
        %1322 = vmatprep.subr.mxu0 0.0
        %1323 = vmatpush1.msra.mxu0 0.0
        %1324 = vmatprep.subr.mxu0 0.0
        %1325 = vmatpush1.msra.mxu0 0.0
        %1326 = vmatprep.subr.mxu0 0.0
        %1327 = vmatpush1.msra.mxu0 0.0
        %1328 = vmatprep.subr.mxu0 0.0
        %1329 = vmatpush1.msra.mxu0 0.0
        %1330 = vmatprep.subr.mxu0 0.0
        %1331 = vmatpush1.msra.mxu0 0.0
        %1332 = vmatprep.subr.mxu0 0.0
        %1333 = vmatpush1.msra.mxu0 0.0
        %1334 = vmatprep.subr.mxu0 0.0
        %1335 = vmatpush1.msra.mxu0 0.0
        %1336 = vmatprep.subr.mxu0 0.0
        %1337 = vmatpush1.msra.mxu0 0.0
        %1338 = vmatprep.subr.mxu0 0.0
        %1339 = vmatpush1.msra.mxu0 0.0
        %1340 = vmatprep.subr.mxu0 0.0
        %1341 = vmatpush1.msra.mxu0 0.0
        %1342 = vmatprep.subr.mxu0 0.0
        %1343 = vmatpush1.msra.mxu0 0.0
        %1344 = vmatprep.subr.mxu0 0.0
        %1345 = vmatpush1.msra.mxu0 0.0
        %1346 = vmatprep.subr.mxu0 0.0
        %1347 = vmatpush1.msra.mxu0 0.0
        %1348 = vmatprep.subr.mxu0 0.0
        %1349 = vmatpush1.msra.mxu0 0.0
        %1350 = vmatprep.subr.mxu0 0.0
        %1351 = vmatpush1.msra.mxu0 0.0
        %1352 = vmatprep.subr.mxu0 0.0
        %1353 = vmatpush1.msra.mxu0 0.0
        %1354 = vmatprep.subr.mxu0 0.0
        %1355 = vmatpush1.msra.mxu0 0.0
        %1356 = vmatprep.subr.mxu0 0.0
        %1357 = vmatpush1.msra.mxu0 0.0
        %1358 = vmatprep.subr.mxu0 0.0
        %1359 = vmatpush1.msra.mxu0 0.0
        %1360 = vmatprep.subr.mxu0 0.0
        %1361 = vmatpush1.msra.mxu0 0.0
        %1362 = vmatprep.subr.mxu0 0.0
        %1363 = vmatpush1.msra.mxu0 0.0
        %1364 = vmatprep.subr.mxu0 0.0
        %1365 = vmatpush1.msra.mxu0 0.0
        %1366 = vmatprep.subr.mxu0 0.0
        %1367 = vmatpush1.msra.mxu0 0.0
        %1368 = vmatprep.subr.mxu0 0.0
        %1369 = vmatpush1.msra.mxu0 0.0
        %1370 = vmatprep.subr.mxu0 0.0
        %1371 = vmatpush1.msra.mxu0 0.0
        %1372 = vmatprep.subr.mxu0 0.0
        %1373 = vmatpush1.msra.mxu0 0.0
        %1374 = vmatprep.mubr.f32.mxu0 0.0
        %v1375 = vand.u32 %v459, 4294901760
        %1376 = vmatmul.mubr.f32.gmra.mrb[0].mxu0 %v1375
        %v1377 = vpop.f32.mrb[0].mxu0
        %v1378 = vadd.f32 %v1175, %v1377
        %v1379 = vpop.f32.mrb[0].mxu0
        %1380 = vmatprep.mubr.f32.mxu0 0.0
        %v1381 = vand.u32 %v462, 4294901760
        %1382 = vmatmul.mubr.f32.gmra.mrb[0].mxu0 %v1381
        %v1383 = vpop.f32.mrb[0].mxu0
        %v1384 = vadd.f32 %v1183, %v1383
        %v1385 = vpop.f32.mrb[0].mxu0
        %1386 = vmatprep.mubr.f32.mxu0 0.0
        %v1387 = vand.u32 %v465, 4294901760
        %1388 = vmatmul.mubr.f32.gmra.mrb[0].mxu0 %v1387
        %v1389 = vpop.f32.mrb[0].mxu0
        %v1390 = vadd.f32 %v1191, %v1389
        %v1391 = vpop.f32.mrb[0].mxu0
        %1392 = vmatprep.mubr.f32.mxu0 0.0
        %v1393 = vand.u32 %v468, 4294901760
        %1394 = vmatmul.mubr.f32.gmra.mrb[0].mxu0 %v1393
        %v1395 = vpop.f32.mrb[0].mxu0
        %v1396 = vadd.f32 %v1199, %v1395
        %v1397 = vpop.f32.mrb[0].mxu0
        %1398 = vmatprep.mubr.f32.mxu0 0.0
        %v1399 = vand.u32 %v471, 4294901760
        %1400 = vmatmul.mubr.f32.gmra.mrb[0].mxu0 %v1399
        %v1401 = vpop.f32.mrb[0].mxu0
        %v1402 = vadd.f32 %v1207, %v1401
        %v1403 = vpop.f32.mrb[0].mxu0
        %1404 = vmatprep.mubr.f32.mxu0 0.0
        %v1405 = vand.u32 %v474, 4294901760
        %1406 = vmatmul.mubr.f32.gmra.mrb[0].mxu0 %v1405
        %v1407 = vpop.f32.mrb[0].mxu0
        %v1408 = vadd.f32 %v1215, %v1407
        %v1409 = vpop.f32.mrb[0].mxu0
        %1410 = vmatprep.mubr.f32.mxu0 0.0
        %v1411 = vand.u32 %v477, 4294901760
        %1412 = vmatmul.mubr.f32.gmra.mrb[0].mxu0 %v1411
        %v1413 = vpop.f32.mrb[0].mxu0
        %v1414 = vadd.f32 %v1223, %v1413
        %v1415 = vpop.f32.mrb[0].mxu0
        %1416 = vmatprep.mubr.f32.mxu0 0.0
        %v1417 = vand.u32 %v480, 4294901760
        %1418 = vmatmul.mubr.f32.gmra.mrb[0].mxu0 %v1417
        %v1419 = vpop.f32.mrb[0].mxu0
        %v1420 = vadd.f32 %v1231, %v1419
        %v1421 = vpop.f32.mrb[0].mxu0
        %1422 = vmatprep.mubr.f32.mxu0 0.0
        %v1423 = vand.u32 %v483, 4294901760
        %1424 = vmatmul.mubr.f32.gmra.mrb[0].mxu0 %v1423
        %v1425 = vpop.f32.mrb[0].mxu0
        %v1426 = vadd.f32 %v1239, %v1425
        %v1427 = vpop.f32.mrb[0].mxu0
        %1428 = vmatprep.mubr.f32.mxu0 0.0
        %v1429 = vand.u32 %v486, 4294901760
        %1430 = vmatmul.mubr.f32.gmra.mrb[0].mxu0 %v1429
        %v1431 = vpop.f32.mrb[0].mxu0
        %v1432 = vadd.f32 %v1247, %v1431
        %v1433 = vpop.f32.mrb[0].mxu0
        %1434 = vmatprep.mubr.f32.mxu0 0.0
        %v1435 = vand.u32 %v489, 4294901760
        %1436 = vmatmul.mubr.f32.gmra.mrb[0].mxu0 %v1435
        %v1437 = vpop.f32.mrb[0].mxu0
        %v1438 = vadd.f32 %v1255, %v1437
        %v1439 = vpop.f32.mrb[0].mxu0
        %1440 = vmatprep.mubr.f32.mxu0 0.0
        %v1441 = vand.u32 %v492, 4294901760
        %1442 = vmatmul.mubr.f32.gmra.mrb[0].mxu0 %v1441
        %v1443 = vpop.f32.mrb[0].mxu0
        %v1444 = vadd.f32 %v1263, %v1443
        %v1445 = vpop.f32.mrb[0].mxu0
        %1446 = vmatprep.mubr.f32.mxu0 0.0
        %v1447 = vand.u32 %v495, 4294901760
        %1448 = vmatmul.mubr.f32.gmra.mrb[0].mxu0 %v1447
        %v1449 = vpop.f32.mrb[0].mxu0
        %v1450 = vadd.f32 %v1271, %v1449
        %v1451 = vpop.f32.mrb[0].mxu0
        %1452 = vmatprep.mubr.f32.mxu0 0.0
        %v1453 = vand.u32 %v498, 4294901760
        %1454 = vmatmul.mubr.f32.gmra.mrb[0].mxu0 %v1453
        %v1455 = vpop.f32.mrb[0].mxu0
        %v1456 = vadd.f32 %v1279, %v1455
        %v1457 = vpop.f32.mrb[0].mxu0
        %1458 = vmatprep.mubr.f32.mxu0 0.0
        %v1459 = vand.u32 %v501, 4294901760
        %1460 = vmatmul.mubr.f32.gmra.mrb[0].mxu0 %v1459
        %v1461 = vpop.f32.mrb[0].mxu0
        %v1462 = vadd.f32 %v1287, %v1461
        %v1463 = vpop.f32.mrb[0].mxu0
        %1464 = vmatprep.mubr.f32.mxu0 0.0
        %v1465 = vand.u32 %v504, 4294901760
        %1466 = vmatmul.mubr.f32.gmra.mrb[0].mxu0 %v1465
        %v1467 = vpop.f32.mrb[0].mxu0
        %v1468 = vadd.f32 %v1295, %v1467
        %v1469 = vpop.f32.mrb[0].mxu0
        %1470 = vdwg.mxu0
        %1471 = vmatprep.subr.mxu0 0.0
        %v1472 = vand.u32 %v446, 4294901760
        %1473 = vmatpush1.msra.mxu0 %v1472
        %1474 = vmatprep.subr.mxu0 0.0
        %v1475 = vand.u32 %v447, 4294901760
        %1476 = vmatpush1.msra.mxu0 %v1475
        %1477 = vmatprep.subr.mxu0 0.0
        %v1478 = vand.u32 %v448, 4294901760
        %1479 = vmatpush1.msra.mxu0 %v1478
        %1480 = vmatprep.subr.mxu0 0.0
        %v1481 = vand.u32 %v449, 4294901760
        %1482 = vmatpush1.msra.mxu0 %v1481
        %1483 = vmatprep.subr.mxu0 0.0
        %1484 = vmatpush1.msra.mxu0 0.0
        %1485 = vmatprep.subr.mxu0 0.0
        %1486 = vmatpush1.msra.mxu0 0.0
        %1487 = vmatprep.subr.mxu0 0.0
        %1488 = vmatpush1.msra.mxu0 0.0
        %1489 = vmatprep.subr.mxu0 0.0
        %1490 = vmatpush1.msra.mxu0 0.0
        %1491 = vmatprep.subr.mxu0 0.0
        %1492 = vmatpush1.msra.mxu0 0.0
        %1493 = vmatprep.subr.mxu0 0.0
        %1494 = vmatpush1.msra.mxu0 0.0
        %1495 = vmatprep.subr.mxu0 0.0
        %1496 = vmatpush1.msra.mxu0 0.0
        %1497 = vmatprep.subr.mxu0 0.0
        %1498 = vmatpush1.msra.mxu0 0.0
        %1499 = vmatprep.subr.mxu0 0.0
        %1500 = vmatpush1.msra.mxu0 0.0
        %1501 = vmatprep.subr.mxu0 0.0
        %1502 = vmatpush1.msra.mxu0 0.0
        %1503 = vmatprep.subr.mxu0 0.0
        %1504 = vmatpush1.msra.mxu0 0.0
        %1505 = vmatprep.subr.mxu0 0.0
        %1506 = vmatpush1.msra.mxu0 0.0
        %1507 = vmatprep.subr.mxu0 0.0
        %1508 = vmatpush1.msra.mxu0 0.0
        %1509 = vmatprep.subr.mxu0 0.0
        %1510 = vmatpush1.msra.mxu0 0.0
        %1511 = vmatprep.subr.mxu0 0.0
        %1512 = vmatpush1.msra.mxu0 0.0
        %1513 = vmatprep.subr.mxu0 0.0
        %1514 = vmatpush1.msra.mxu0 0.0
        %1515 = vmatprep.subr.mxu0 0.0
        %1516 = vmatpush1.msra.mxu0 0.0
        %1517 = vmatprep.subr.mxu0 0.0
        %1518 = vmatpush1.msra.mxu0 0.0
        %1519 = vmatprep.subr.mxu0 0.0
        %1520 = vmatpush1.msra.mxu0 0.0
        %1521 = vmatprep.subr.mxu0 0.0
        %1522 = vmatpush1.msra.mxu0 0.0
        %1523 = vmatprep.subr.mxu0 0.0
        %1524 = vmatpush1.msra.mxu0 0.0
        %1525 = vmatprep.subr.mxu0 0.0
        %1526 = vmatpush1.msra.mxu0 0.0
        %1527 = vmatprep.subr.mxu0 0.0
        %1528 = vmatpush1.msra.mxu0 0.0
        %1529 = vmatprep.subr.mxu0 0.0
        %1530 = vmatpush1.msra.mxu0 0.0
        %1531 = vmatprep.subr.mxu0 0.0
        %1532 = vmatpush1.msra.mxu0 0.0
        %1533 = vmatprep.subr.mxu0 0.0
        %1534 = vmatpush1.msra.mxu0 0.0
        %1535 = vmatprep.subr.mxu0 0.0
        %1536 = vmatpush1.msra.mxu0 0.0
        %1537 = vmatprep.subr.mxu0 0.0
        %1538 = vmatpush1.msra.mxu0 0.0
        %1539 = vmatprep.mubr.f32.mxu0 0.0
        %v1540 = vand.u32 %v459, 4294901760
        %1541 = vmatmul.mubr.f32.gmra.mrb[0].mxu0 %v1540
        %v1542 = vpop.f32.mrb[0].mxu0
        %v1543 = vadd.f32 %v1378, %v1542
        %v1544 = vpop.f32.mrb[0].mxu0
        %1545 = vmatprep.mubr.f32.mxu0 0.0
        %v1546 = vand.u32 %v462, 4294901760
        %1547 = vmatmul.mubr.f32.gmra.mrb[0].mxu0 %v1546
        %v1548 = vpop.f32.mrb[0].mxu0
        %v1549 = vadd.f32 %v1384, %v1548
        %v1550 = vpop.f32.mrb[0].mxu0
        %1551 = vmatprep.mubr.f32.mxu0 0.0
        %v1552 = vand.u32 %v465, 4294901760
        %1553 = vmatmul.mubr.f32.gmra.mrb[0].mxu0 %v1552
        %v1554 = vpop.f32.mrb[0].mxu0
        %v1555 = vadd.f32 %v1390, %v1554
        %v1556 = vpop.f32.mrb[0].mxu0
        %1557 = vmatprep.mubr.f32.mxu0 0.0
        %v1558 = vand.u32 %v468, 4294901760
        %1559 = vmatmul.mubr.f32.gmra.mrb[0].mxu0 %v1558
        %v1560 = vpop.f32.mrb[0].mxu0
        %v1561 = vadd.f32 %v1396, %v1560
        %v1562 = vpop.f32.mrb[0].mxu0
        %1563 = vmatprep.mubr.f32.mxu0 0.0
        %v1564 = vand.u32 %v471, 4294901760
        %1565 = vmatmul.mubr.f32.gmra.mrb[0].mxu0 %v1564
        %v1566 = vpop.f32.mrb[0].mxu0
        %v1567 = vadd.f32 %v1402, %v1566
        %v1568 = vpop.f32.mrb[0].mxu0
        %1569 = vmatprep.mubr.f32.mxu0 0.0
        %v1570 = vand.u32 %v474, 4294901760
        %1571 = vmatmul.mubr.f32.gmra.mrb[0].mxu0 %v1570
        %v1572 = vpop.f32.mrb[0].mxu0
        %v1573 = vadd.f32 %v1408, %v1572
        %v1574 = vpop.f32.mrb[0].mxu0
        %1575 = vmatprep.mubr.f32.mxu0 0.0
        %v1576 = vand.u32 %v477, 4294901760
        %1577 = vmatmul.mubr.f32.gmra.mrb[0].mxu0 %v1576
        %v1578 = vpop.f32.mrb[0].mxu0
        %v1579 = vadd.f32 %v1414, %v1578
        %v1580 = vpop.f32.mrb[0].mxu0
        %1581 = vmatprep.mubr.f32.mxu0 0.0
        %v1582 = vand.u32 %v480, 4294901760
        %1583 = vmatmul.mubr.f32.gmra.mrb[0].mxu0 %v1582
        %v1584 = vpop.f32.mrb[0].mxu0
        %v1585 = vadd.f32 %v1420, %v1584
        %v1586 = vpop.f32.mrb[0].mxu0
        %1587 = vmatprep.mubr.f32.mxu0 0.0
        %v1588 = vand.u32 %v483, 4294901760
        %1589 = vmatmul.mubr.f32.gmra.mrb[0].mxu0 %v1588
        %v1590 = vpop.f32.mrb[0].mxu0
        %v1591 = vadd.f32 %v1426, %v1590
        %v1592 = vpop.f32.mrb[0].mxu0
        %1593 = vmatprep.mubr.f32.mxu0 0.0
        %v1594 = vand.u32 %v486, 4294901760
        %1595 = vmatmul.mubr.f32.gmra.mrb[0].mxu0 %v1594
        %v1596 = vpop.f32.mrb[0].mxu0
        %v1597 = vadd.f32 %v1432, %v1596
        %v1598 = vpop.f32.mrb[0].mxu0
        %1599 = vmatprep.mubr.f32.mxu0 0.0
        %v1600 = vand.u32 %v489, 4294901760
        %1601 = vmatmul.mubr.f32.gmra.mrb[0].mxu0 %v1600
        %v1602 = vpop.f32.mrb[0].mxu0
        %v1603 = vadd.f32 %v1438, %v1602
        %v1604 = vpop.f32.mrb[0].mxu0
        %1605 = vmatprep.mubr.f32.mxu0 0.0
        %v1606 = vand.u32 %v492, 4294901760
        %1607 = vmatmul.mubr.f32.gmra.mrb[0].mxu0 %v1606
        %v1608 = vpop.f32.mrb[0].mxu0
        %v1609 = vadd.f32 %v1444, %v1608
        %v1610 = vpop.f32.mrb[0].mxu0
        %1611 = vmatprep.mubr.f32.mxu0 0.0
        %v1612 = vand.u32 %v495, 4294901760
        %1613 = vmatmul.mubr.f32.gmra.mrb[0].mxu0 %v1612
        %v1614 = vpop.f32.mrb[0].mxu0
        %v1615 = vadd.f32 %v1450, %v1614
        %v1616 = vpop.f32.mrb[0].mxu0
        %1617 = vmatprep.mubr.f32.mxu0 0.0
        %v1618 = vand.u32 %v498, 4294901760
        %1619 = vmatmul.mubr.f32.gmra.mrb[0].mxu0 %v1618
        %v1620 = vpop.f32.mrb[0].mxu0
        %v1621 = vadd.f32 %v1456, %v1620
        %v1622 = vpop.f32.mrb[0].mxu0
        %1623 = vmatprep.mubr.f32.mxu0 0.0
        %v1624 = vand.u32 %v501, 4294901760
        %1625 = vmatmul.mubr.f32.gmra.mrb[0].mxu0 %v1624
        %v1626 = vpop.f32.mrb[0].mxu0
        %v1627 = vadd.f32 %v1462, %v1626
        %v1628 = vpop.f32.mrb[0].mxu0
        %1629 = vmatprep.mubr.f32.mxu0 0.0
        %v1630 = vand.u32 %v504, 4294901760
        %1631 = vmatmul.mubr.f32.gmra.mrb[0].mxu0 %v1630
        %v1632 = vpop.f32.mrb[0].mxu0
        %v1633 = vadd.f32 %v1468, %v1632
        %v1634 = vpop.f32.mrb[0].mxu0
        %1635 = vdwg.mxu0
        %v1636 = vmax.f32 %v1543, 0.0
        %v1637 = vmax.f32 %v1549, 0.0
        %v1638 = vmax.f32 %v1555, 0.0
        %v1639 = vmax.f32 %v1561, 0.0
        %v1640 = vmax.f32 %v1567, 0.0
        %v1641 = vmax.f32 %v1573, 0.0
        %v1642 = vmax.f32 %v1579, 0.0
        %v1643 = vmax.f32 %v1585, 0.0
        %v1644 = vmax.f32 %v1591, 0.0
        %v1645 = vmax.f32 %v1597, 0.0
        %v1646 = vmax.f32 %v1603, 0.0
        %v1647 = vmax.f32 %v1609, 0.0
        %v1648 = vmax.f32 %v1615, 0.0
        %v1649 = vmax.f32 %v1621, 0.0
        %v1650 = vmax.f32 %v1627, 0.0
        %v1651 = vmax.f32 %v1633, 0.0
        %v1652 = vmin.f32 %v1636, 6.0
        %v1653 = vmin.f32 %v1637, 6.0
        %v1654 = vmin.f32 %v1638, 6.0
        %v1655 = vmin.f32 %v1639, 6.0
        %v1656 = vmin.f32 %v1640, 6.0
        %v1657 = vmin.f32 %v1641, 6.0
        %v1658 = vmin.f32 %v1642, 6.0
        %v1659 = vmin.f32 %v1643, 6.0
        %v1660 = vmin.f32 %v1644, 6.0
        %v1661 = vmin.f32 %v1645, 6.0
        %v1662 = vmin.f32 %v1646, 6.0
        %v1663 = vmin.f32 %v1647, 6.0
        %v1664 = vmin.f32 %v1648, 6.0
        %v1665 = vmin.f32 %v1649, 6.0
        %v1666 = vmin.f32 %v1650, 6.0
        %v1667 = vmin.f32 %v1651, 6.0
        %1684 = vrot.lane.b32.xlu0 %v1652, 8
        %v1685 = vpop.permute.xlu0 %1684
        %1686 = vrot.lane.b32.xlu0 %v1653, 8
        %v1687 = vpop.permute.xlu0 %1686
        %1688 = vrot.lane.b32.xlu0 %v1654, 8
        %v1689 = vpop.permute.xlu0 %1688
        %1690 = vrot.lane.b32.xlu0 %v1655, 8
        %v1691 = vpop.permute.xlu0 %1690
        %1692 = vrot.lane.b32.xlu0 %v1656, 8
        %v1693 = vpop.permute.xlu0 %1692
        %1694 = vrot.lane.b32.xlu0 %v1657, 8
        %v1695 = vpop.permute.xlu0 %1694
        %1696 = vrot.lane.b32.xlu0 %v1658, 8
        %v1697 = vpop.permute.xlu0 %1696
        %1698 = vrot.lane.b32.xlu0 %v1659, 8
        %v1699 = vpop.permute.xlu0 %1698
        %1700 = vrot.lane.b32.xlu0 %v1660, 8
        %v1701 = vpop.permute.xlu0 %1700
        %1702 = vrot.lane.b32.xlu0 %v1661, 8
        %v1703 = vpop.permute.xlu0 %1702
        %1704 = vrot.lane.b32.xlu0 %v1662, 8
        %v1705 = vpop.permute.xlu0 %1704
        %1706 = vrot.lane.b32.xlu0 %v1663, 8
        %v1707 = vpop.permute.xlu0 %1706
        %1708 = vrot.lane.b32.xlu0 %v1664, 8
        %v1709 = vpop.permute.xlu0 %1708
        %1710 = vrot.lane.b32.xlu0 %v1665, 8
        %v1711 = vpop.permute.xlu0 %1710
        %1712 = vrot.lane.b32.xlu0 %v1666, 8
        %v1713 = vpop.permute.xlu0 %1712
        %1714 = vrot.lane.b32.xlu0 %v1667, 8
        %v1715 = vpop.permute.xlu0 %1714
        %s1732 = scalar_lea.vmem [#allocation2], 16
        %vm1733 = vcmask 588864
        %1734 = vst.msk [vmem:[%s1732 + $0x1] sm:$0xff] %vm1733, %v1685
        %1735 = vst.msk [vmem:[%s1732 + $0x11] sm:$0xff] %vm1733, %v1687
        %1736 = vst.msk [vmem:[%s1732 + $0x21] sm:$0xff] %vm1733, %v1689
        %1737 = vst.msk [vmem:[%s1732 + $0x31] sm:$0xff] %vm1733, %v1691
        %1738 = vst.msk [vmem:[%s1732 + $0x41] sm:$0xff] %vm1733, %v1693
        %1739 = vst.msk [vmem:[%s1732 + $0x51] sm:$0xff] %vm1733, %v1695
        %1740 = vst.msk [vmem:[%s1732 + $0x61] sm:$0xff] %vm1733, %v1697
        %1741 = vst.msk [vmem:[%s1732 + $0x71] sm:$0xff] %vm1733, %v1699
        %1742 = vst.msk [vmem:[%s1732 + $0x81] sm:$0xff] %vm1733, %v1701
        %1743 = vst.msk [vmem:[%s1732 + $0x91] sm:$0xff] %vm1733, %v1703
        %1744 = vst.msk [vmem:[%s1732 + $0xa1] sm:$0xff] %vm1733, %v1705
        %1745 = vst.msk [vmem:[%s1732 + $0xb1] sm:$0xff] %vm1733, %v1707
        %1746 = vst.msk [vmem:[%s1732 + $0xc1] sm:$0xff] %vm1733, %v1709
        %1747 = vst.msk [vmem:[%s1732 + $0xd1] sm:$0xff] %vm1733, %v1711
        %1748 = vst.msk [vmem:[%s1732 + $0xe1] sm:$0xff] %vm1733, %v1713
        %1749 = vst.msk [vmem:[%s1732 + $0xf1] sm:$0xff] %vm1733, %v1715
        %1750 = vst.msk [vmem:[#allocation2 + $0x1] sm:$0xff] %vm1733, 0.0
        %s1751 = scalar_lea.vmem [#allocation2], 272
        %1752 = vst.msk [vmem:[%s1751 + $0x1] sm:$0xff] %vm1733, 0.0
        %v1753 = vld [vmem:[%s3] sm:$0xff]
        %v1754 = vld [vmem:[%s3 + $0x8] sm:$0xff]
        %v1755 = vld [vmem:[%s3 + $0x10] sm:$0xff]
        %v1756 = vld [vmem:[%s3 + $0x18] sm:$0x7]
        %v1757 = vld [vmem:[#allocation2] sm:$0xff]
        %v1758 = vld [vmem:[#allocation2 + $0x10] sm:$0xff]
        %v1759 = vld [vmem:[#allocation2 + $0x20] sm:$0xff]
        %v1760 = vld [vmem:[#allocation2 + $0x30] sm:$0xff]
        %v1761 = vld [vmem:[#allocation2 + $0x40] sm:$0xff]
        %v1762 = vld [vmem:[#allocation2 + $0x50] sm:$0xff]
        %v1763 = vld [vmem:[#allocation2 + $0x60] sm:$0xff]
        %v1764 = vld [vmem:[#allocation2 + $0x70] sm:$0xff]
        %v1765 = vld [vmem:[#allocation2 + $0x80] sm:$0xff]
        %v1766 = vld [vmem:[#allocation2 + $0x90] sm:$0xff]
        %v1767 = vld [vmem:[#allocation2 + $0xa0] sm:$0xff]
        %v1768 = vld [vmem:[#allocation2 + $0xb0] sm:$0xff]
        %v1769 = vld [vmem:[#allocation2 + $0xc0] sm:$0xff]
        %v1770 = vld [vmem:[#allocation2 + $0xd0] sm:$0xff]
        %v1771 = vld [vmem:[#allocation2 + $0xe0] sm:$0xff]
        %v1772 = vld [vmem:[#allocation2 + $0xf0] sm:$0xff]
        %v1773 = vlaneseq
        %v1774 = vshrl.u32 %v1773, 7
        %v1775 = vsub.s32 0, %v1774
        %v1776 = vrot.slane %v1753, %v1775
        %v1777 = vmul.f32 %v1757, %v1776
        %v1778 = vmul.f32 %v1758, %v1776
        %v1779 = vmul.f32 %v1759, %v1776
        %v1780 = vmul.f32 %v1760, %v1776
        %v1781 = vmul.f32 %v1761, %v1776
        %v1782 = vmul.f32 %v1762, %v1776
        %v1783 = vmul.f32 %v1763, %v1776
        %v1784 = vmul.f32 %v1764, %v1776
        %v1785 = vmul.f32 %v1765, %v1776
        %v1786 = vmul.f32 %v1766, %v1776
        %v1787 = vmul.f32 %v1767, %v1776
        %v1788 = vmul.f32 %v1768, %v1776
        %v1789 = vmul.f32 %v1769, %v1776
        %v1790 = vmul.f32 %v1770, %v1776
        %v1791 = vmul.f32 %v1771, %v1776
        %v1792 = vmul.f32 %v1772, %v1776
        %v1793 = vadd.f32 %v1777, 0.0
        %v1794 = vadd.f32 %v1778, 0.0
        %v1795 = vadd.f32 %v1779, 0.0
        %v1796 = vadd.f32 %v1780, 0.0
        %v1797 = vadd.f32 %v1781, 0.0
        %v1798 = vadd.f32 %v1782, 0.0
        %v1799 = vadd.f32 %v1783, 0.0
        %v1800 = vadd.f32 %v1784, 0.0
        %v1801 = vadd.f32 %v1785, 0.0
        %v1802 = vadd.f32 %v1786, 0.0
        %v1803 = vadd.f32 %v1787, 0.0
        %v1804 = vadd.f32 %v1788, 0.0
        %v1805 = vadd.f32 %v1789, 0.0
        %v1806 = vadd.f32 %v1790, 0.0
        %v1807 = vadd.f32 %v1791, 0.0
        %v1808 = vadd.f32 %v1792, 0.0
        %v1809 = vlaneseq
        %v1810 = vshrl.u32 %v1809, 7
        %v1811 = vsub.s32 1, %v1810
        %v1812 = vrot.slane %v1753, %v1811
        %1814 = vrot.lane.b32.xlu0 %v1812, 8
        %v1815 = vpop.permute.xlu0 %1814
        %v1817 = vmul.f32 %v1757, %v1815
        %v1818 = vmul.f32 %v1758, %v1815
        %v1819 = vmul.f32 %v1759, %v1815
        %v1820 = vmul.f32 %v1760, %v1815
        %v1821 = vmul.f32 %v1761, %v1815
        %v1822 = vmul.f32 %v1762, %v1815
        %v1823 = vmul.f32 %v1763, %v1815
        %v1824 = vmul.f32 %v1764, %v1815
        %v1825 = vmul.f32 %v1765, %v1815
        %v1826 = vmul.f32 %v1766, %v1815
        %v1827 = vmul.f32 %v1767, %v1815
        %v1828 = vmul.f32 %v1768, %v1815
        %v1829 = vmul.f32 %v1769, %v1815
        %v1830 = vmul.f32 %v1770, %v1815
        %v1831 = vmul.f32 %v1771, %v1815
        %v1832 = vmul.f32 %v1772, %v1815
        %1849 = vrot.lane.b32.xlu0 %v1817, 120
        %v1850 = vpop.permute.xlu0 %1849
        %1851 = vrot.lane.b32.xlu0 %v1818, 120
        %v1852 = vpop.permute.xlu0 %1851
        %1853 = vrot.lane.b32.xlu0 %v1819, 120
        %v1854 = vpop.permute.xlu0 %1853
        %1855 = vrot.lane.b32.xlu0 %v1820, 120
        %v1856 = vpop.permute.xlu0 %1855
        %1857 = vrot.lane.b32.xlu0 %v1821, 120
        %v1858 = vpop.permute.xlu0 %1857
        %1859 = vrot.lane.b32.xlu0 %v1822, 120
        %v1860 = vpop.permute.xlu0 %1859
        %1861 = vrot.lane.b32.xlu0 %v1823, 120
        %v1862 = vpop.permute.xlu0 %1861
        %1863 = vrot.lane.b32.xlu0 %v1824, 120
        %v1864 = vpop.permute.xlu0 %1863
        %1865 = vrot.lane.b32.xlu0 %v1825, 120
        %v1866 = vpop.permute.xlu0 %1865
        %1867 = vrot.lane.b32.xlu0 %v1826, 120
        %v1868 = vpop.permute.xlu0 %1867
        %1869 = vrot.lane.b32.xlu0 %v1827, 120
        %v1870 = vpop.permute.xlu0 %1869
        %1871 = vrot.lane.b32.xlu0 %v1828, 120
        %v1872 = vpop.permute.xlu0 %1871
        %1873 = vrot.lane.b32.xlu0 %v1829, 120
        %v1874 = vpop.permute.xlu0 %1873
        %1875 = vrot.lane.b32.xlu0 %v1830, 120
        %v1876 = vpop.permute.xlu0 %1875
        %1877 = vrot.lane.b32.xlu0 %v1831, 120
        %v1878 = vpop.permute.xlu0 %1877
        %1879 = vrot.lane.b32.xlu0 %v1832, 120
        %v1880 = vpop.permute.xlu0 %1879
        %v1897 = vadd.f32 %v1793, %v1850
        %v1898 = vadd.f32 %v1794, %v1852
        %v1899 = vadd.f32 %v1795, %v1854
        %v1900 = vadd.f32 %v1796, %v1856
        %v1901 = vadd.f32 %v1797, %v1858
        %v1902 = vadd.f32 %v1798, %v1860
        %v1903 = vadd.f32 %v1799, %v1862
        %v1904 = vadd.f32 %v1800, %v1864
        %v1905 = vadd.f32 %v1801, %v1866
        %v1906 = vadd.f32 %v1802, %v1868
        %v1907 = vadd.f32 %v1803, %v1870
        %v1908 = vadd.f32 %v1804, %v1872
        %v1909 = vadd.f32 %v1805, %v1874
        %v1910 = vadd.f32 %v1806, %v1876
        %v1911 = vadd.f32 %v1807, %v1878
        %v1912 = vadd.f32 %v1808, %v1880
        %v1913 = vlaneseq
        %v1914 = vshrl.u32 %v1913, 7
        %v1915 = vsub.s32 2, %v1914
        %v1916 = vrot.slane %v1753, %v1915
        %1918 = vrot.lane.b32.xlu0 %v1916, 16
        %v1919 = vpop.permute.xlu0 %1918
        %v1921 = vmul.f32 %v1757, %v1919
        %v1922 = vmul.f32 %v1758, %v1919
        %v1923 = vmul.f32 %v1759, %v1919
        %v1924 = vmul.f32 %v1760, %v1919
        %v1925 = vmul.f32 %v1761, %v1919
        %v1926 = vmul.f32 %v1762, %v1919
        %v1927 = vmul.f32 %v1763, %v1919
        %v1928 = vmul.f32 %v1764, %v1919
        %v1929 = vmul.f32 %v1765, %v1919
        %v1930 = vmul.f32 %v1766, %v1919
        %v1931 = vmul.f32 %v1767, %v1919
        %v1932 = vmul.f32 %v1768, %v1919
        %v1933 = vmul.f32 %v1769, %v1919
        %v1934 = vmul.f32 %v1770, %v1919
        %v1935 = vmul.f32 %v1771, %v1919
        %v1936 = vmul.f32 %v1772, %v1919
        %1953 = vrot.lane.b32.xlu0 %v1921, 112
        %v1954 = vpop.permute.xlu0 %1953
        %1955 = vrot.lane.b32.xlu0 %v1922, 112
        %v1956 = vpop.permute.xlu0 %1955
        %1957 = vrot.lane.b32.xlu0 %v1923, 112
        %v1958 = vpop.permute.xlu0 %1957
        %1959 = vrot.lane.b32.xlu0 %v1924, 112
        %v1960 = vpop.permute.xlu0 %1959
        %1961 = vrot.lane.b32.xlu0 %v1925, 112
        %v1962 = vpop.permute.xlu0 %1961
        %1963 = vrot.lane.b32.xlu0 %v1926, 112
        %v1964 = vpop.permute.xlu0 %1963
        %1965 = vrot.lane.b32.xlu0 %v1927, 112
        %v1966 = vpop.permute.xlu0 %1965
        %1967 = vrot.lane.b32.xlu0 %v1928, 112
        %v1968 = vpop.permute.xlu0 %1967
        %1969 = vrot.lane.b32.xlu0 %v1929, 112
        %v1970 = vpop.permute.xlu0 %1969
        %1971 = vrot.lane.b32.xlu0 %v1930, 112
        %v1972 = vpop.permute.xlu0 %1971
        %1973 = vrot.lane.b32.xlu0 %v1931, 112
        %v1974 = vpop.permute.xlu0 %1973
        %1975 = vrot.lane.b32.xlu0 %v1932, 112
        %v1976 = vpop.permute.xlu0 %1975
        %1977 = vrot.lane.b32.xlu0 %v1933, 112
        %v1978 = vpop.permute.xlu0 %1977
        %1979 = vrot.lane.b32.xlu0 %v1934, 112
        %v1980 = vpop.permute.xlu0 %1979
        %1981 = vrot.lane.b32.xlu0 %v1935, 112
        %v1982 = vpop.permute.xlu0 %1981
        %1983 = vrot.lane.b32.xlu0 %v1936, 112
        %v1984 = vpop.permute.xlu0 %1983
        %v2001 = vadd.f32 %v1897, %v1954
        %v2002 = vadd.f32 %v1898, %v1956
        %v2003 = vadd.f32 %v1899, %v1958
        %v2004 = vadd.f32 %v1900, %v1960
        %v2005 = vadd.f32 %v1901, %v1962
        %v2006 = vadd.f32 %v1902, %v1964
        %v2007 = vadd.f32 %v1903, %v1966
        %v2008 = vadd.f32 %v1904, %v1968
        %v2009 = vadd.f32 %v1905, %v1970
        %v2010 = vadd.f32 %v1906, %v1972
        %v2011 = vadd.f32 %v1907, %v1974
        %v2012 = vadd.f32 %v1908, %v1976
        %v2013 = vadd.f32 %v1909, %v1978
        %v2014 = vadd.f32 %v1910, %v1980
        %v2015 = vadd.f32 %v1911, %v1982
        %v2016 = vadd.f32 %v1912, %v1984
        %v2017 = vld [vmem:[#allocation2 + $0x1] sm:$0xff]
        %v2018 = vld [vmem:[#allocation2 + $0x11] sm:$0xff]
        %v2019 = vld [vmem:[#allocation2 + $0x21] sm:$0xff]
        %v2020 = vld [vmem:[#allocation2 + $0x31] sm:$0xff]
        %v2021 = vld [vmem:[#allocation2 + $0x41] sm:$0xff]
        %v2022 = vld [vmem:[#allocation2 + $0x51] sm:$0xff]
        %v2023 = vld [vmem:[#allocation2 + $0x61] sm:$0xff]
        %v2024 = vld [vmem:[#allocation2 + $0x71] sm:$0xff]
        %v2025 = vld [vmem:[#allocation2 + $0x81] sm:$0xff]
        %v2026 = vld [vmem:[#allocation2 + $0x91] sm:$0xff]
        %v2027 = vld [vmem:[#allocation2 + $0xa1] sm:$0xff]
        %v2028 = vld [vmem:[#allocation2 + $0xb1] sm:$0xff]
        %v2029 = vld [vmem:[#allocation2 + $0xc1] sm:$0xff]
        %v2030 = vld [vmem:[#allocation2 + $0xd1] sm:$0xff]
        %v2031 = vld [vmem:[#allocation2 + $0xe1] sm:$0xff]
        %v2032 = vld [vmem:[#allocation2 + $0xf1] sm:$0xff]
        %v2033 = vlaneseq
        %v2034 = vshrl.u32 %v2033, 7
        %v2035 = vsub.s32 3, %v2034
        %v2036 = vrot.slane %v1753, %v2035
        %v2037 = vmul.f32 %v2017, %v2036
        %v2038 = vmul.f32 %v2018, %v2036
        %v2039 = vmul.f32 %v2019, %v2036
        %v2040 = vmul.f32 %v2020, %v2036
        %v2041 = vmul.f32 %v2021, %v2036
        %v2042 = vmul.f32 %v2022, %v2036
        %v2043 = vmul.f32 %v2023, %v2036
        %v2044 = vmul.f32 %v2024, %v2036
        %v2045 = vmul.f32 %v2025, %v2036
        %v2046 = vmul.f32 %v2026, %v2036
        %v2047 = vmul.f32 %v2027, %v2036
        %v2048 = vmul.f32 %v2028, %v2036
        %v2049 = vmul.f32 %v2029, %v2036
        %v2050 = vmul.f32 %v2030, %v2036
        %v2051 = vmul.f32 %v2031, %v2036
        %v2052 = vmul.f32 %v2032, %v2036
        %v2053 = vadd.f32 %v2001, %v2037
        %v2054 = vadd.f32 %v2002, %v2038
        %v2055 = vadd.f32 %v2003, %v2039
        %v2056 = vadd.f32 %v2004, %v2040
        %v2057 = vadd.f32 %v2005, %v2041
        %v2058 = vadd.f32 %v2006, %v2042
        %v2059 = vadd.f32 %v2007, %v2043
        %v2060 = vadd.f32 %v2008, %v2044
        %v2061 = vadd.f32 %v2009, %v2045
        %v2062 = vadd.f32 %v2010, %v2046
        %v2063 = vadd.f32 %v2011, %v2047
        %v2064 = vadd.f32 %v2012, %v2048
        %v2065 = vadd.f32 %v2013, %v2049
        %v2066 = vadd.f32 %v2014, %v2050
        %v2067 = vadd.f32 %v2015, %v2051
        %v2068 = vadd.f32 %v2016, %v2052
        %v2069 = vlaneseq
        %v2070 = vshrl.u32 %v2069, 7
        %v2071 = vsub.s32 4, %v2070
        %v2072 = vrot.slane %v1753, %v2071
        %2074 = vrot.lane.b32.xlu0 %v2072, 8
        %v2075 = vpop.permute.xlu0 %2074
        %v2077 = vmul.f32 %v2017, %v2075
        %v2078 = vmul.f32 %v2018, %v2075
        %v2079 = vmul.f32 %v2019, %v2075
        %v2080 = vmul.f32 %v2020, %v2075
        %v2081 = vmul.f32 %v2021, %v2075
        %v2082 = vmul.f32 %v2022, %v2075
        %v2083 = vmul.f32 %v2023, %v2075
        %v2084 = vmul.f32 %v2024, %v2075
        %v2085 = vmul.f32 %v2025, %v2075
        %v2086 = vmul.f32 %v2026, %v2075
        %v2087 = vmul.f32 %v2027, %v2075
        %v2088 = vmul.f32 %v2028, %v2075
        %v2089 = vmul.f32 %v2029, %v2075
        %v2090 = vmul.f32 %v2030, %v2075
        %v2091 = vmul.f32 %v2031, %v2075
        %v2092 = vmul.f32 %v2032, %v2075
        %2109 = vrot.lane.b32.xlu0 %v2077, 120
        %v2110 = vpop.permute.xlu0 %2109
        %2111 = vrot.lane.b32.xlu0 %v2078, 120
        %v2112 = vpop.permute.xlu0 %2111
        %2113 = vrot.lane.b32.xlu0 %v2079, 120
        %v2114 = vpop.permute.xlu0 %2113
        %2115 = vrot.lane.b32.xlu0 %v2080, 120
        %v2116 = vpop.permute.xlu0 %2115
        %2117 = vrot.lane.b32.xlu0 %v2081, 120
        %v2118 = vpop.permute.xlu0 %2117
        %2119 = vrot.lane.b32.xlu0 %v2082, 120
        %v2120 = vpop.permute.xlu0 %2119
        %2121 = vrot.lane.b32.xlu0 %v2083, 120
        %v2122 = vpop.permute.xlu0 %2121
        %2123 = vrot.lane.b32.xlu0 %v2084, 120
        %v2124 = vpop.permute.xlu0 %2123
        %2125 = vrot.lane.b32.xlu0 %v2085, 120
        %v2126 = vpop.permute.xlu0 %2125
        %2127 = vrot.lane.b32.xlu0 %v2086, 120
        %v2128 = vpop.permute.xlu0 %2127
        %2129 = vrot.lane.b32.xlu0 %v2087, 120
        %v2130 = vpop.permute.xlu0 %2129
        %2131 = vrot.lane.b32.xlu0 %v2088, 120
        %v2132 = vpop.permute.xlu0 %2131
        %2133 = vrot.lane.b32.xlu0 %v2089, 120
        %v2134 = vpop.permute.xlu0 %2133
        %2135 = vrot.lane.b32.xlu0 %v2090, 120
        %v2136 = vpop.permute.xlu0 %2135
        %2137 = vrot.lane.b32.xlu0 %v2091, 120
        %v2138 = vpop.permute.xlu0 %2137
        %2139 = vrot.lane.b32.xlu0 %v2092, 120
        %v2140 = vpop.permute.xlu0 %2139
        %v2157 = vadd.f32 %v2053, %v2110
        %v2158 = vadd.f32 %v2054, %v2112
        %v2159 = vadd.f32 %v2055, %v2114
        %v2160 = vadd.f32 %v2056, %v2116
        %v2161 = vadd.f32 %v2057, %v2118
        %v2162 = vadd.f32 %v2058, %v2120
        %v2163 = vadd.f32 %v2059, %v2122
        %v2164 = vadd.f32 %v2060, %v2124
        %v2165 = vadd.f32 %v2061, %v2126
        %v2166 = vadd.f32 %v2062, %v2128
        %v2167 = vadd.f32 %v2063, %v2130
        %v2168 = vadd.f32 %v2064, %v2132
        %v2169 = vadd.f32 %v2065, %v2134
        %v2170 = vadd.f32 %v2066, %v2136
        %v2171 = vadd.f32 %v2067, %v2138
        %v2172 = vadd.f32 %v2068, %v2140
        %v2173 = vlaneseq
        %v2174 = vshrl.u32 %v2173, 7
        %v2175 = vsub.s32 5, %v2174
        %v2176 = vrot.slane %v1753, %v2175
        %2178 = vrot.lane.b32.xlu0 %v2176, 16
        %v2179 = vpop.permute.xlu0 %2178
        %v2181 = vmul.f32 %v2017, %v2179
        %v2182 = vmul.f32 %v2018, %v2179
        %v2183 = vmul.f32 %v2019, %v2179
        %v2184 = vmul.f32 %v2020, %v2179
        %v2185 = vmul.f32 %v2021, %v2179
        %v2186 = vmul.f32 %v2022, %v2179
        %v2187 = vmul.f32 %v2023, %v2179
        %v2188 = vmul.f32 %v2024, %v2179
        %v2189 = vmul.f32 %v2025, %v2179
        %v2190 = vmul.f32 %v2026, %v2179
        %v2191 = vmul.f32 %v2027, %v2179
        %v2192 = vmul.f32 %v2028, %v2179
        %v2193 = vmul.f32 %v2029, %v2179
        %v2194 = vmul.f32 %v2030, %v2179
        %v2195 = vmul.f32 %v2031, %v2179
        %v2196 = vmul.f32 %v2032, %v2179
        %2213 = vrot.lane.b32.xlu0 %v2181, 112
        %v2214 = vpop.permute.xlu0 %2213
        %2215 = vrot.lane.b32.xlu0 %v2182, 112
        %v2216 = vpop.permute.xlu0 %2215
        %2217 = vrot.lane.b32.xlu0 %v2183, 112
        %v2218 = vpop.permute.xlu0 %2217
        %2219 = vrot.lane.b32.xlu0 %v2184, 112
        %v2220 = vpop.permute.xlu0 %2219
        %2221 = vrot.lane.b32.xlu0 %v2185, 112
        %v2222 = vpop.permute.xlu0 %2221
        %2223 = vrot.lane.b32.xlu0 %v2186, 112
        %v2224 = vpop.permute.xlu0 %2223
        %2225 = vrot.lane.b32.xlu0 %v2187, 112
        %v2226 = vpop.permute.xlu0 %2225
        %2227 = vrot.lane.b32.xlu0 %v2188, 112
        %v2228 = vpop.permute.xlu0 %2227
        %2229 = vrot.lane.b32.xlu0 %v2189, 112
        %v2230 = vpop.permute.xlu0 %2229
        %2231 = vrot.lane.b32.xlu0 %v2190, 112
        %v2232 = vpop.permute.xlu0 %2231
        %2233 = vrot.lane.b32.xlu0 %v2191, 112
        %v2234 = vpop.permute.xlu0 %2233
        %2235 = vrot.lane.b32.xlu0 %v2192, 112
        %v2236 = vpop.permute.xlu0 %2235
        %2237 = vrot.lane.b32.xlu0 %v2193, 112
        %v2238 = vpop.permute.xlu0 %2237
        %2239 = vrot.lane.b32.xlu0 %v2194, 112
        %v2240 = vpop.permute.xlu0 %2239
        %2241 = vrot.lane.b32.xlu0 %v2195, 112
        %v2242 = vpop.permute.xlu0 %2241
        %2243 = vrot.lane.b32.xlu0 %v2196, 112
        %v2244 = vpop.permute.xlu0 %2243
        %v2261 = vadd.f32 %v2157, %v2214
        %v2262 = vadd.f32 %v2158, %v2216
        %v2263 = vadd.f32 %v2159, %v2218
        %v2264 = vadd.f32 %v2160, %v2220
        %v2265 = vadd.f32 %v2161, %v2222
        %v2266 = vadd.f32 %v2162, %v2224
        %v2267 = vadd.f32 %v2163, %v2226
        %v2268 = vadd.f32 %v2164, %v2228
        %v2269 = vadd.f32 %v2165, %v2230
        %v2270 = vadd.f32 %v2166, %v2232
        %v2271 = vadd.f32 %v2167, %v2234
        %v2272 = vadd.f32 %v2168, %v2236
        %v2273 = vadd.f32 %v2169, %v2238
        %v2274 = vadd.f32 %v2170, %v2240
        %v2275 = vadd.f32 %v2171, %v2242
        %v2276 = vadd.f32 %v2172, %v2244
        %v2277 = vld [vmem:[#allocation2 + $0x2] sm:$0xff]
        %v2278 = vld [vmem:[#allocation2 + $0x12] sm:$0xff]
        %v2279 = vld [vmem:[#allocation2 + $0x22] sm:$0xff]
        %v2280 = vld [vmem:[#allocation2 + $0x32] sm:$0xff]
        %v2281 = vld [vmem:[#allocation2 + $0x42] sm:$0xff]
        %v2282 = vld [vmem:[#allocation2 + $0x52] sm:$0xff]
        %v2283 = vld [vmem:[#allocation2 + $0x62] sm:$0xff]
        %v2284 = vld [vmem:[#allocation2 + $0x72] sm:$0xff]
        %v2285 = vld [vmem:[#allocation2 + $0x82] sm:$0xff]
        %v2286 = vld [vmem:[#allocation2 + $0x92] sm:$0xff]
        %v2287 = vld [vmem:[#allocation2 + $0xa2] sm:$0xff]
        %v2288 = vld [vmem:[#allocation2 + $0xb2] sm:$0xff]
        %v2289 = vld [vmem:[#allocation2 + $0xc2] sm:$0xff]
        %v2290 = vld [vmem:[#allocation2 + $0xd2] sm:$0xff]
        %v2291 = vld [vmem:[#allocation2 + $0xe2] sm:$0xff]
        %v2292 = vld [vmem:[#allocation2 + $0xf2] sm:$0xff]
        %v2293 = vlaneseq
        %v2294 = vshrl.u32 %v2293, 7
        %v2295 = vsub.s32 6, %v2294
        %v2296 = vrot.slane %v1753, %v2295
        %v2297 = vmul.f32 %v2277, %v2296
        %v2298 = vmul.f32 %v2278, %v2296
        %v2299 = vmul.f32 %v2279, %v2296
        %v2300 = vmul.f32 %v2280, %v2296
        %v2301 = vmul.f32 %v2281, %v2296
        %v2302 = vmul.f32 %v2282, %v2296
        %v2303 = vmul.f32 %v2283, %v2296
        %v2304 = vmul.f32 %v2284, %v2296
        %v2305 = vmul.f32 %v2285, %v2296
        %v2306 = vmul.f32 %v2286, %v2296
        %v2307 = vmul.f32 %v2287, %v2296
        %v2308 = vmul.f32 %v2288, %v2296
        %v2309 = vmul.f32 %v2289, %v2296
        %v2310 = vmul.f32 %v2290, %v2296
        %v2311 = vmul.f32 %v2291, %v2296
        %v2312 = vmul.f32 %v2292, %v2296
        %v2313 = vadd.f32 %v2261, %v2297
        %v2314 = vadd.f32 %v2262, %v2298
        %v2315 = vadd.f32 %v2263, %v2299
        %v2316 = vadd.f32 %v2264, %v2300
        %v2317 = vadd.f32 %v2265, %v2301
        %v2318 = vadd.f32 %v2266, %v2302
        %v2319 = vadd.f32 %v2267, %v2303
        %v2320 = vadd.f32 %v2268, %v2304
        %v2321 = vadd.f32 %v2269, %v2305
        %v2322 = vadd.f32 %v2270, %v2306
        %v2323 = vadd.f32 %v2271, %v2307
        %v2324 = vadd.f32 %v2272, %v2308
        %v2325 = vadd.f32 %v2273, %v2309
        %v2326 = vadd.f32 %v2274, %v2310
        %v2327 = vadd.f32 %v2275, %v2311
        %v2328 = vadd.f32 %v2276, %v2312
        %v2329 = vlaneseq
        %v2330 = vshrl.u32 %v2329, 7
        %v2331 = vsub.s32 7, %v2330
        %v2332 = vrot.slane %v1753, %v2331
        %2334 = vrot.lane.b32.xlu0 %v2332, 8
        %v2335 = vpop.permute.xlu0 %2334
        %v2337 = vmul.f32 %v2277, %v2335
        %v2338 = vmul.f32 %v2278, %v2335
        %v2339 = vmul.f32 %v2279, %v2335
        %v2340 = vmul.f32 %v2280, %v2335
        %v2341 = vmul.f32 %v2281, %v2335
        %v2342 = vmul.f32 %v2282, %v2335
        %v2343 = vmul.f32 %v2283, %v2335
        %v2344 = vmul.f32 %v2284, %v2335
        %v2345 = vmul.f32 %v2285, %v2335
        %v2346 = vmul.f32 %v2286, %v2335
        %v2347 = vmul.f32 %v2287, %v2335
        %v2348 = vmul.f32 %v2288, %v2335
        %v2349 = vmul.f32 %v2289, %v2335
        %v2350 = vmul.f32 %v2290, %v2335
        %v2351 = vmul.f32 %v2291, %v2335
        %v2352 = vmul.f32 %v2292, %v2335
        %2369 = vrot.lane.b32.xlu0 %v2337, 120
        %v2370 = vpop.permute.xlu0 %2369
        %2371 = vrot.lane.b32.xlu0 %v2338, 120
        %v2372 = vpop.permute.xlu0 %2371
        %2373 = vrot.lane.b32.xlu0 %v2339, 120
        %v2374 = vpop.permute.xlu0 %2373
        %2375 = vrot.lane.b32.xlu0 %v2340, 120
        %v2376 = vpop.permute.xlu0 %2375
        %2377 = vrot.lane.b32.xlu0 %v2341, 120
        %v2378 = vpop.permute.xlu0 %2377
        %2379 = vrot.lane.b32.xlu0 %v2342, 120
        %v2380 = vpop.permute.xlu0 %2379
        %2381 = vrot.lane.b32.xlu0 %v2343, 120
        %v2382 = vpop.permute.xlu0 %2381
        %2383 = vrot.lane.b32.xlu0 %v2344, 120
        %v2384 = vpop.permute.xlu0 %2383
        %2385 = vrot.lane.b32.xlu0 %v2345, 120
        %v2386 = vpop.permute.xlu0 %2385
        %2387 = vrot.lane.b32.xlu0 %v2346, 120
        %v2388 = vpop.permute.xlu0 %2387
        %2389 = vrot.lane.b32.xlu0 %v2347, 120
        %v2390 = vpop.permute.xlu0 %2389
        %2391 = vrot.lane.b32.xlu0 %v2348, 120
        %v2392 = vpop.permute.xlu0 %2391
        %2393 = vrot.lane.b32.xlu0 %v2349, 120
        %v2394 = vpop.permute.xlu0 %2393
        %2395 = vrot.lane.b32.xlu0 %v2350, 120
        %v2396 = vpop.permute.xlu0 %2395
        %2397 = vrot.lane.b32.xlu0 %v2351, 120
        %v2398 = vpop.permute.xlu0 %2397
        %2399 = vrot.lane.b32.xlu0 %v2352, 120
        %v2400 = vpop.permute.xlu0 %2399
        %v2417 = vadd.f32 %v2313, %v2370
        %v2418 = vadd.f32 %v2314, %v2372
        %v2419 = vadd.f32 %v2315, %v2374
        %v2420 = vadd.f32 %v2316, %v2376
        %v2421 = vadd.f32 %v2317, %v2378
        %v2422 = vadd.f32 %v2318, %v2380
        %v2423 = vadd.f32 %v2319, %v2382
        %v2424 = vadd.f32 %v2320, %v2384
        %v2425 = vadd.f32 %v2321, %v2386
        %v2426 = vadd.f32 %v2322, %v2388
        %v2427 = vadd.f32 %v2323, %v2390
        %v2428 = vadd.f32 %v2324, %v2392
        %v2429 = vadd.f32 %v2325, %v2394
        %v2430 = vadd.f32 %v2326, %v2396
        %v2431 = vadd.f32 %v2327, %v2398
        %v2432 = vadd.f32 %v2328, %v2400
        %v2433 = vlaneseq
        %v2434 = vshrl.u32 %v2433, 7
        %v2435 = vsub.s32 0, %v2434
        %v2436 = vrot.slane %v1754, %v2435
        %2438 = vrot.lane.b32.xlu0 %v2436, 16
        %v2439 = vpop.permute.xlu0 %2438
        %v2441 = vmul.f32 %v2277, %v2439
        %v2442 = vmul.f32 %v2278, %v2439
        %v2443 = vmul.f32 %v2279, %v2439
        %v2444 = vmul.f32 %v2280, %v2439
        %v2445 = vmul.f32 %v2281, %v2439
        %v2446 = vmul.f32 %v2282, %v2439
        %v2447 = vmul.f32 %v2283, %v2439
        %v2448 = vmul.f32 %v2284, %v2439
        %v2449 = vmul.f32 %v2285, %v2439
        %v2450 = vmul.f32 %v2286, %v2439
        %v2451 = vmul.f32 %v2287, %v2439
        %v2452 = vmul.f32 %v2288, %v2439
        %v2453 = vmul.f32 %v2289, %v2439
        %v2454 = vmul.f32 %v2290, %v2439
        %v2455 = vmul.f32 %v2291, %v2439
        %v2456 = vmul.f32 %v2292, %v2439
        %2473 = vrot.lane.b32.xlu0 %v2441, 112
        %v2474 = vpop.permute.xlu0 %2473
        %2475 = vrot.lane.b32.xlu0 %v2442, 112
        %v2476 = vpop.permute.xlu0 %2475
        %2477 = vrot.lane.b32.xlu0 %v2443, 112
        %v2478 = vpop.permute.xlu0 %2477
        %2479 = vrot.lane.b32.xlu0 %v2444, 112
        %v2480 = vpop.permute.xlu0 %2479
        %2481 = vrot.lane.b32.xlu0 %v2445, 112
        %v2482 = vpop.permute.xlu0 %2481
        %2483 = vrot.lane.b32.xlu0 %v2446, 112
        %v2484 = vpop.permute.xlu0 %2483
        %2485 = vrot.lane.b32.xlu0 %v2447, 112
        %v2486 = vpop.permute.xlu0 %2485
        %2487 = vrot.lane.b32.xlu0 %v2448, 112
        %v2488 = vpop.permute.xlu0 %2487
        %2489 = vrot.lane.b32.xlu0 %v2449, 112
        %v2490 = vpop.permute.xlu0 %2489
        %2491 = vrot.lane.b32.xlu0 %v2450, 112
        %v2492 = vpop.permute.xlu0 %2491
        %2493 = vrot.lane.b32.xlu0 %v2451, 112
        %v2494 = vpop.permute.xlu0 %2493
        %2495 = vrot.lane.b32.xlu0 %v2452, 112
        %v2496 = vpop.permute.xlu0 %2495
        %2497 = vrot.lane.b32.xlu0 %v2453, 112
        %v2498 = vpop.permute.xlu0 %2497
        %2499 = vrot.lane.b32.xlu0 %v2454, 112
        %v2500 = vpop.permute.xlu0 %2499
        %2501 = vrot.lane.b32.xlu0 %v2455, 112
        %v2502 = vpop.permute.xlu0 %2501
        %2503 = vrot.lane.b32.xlu0 %v2456, 112
        %v2504 = vpop.permute.xlu0 %2503
        %v2521 = vadd.f32 %v2417, %v2474
        %v2522 = vadd.f32 %v2418, %v2476
        %v2523 = vadd.f32 %v2419, %v2478
        %v2524 = vadd.f32 %v2420, %v2480
        %v2525 = vadd.f32 %v2421, %v2482
        %v2526 = vadd.f32 %v2422, %v2484
        %v2527 = vadd.f32 %v2423, %v2486
        %v2528 = vadd.f32 %v2424, %v2488
        %v2529 = vadd.f32 %v2425, %v2490
        %v2530 = vadd.f32 %v2426, %v2492
        %v2531 = vadd.f32 %v2427, %v2494
        %v2532 = vadd.f32 %v2428, %v2496
        %v2533 = vadd.f32 %v2429, %v2498
        %v2534 = vadd.f32 %v2430, %v2500
        %v2535 = vadd.f32 %v2431, %v2502
        %v2536 = vadd.f32 %v2432, %v2504
        %v2537 = vld [vmem:[%s1732] sm:$0xff]
        %v2538 = vld [vmem:[%s1732 + $0x10] sm:$0xff]
        %v2539 = vld [vmem:[%s1732 + $0x20] sm:$0xff]
        %v2540 = vld [vmem:[%s1732 + $0x30] sm:$0xff]
        %v2541 = vld [vmem:[%s1732 + $0x40] sm:$0xff]
        %v2542 = vld [vmem:[%s1732 + $0x50] sm:$0xff]
        %v2543 = vld [vmem:[%s1732 + $0x60] sm:$0xff]
        %v2544 = vld [vmem:[%s1732 + $0x70] sm:$0xff]
        %v2545 = vld [vmem:[%s1732 + $0x80] sm:$0xff]
        %v2546 = vld [vmem:[%s1732 + $0x90] sm:$0xff]
        %v2547 = vld [vmem:[%s1732 + $0xa0] sm:$0xff]
        %v2548 = vld [vmem:[%s1732 + $0xb0] sm:$0xff]
        %v2549 = vld [vmem:[%s1732 + $0xc0] sm:$0xff]
        %v2550 = vld [vmem:[%s1732 + $0xd0] sm:$0xff]
        %v2551 = vld [vmem:[%s1732 + $0xe0] sm:$0xff]
        %v2552 = vld [vmem:[%s1732 + $0xf0] sm:$0xff]
        %v2553 = vlaneseq
        %v2554 = vshrl.u32 %v2553, 7
        %v2555 = vsub.s32 1, %v2554
        %v2556 = vrot.slane %v1754, %v2555
        %v2557 = vmul.f32 %v2537, %v2556
        %v2558 = vmul.f32 %v2538, %v2556
        %v2559 = vmul.f32 %v2539, %v2556
        %v2560 = vmul.f32 %v2540, %v2556
        %v2561 = vmul.f32 %v2541, %v2556
        %v2562 = vmul.f32 %v2542, %v2556
        %v2563 = vmul.f32 %v2543, %v2556
        %v2564 = vmul.f32 %v2544, %v2556
        %v2565 = vmul.f32 %v2545, %v2556
        %v2566 = vmul.f32 %v2546, %v2556
        %v2567 = vmul.f32 %v2547, %v2556
        %v2568 = vmul.f32 %v2548, %v2556
        %v2569 = vmul.f32 %v2549, %v2556
        %v2570 = vmul.f32 %v2550, %v2556
        %v2571 = vmul.f32 %v2551, %v2556
        %v2572 = vmul.f32 %v2552, %v2556
        %v2573 = vadd.f32 %v2521, %v2557
        %v2574 = vadd.f32 %v2522, %v2558
        %v2575 = vadd.f32 %v2523, %v2559
        %v2576 = vadd.f32 %v2524, %v2560
        %v2577 = vadd.f32 %v2525, %v2561
        %v2578 = vadd.f32 %v2526, %v2562
        %v2579 = vadd.f32 %v2527, %v2563
        %v2580 = vadd.f32 %v2528, %v2564
        %v2581 = vadd.f32 %v2529, %v2565
        %v2582 = vadd.f32 %v2530, %v2566
        %v2583 = vadd.f32 %v2531, %v2567
        %v2584 = vadd.f32 %v2532, %v2568
        %v2585 = vadd.f32 %v2533, %v2569
        %v2586 = vadd.f32 %v2534, %v2570
        %v2587 = vadd.f32 %v2535, %v2571
        %v2588 = vadd.f32 %v2536, %v2572
        %v2589 = vlaneseq
        %v2590 = vshrl.u32 %v2589, 7
        %v2591 = vsub.s32 2, %v2590
        %v2592 = vrot.slane %v1754, %v2591
        %2594 = vrot.lane.b32.xlu0 %v2592, 8
        %v2595 = vpop.permute.xlu0 %2594
        %v2597 = vmul.f32 %v2537, %v2595
        %v2598 = vmul.f32 %v2538, %v2595
        %v2599 = vmul.f32 %v2539, %v2595
        %v2600 = vmul.f32 %v2540, %v2595
        %v2601 = vmul.f32 %v2541, %v2595
        %v2602 = vmul.f32 %v2542, %v2595
        %v2603 = vmul.f32 %v2543, %v2595
        %v2604 = vmul.f32 %v2544, %v2595
        %v2605 = vmul.f32 %v2545, %v2595
        %v2606 = vmul.f32 %v2546, %v2595
        %v2607 = vmul.f32 %v2547, %v2595
        %v2608 = vmul.f32 %v2548, %v2595
        %v2609 = vmul.f32 %v2549, %v2595
        %v2610 = vmul.f32 %v2550, %v2595
        %v2611 = vmul.f32 %v2551, %v2595
        %v2612 = vmul.f32 %v2552, %v2595
        %2629 = vrot.lane.b32.xlu0 %v2597, 120
        %v2630 = vpop.permute.xlu0 %2629
        %2631 = vrot.lane.b32.xlu0 %v2598, 120
        %v2632 = vpop.permute.xlu0 %2631
        %2633 = vrot.lane.b32.xlu0 %v2599, 120
        %v2634 = vpop.permute.xlu0 %2633
        %2635 = vrot.lane.b32.xlu0 %v2600, 120
        %v2636 = vpop.permute.xlu0 %2635
        %2637 = vrot.lane.b32.xlu0 %v2601, 120
        %v2638 = vpop.permute.xlu0 %2637
        %2639 = vrot.lane.b32.xlu0 %v2602, 120
        %v2640 = vpop.permute.xlu0 %2639
        %2641 = vrot.lane.b32.xlu0 %v2603, 120
        %v2642 = vpop.permute.xlu0 %2641
        %2643 = vrot.lane.b32.xlu0 %v2604, 120
        %v2644 = vpop.permute.xlu0 %2643
        %2645 = vrot.lane.b32.xlu0 %v2605, 120
        %v2646 = vpop.permute.xlu0 %2645
        %2647 = vrot.lane.b32.xlu0 %v2606, 120
        %v2648 = vpop.permute.xlu0 %2647
        %2649 = vrot.lane.b32.xlu0 %v2607, 120
        %v2650 = vpop.permute.xlu0 %2649
        %2651 = vrot.lane.b32.xlu0 %v2608, 120
        %v2652 = vpop.permute.xlu0 %2651
        %2653 = vrot.lane.b32.xlu0 %v2609, 120
        %v2654 = vpop.permute.xlu0 %2653
        %2655 = vrot.lane.b32.xlu0 %v2610, 120
        %v2656 = vpop.permute.xlu0 %2655
        %2657 = vrot.lane.b32.xlu0 %v2611, 120
        %v2658 = vpop.permute.xlu0 %2657
        %2659 = vrot.lane.b32.xlu0 %v2612, 120
        %v2660 = vpop.permute.xlu0 %2659
        %v2677 = vadd.f32 %v2573, %v2630
        %v2678 = vadd.f32 %v2574, %v2632
        %v2679 = vadd.f32 %v2575, %v2634
        %v2680 = vadd.f32 %v2576, %v2636
        %v2681 = vadd.f32 %v2577, %v2638
        %v2682 = vadd.f32 %v2578, %v2640
        %v2683 = vadd.f32 %v2579, %v2642
        %v2684 = vadd.f32 %v2580, %v2644
        %v2685 = vadd.f32 %v2581, %v2646
        %v2686 = vadd.f32 %v2582, %v2648
        %v2687 = vadd.f32 %v2583, %v2650
        %v2688 = vadd.f32 %v2584, %v2652
        %v2689 = vadd.f32 %v2585, %v2654
        %v2690 = vadd.f32 %v2586, %v2656
        %v2691 = vadd.f32 %v2587, %v2658
        %v2692 = vadd.f32 %v2588, %v2660
        %v2693 = vlaneseq
        %v2694 = vshrl.u32 %v2693, 7
        %v2695 = vsub.s32 3, %v2694
        %v2696 = vrot.slane %v1754, %v2695
        %2698 = vrot.lane.b32.xlu0 %v2696, 16
        %v2699 = vpop.permute.xlu0 %2698
        %v2701 = vmul.f32 %v2537, %v2699
        %v2702 = vmul.f32 %v2538, %v2699
        %v2703 = vmul.f32 %v2539, %v2699
        %v2704 = vmul.f32 %v2540, %v2699
        %v2705 = vmul.f32 %v2541, %v2699
        %v2706 = vmul.f32 %v2542, %v2699
        %v2707 = vmul.f32 %v2543, %v2699
        %v2708 = vmul.f32 %v2544, %v2699
        %v2709 = vmul.f32 %v2545, %v2699
        %v2710 = vmul.f32 %v2546, %v2699
        %v2711 = vmul.f32 %v2547, %v2699
        %v2712 = vmul.f32 %v2548, %v2699
        %v2713 = vmul.f32 %v2549, %v2699
        %v2714 = vmul.f32 %v2550, %v2699
        %v2715 = vmul.f32 %v2551, %v2699
        %v2716 = vmul.f32 %v2552, %v2699
        %2733 = vrot.lane.b32.xlu0 %v2701, 112
        %v2734 = vpop.permute.xlu0 %2733
        %2735 = vrot.lane.b32.xlu0 %v2702, 112
        %v2736 = vpop.permute.xlu0 %2735
        %2737 = vrot.lane.b32.xlu0 %v2703, 112
        %v2738 = vpop.permute.xlu0 %2737
        %2739 = vrot.lane.b32.xlu0 %v2704, 112
        %v2740 = vpop.permute.xlu0 %2739
        %2741 = vrot.lane.b32.xlu0 %v2705, 112
        %v2742 = vpop.permute.xlu0 %2741
        %2743 = vrot.lane.b32.xlu0 %v2706, 112
        %v2744 = vpop.permute.xlu0 %2743
        %2745 = vrot.lane.b32.xlu0 %v2707, 112
        %v2746 = vpop.permute.xlu0 %2745
        %2747 = vrot.lane.b32.xlu0 %v2708, 112
        %v2748 = vpop.permute.xlu0 %2747
        %2749 = vrot.lane.b32.xlu0 %v2709, 112
        %v2750 = vpop.permute.xlu0 %2749
        %2751 = vrot.lane.b32.xlu0 %v2710, 112
        %v2752 = vpop.permute.xlu0 %2751
        %2753 = vrot.lane.b32.xlu0 %v2711, 112
        %v2754 = vpop.permute.xlu0 %2753
        %2755 = vrot.lane.b32.xlu0 %v2712, 112
        %v2756 = vpop.permute.xlu0 %2755
        %2757 = vrot.lane.b32.xlu0 %v2713, 112
        %v2758 = vpop.permute.xlu0 %2757
        %2759 = vrot.lane.b32.xlu0 %v2714, 112
        %v2760 = vpop.permute.xlu0 %2759
        %2761 = vrot.lane.b32.xlu0 %v2715, 112
        %v2762 = vpop.permute.xlu0 %2761
        %2763 = vrot.lane.b32.xlu0 %v2716, 112
        %v2764 = vpop.permute.xlu0 %2763
        %v2781 = vadd.f32 %v2677, %v2734
        %v2782 = vadd.f32 %v2678, %v2736
        %v2783 = vadd.f32 %v2679, %v2738
        %v2784 = vadd.f32 %v2680, %v2740
        %v2785 = vadd.f32 %v2681, %v2742
        %v2786 = vadd.f32 %v2682, %v2744
        %v2787 = vadd.f32 %v2683, %v2746
        %v2788 = vadd.f32 %v2684, %v2748
        %v2789 = vadd.f32 %v2685, %v2750
        %v2790 = vadd.f32 %v2686, %v2752
        %v2791 = vadd.f32 %v2687, %v2754
        %v2792 = vadd.f32 %v2688, %v2756
        %v2793 = vadd.f32 %v2689, %v2758
        %v2794 = vadd.f32 %v2690, %v2760
        %v2795 = vadd.f32 %v2691, %v2762
        %v2796 = vadd.f32 %v2692, %v2764
        %v2797 = vld [vmem:[%s1732 + $0x1] sm:$0xff]
        %v2798 = vld [vmem:[%s1732 + $0x11] sm:$0xff]
        %v2799 = vld [vmem:[%s1732 + $0x21] sm:$0xff]
        %v2800 = vld [vmem:[%s1732 + $0x31] sm:$0xff]
        %v2801 = vld [vmem:[%s1732 + $0x41] sm:$0xff]
        %v2802 = vld [vmem:[%s1732 + $0x51] sm:$0xff]
        %v2803 = vld [vmem:[%s1732 + $0x61] sm:$0xff]
        %v2804 = vld [vmem:[%s1732 + $0x71] sm:$0xff]
        %v2805 = vld [vmem:[%s1732 + $0x81] sm:$0xff]
        %v2806 = vld [vmem:[%s1732 + $0x91] sm:$0xff]
        %v2807 = vld [vmem:[%s1732 + $0xa1] sm:$0xff]
        %v2808 = vld [vmem:[%s1732 + $0xb1] sm:$0xff]
        %v2809 = vld [vmem:[%s1732 + $0xc1] sm:$0xff]
        %v2810 = vld [vmem:[%s1732 + $0xd1] sm:$0xff]
        %v2811 = vld [vmem:[%s1732 + $0xe1] sm:$0xff]
        %v2812 = vld [vmem:[%s1732 + $0xf1] sm:$0xff]
        %v2813 = vlaneseq
        %v2814 = vshrl.u32 %v2813, 7
        %v2815 = vsub.s32 4, %v2814
        %v2816 = vrot.slane %v1754, %v2815
        %v2817 = vmul.f32 %v2797, %v2816
        %v2818 = vmul.f32 %v2798, %v2816
        %v2819 = vmul.f32 %v2799, %v2816
        %v2820 = vmul.f32 %v2800, %v2816
        %v2821 = vmul.f32 %v2801, %v2816
        %v2822 = vmul.f32 %v2802, %v2816
        %v2823 = vmul.f32 %v2803, %v2816
        %v2824 = vmul.f32 %v2804, %v2816
        %v2825 = vmul.f32 %v2805, %v2816
        %v2826 = vmul.f32 %v2806, %v2816
        %v2827 = vmul.f32 %v2807, %v2816
        %v2828 = vmul.f32 %v2808, %v2816
        %v2829 = vmul.f32 %v2809, %v2816
        %v2830 = vmul.f32 %v2810, %v2816
        %v2831 = vmul.f32 %v2811, %v2816
        %v2832 = vmul.f32 %v2812, %v2816
        %v2833 = vadd.f32 %v2781, %v2817
        %v2834 = vadd.f32 %v2782, %v2818
        %v2835 = vadd.f32 %v2783, %v2819
        %v2836 = vadd.f32 %v2784, %v2820
        %v2837 = vadd.f32 %v2785, %v2821
        %v2838 = vadd.f32 %v2786, %v2822
        %v2839 = vadd.f32 %v2787, %v2823
        %v2840 = vadd.f32 %v2788, %v2824
        %v2841 = vadd.f32 %v2789, %v2825
        %v2842 = vadd.f32 %v2790, %v2826
        %v2843 = vadd.f32 %v2791, %v2827
        %v2844 = vadd.f32 %v2792, %v2828
        %v2845 = vadd.f32 %v2793, %v2829
        %v2846 = vadd.f32 %v2794, %v2830
        %v2847 = vadd.f32 %v2795, %v2831
        %v2848 = vadd.f32 %v2796, %v2832
        %v2849 = vlaneseq
        %v2850 = vshrl.u32 %v2849, 7
        %v2851 = vsub.s32 5, %v2850
        %v2852 = vrot.slane %v1754, %v2851
        %2854 = vrot.lane.b32.xlu0 %v2852, 8
        %v2855 = vpop.permute.xlu0 %2854
        %v2857 = vmul.f32 %v2797, %v2855
        %v2858 = vmul.f32 %v2798, %v2855
        %v2859 = vmul.f32 %v2799, %v2855
        %v2860 = vmul.f32 %v2800, %v2855
        %v2861 = vmul.f32 %v2801, %v2855
        %v2862 = vmul.f32 %v2802, %v2855
        %v2863 = vmul.f32 %v2803, %v2855
        %v2864 = vmul.f32 %v2804, %v2855
        %v2865 = vmul.f32 %v2805, %v2855
        %v2866 = vmul.f32 %v2806, %v2855
        %v2867 = vmul.f32 %v2807, %v2855
        %v2868 = vmul.f32 %v2808, %v2855
        %v2869 = vmul.f32 %v2809, %v2855
        %v2870 = vmul.f32 %v2810, %v2855
        %v2871 = vmul.f32 %v2811, %v2855
        %v2872 = vmul.f32 %v2812, %v2855
        %2889 = vrot.lane.b32.xlu0 %v2857, 120
        %v2890 = vpop.permute.xlu0 %2889
        %2891 = vrot.lane.b32.xlu0 %v2858, 120
        %v2892 = vpop.permute.xlu0 %2891
        %2893 = vrot.lane.b32.xlu0 %v2859, 120
        %v2894 = vpop.permute.xlu0 %2893
        %2895 = vrot.lane.b32.xlu0 %v2860, 120
        %v2896 = vpop.permute.xlu0 %2895
        %2897 = vrot.lane.b32.xlu0 %v2861, 120
        %v2898 = vpop.permute.xlu0 %2897
        %2899 = vrot.lane.b32.xlu0 %v2862, 120
        %v2900 = vpop.permute.xlu0 %2899
        %2901 = vrot.lane.b32.xlu0 %v2863, 120
        %v2902 = vpop.permute.xlu0 %2901
        %2903 = vrot.lane.b32.xlu0 %v2864, 120
        %v2904 = vpop.permute.xlu0 %2903
        %2905 = vrot.lane.b32.xlu0 %v2865, 120
        %v2906 = vpop.permute.xlu0 %2905
        %2907 = vrot.lane.b32.xlu0 %v2866, 120
        %v2908 = vpop.permute.xlu0 %2907
        %2909 = vrot.lane.b32.xlu0 %v2867, 120
        %v2910 = vpop.permute.xlu0 %2909
        %2911 = vrot.lane.b32.xlu0 %v2868, 120
        %v2912 = vpop.permute.xlu0 %2911
        %2913 = vrot.lane.b32.xlu0 %v2869, 120
        %v2914 = vpop.permute.xlu0 %2913
        %2915 = vrot.lane.b32.xlu0 %v2870, 120
        %v2916 = vpop.permute.xlu0 %2915
        %2917 = vrot.lane.b32.xlu0 %v2871, 120
        %v2918 = vpop.permute.xlu0 %2917
        %2919 = vrot.lane.b32.xlu0 %v2872, 120
        %v2920 = vpop.permute.xlu0 %2919
        %v2937 = vadd.f32 %v2833, %v2890
        %v2938 = vadd.f32 %v2834, %v2892
        %v2939 = vadd.f32 %v2835, %v2894
        %v2940 = vadd.f32 %v2836, %v2896
        %v2941 = vadd.f32 %v2837, %v2898
        %v2942 = vadd.f32 %v2838, %v2900
        %v2943 = vadd.f32 %v2839, %v2902
        %v2944 = vadd.f32 %v2840, %v2904
        %v2945 = vadd.f32 %v2841, %v2906
        %v2946 = vadd.f32 %v2842, %v2908
        %v2947 = vadd.f32 %v2843, %v2910
        %v2948 = vadd.f32 %v2844, %v2912
        %v2949 = vadd.f32 %v2845, %v2914
        %v2950 = vadd.f32 %v2846, %v2916
        %v2951 = vadd.f32 %v2847, %v2918
        %v2952 = vadd.f32 %v2848, %v2920
        %v2953 = vlaneseq
        %v2954 = vshrl.u32 %v2953, 7
        %v2955 = vsub.s32 6, %v2954
        %v2956 = vrot.slane %v1754, %v2955
        %2958 = vrot.lane.b32.xlu0 %v2956, 16
        %v2959 = vpop.permute.xlu0 %2958
        %v2961 = vmul.f32 %v2797, %v2959
        %v2962 = vmul.f32 %v2798, %v2959
        %v2963 = vmul.f32 %v2799, %v2959
        %v2964 = vmul.f32 %v2800, %v2959
        %v2965 = vmul.f32 %v2801, %v2959
        %v2966 = vmul.f32 %v2802, %v2959
        %v2967 = vmul.f32 %v2803, %v2959
        %v2968 = vmul.f32 %v2804, %v2959
        %v2969 = vmul.f32 %v2805, %v2959
        %v2970 = vmul.f32 %v2806, %v2959
        %v2971 = vmul.f32 %v2807, %v2959
        %v2972 = vmul.f32 %v2808, %v2959
        %v2973 = vmul.f32 %v2809, %v2959
        %v2974 = vmul.f32 %v2810, %v2959
        %v2975 = vmul.f32 %v2811, %v2959
        %v2976 = vmul.f32 %v2812, %v2959
        %2993 = vrot.lane.b32.xlu0 %v2961, 112
        %v2994 = vpop.permute.xlu0 %2993
        %2995 = vrot.lane.b32.xlu0 %v2962, 112
        %v2996 = vpop.permute.xlu0 %2995
        %2997 = vrot.lane.b32.xlu0 %v2963, 112
        %v2998 = vpop.permute.xlu0 %2997
        %2999 = vrot.lane.b32.xlu0 %v2964, 112
        %v3000 = vpop.permute.xlu0 %2999
        %3001 = vrot.lane.b32.xlu0 %v2965, 112
        %v3002 = vpop.permute.xlu0 %3001
        %3003 = vrot.lane.b32.xlu0 %v2966, 112
        %v3004 = vpop.permute.xlu0 %3003
        %3005 = vrot.lane.b32.xlu0 %v2967, 112
        %v3006 = vpop.permute.xlu0 %3005
        %3007 = vrot.lane.b32.xlu0 %v2968, 112
        %v3008 = vpop.permute.xlu0 %3007
        %3009 = vrot.lane.b32.xlu0 %v2969, 112
        %v3010 = vpop.permute.xlu0 %3009
        %3011 = vrot.lane.b32.xlu0 %v2970, 112
        %v3012 = vpop.permute.xlu0 %3011
        %3013 = vrot.lane.b32.xlu0 %v2971, 112
        %v3014 = vpop.permute.xlu0 %3013
        %3015 = vrot.lane.b32.xlu0 %v2972, 112
        %v3016 = vpop.permute.xlu0 %3015
        %3017 = vrot.lane.b32.xlu0 %v2973, 112
        %v3018 = vpop.permute.xlu0 %3017
        %3019 = vrot.lane.b32.xlu0 %v2974, 112
        %v3020 = vpop.permute.xlu0 %3019
        %3021 = vrot.lane.b32.xlu0 %v2975, 112
        %v3022 = vpop.permute.xlu0 %3021
        %3023 = vrot.lane.b32.xlu0 %v2976, 112
        %v3024 = vpop.permute.xlu0 %3023
        %v3041 = vadd.f32 %v2937, %v2994
        %v3042 = vadd.f32 %v2938, %v2996
        %v3043 = vadd.f32 %v2939, %v2998
        %v3044 = vadd.f32 %v2940, %v3000
        %v3045 = vadd.f32 %v2941, %v3002
        %v3046 = vadd.f32 %v2942, %v3004
        %v3047 = vadd.f32 %v2943, %v3006
        %v3048 = vadd.f32 %v2944, %v3008
        %v3049 = vadd.f32 %v2945, %v3010
        %v3050 = vadd.f32 %v2946, %v3012
        %v3051 = vadd.f32 %v2947, %v3014
        %v3052 = vadd.f32 %v2948, %v3016
        %v3053 = vadd.f32 %v2949, %v3018
        %v3054 = vadd.f32 %v2950, %v3020
        %v3055 = vadd.f32 %v2951, %v3022
        %v3056 = vadd.f32 %v2952, %v3024
        %v3057 = vld [vmem:[%s1732 + $0x2] sm:$0xff]
        %v3058 = vld [vmem:[%s1732 + $0x12] sm:$0xff]
        %v3059 = vld [vmem:[%s1732 + $0x22] sm:$0xff]
        %v3060 = vld [vmem:[%s1732 + $0x32] sm:$0xff]
        %v3061 = vld [vmem:[%s1732 + $0x42] sm:$0xff]
        %v3062 = vld [vmem:[%s1732 + $0x52] sm:$0xff]
        %v3063 = vld [vmem:[%s1732 + $0x62] sm:$0xff]
        %v3064 = vld [vmem:[%s1732 + $0x72] sm:$0xff]
        %v3065 = vld [vmem:[%s1732 + $0x82] sm:$0xff]
        %v3066 = vld [vmem:[%s1732 + $0x92] sm:$0xff]
        %v3067 = vld [vmem:[%s1732 + $0xa2] sm:$0xff]
        %v3068 = vld [vmem:[%s1732 + $0xb2] sm:$0xff]
        %v3069 = vld [vmem:[%s1732 + $0xc2] sm:$0xff]
        %v3070 = vld [vmem:[%s1732 + $0xd2] sm:$0xff]
        %v3071 = vld [vmem:[%s1732 + $0xe2] sm:$0xff]
        %v3072 = vld [vmem:[%s1732 + $0xf2] sm:$0xff]
        %v3073 = vlaneseq
        %v3074 = vshrl.u32 %v3073, 7
        %v3075 = vsub.s32 7, %v3074
        %v3076 = vrot.slane %v1754, %v3075
        %v3077 = vmul.f32 %v3057, %v3076
        %v3078 = vmul.f32 %v3058, %v3076
        %v3079 = vmul.f32 %v3059, %v3076
        %v3080 = vmul.f32 %v3060, %v3076
        %v3081 = vmul.f32 %v3061, %v3076
        %v3082 = vmul.f32 %v3062, %v3076
        %v3083 = vmul.f32 %v3063, %v3076
        %v3084 = vmul.f32 %v3064, %v3076
        %v3085 = vmul.f32 %v3065, %v3076
        %v3086 = vmul.f32 %v3066, %v3076
        %v3087 = vmul.f32 %v3067, %v3076
        %v3088 = vmul.f32 %v3068, %v3076
        %v3089 = vmul.f32 %v3069, %v3076
        %v3090 = vmul.f32 %v3070, %v3076
        %v3091 = vmul.f32 %v3071, %v3076
        %v3092 = vmul.f32 %v3072, %v3076
        %v3093 = vadd.f32 %v3041, %v3077
        %v3094 = vadd.f32 %v3042, %v3078
        %v3095 = vadd.f32 %v3043, %v3079
        %v3096 = vadd.f32 %v3044, %v3080
        %v3097 = vadd.f32 %v3045, %v3081
        %v3098 = vadd.f32 %v3046, %v3082
        %v3099 = vadd.f32 %v3047, %v3083
        %v3100 = vadd.f32 %v3048, %v3084
        %v3101 = vadd.f32 %v3049, %v3085
        %v3102 = vadd.f32 %v3050, %v3086
        %v3103 = vadd.f32 %v3051, %v3087
        %v3104 = vadd.f32 %v3052, %v3088
        %v3105 = vadd.f32 %v3053, %v3089
        %v3106 = vadd.f32 %v3054, %v3090
        %v3107 = vadd.f32 %v3055, %v3091
        %v3108 = vadd.f32 %v3056, %v3092
        %v3109 = vlaneseq
        %v3110 = vshrl.u32 %v3109, 7
        %v3111 = vsub.s32 0, %v3110
        %v3112 = vrot.slane %v1755, %v3111
        %3114 = vrot.lane.b32.xlu0 %v3112, 8
        %v3115 = vpop.permute.xlu0 %3114
        %v3117 = vmul.f32 %v3057, %v3115
        %v3118 = vmul.f32 %v3058, %v3115
        %v3119 = vmul.f32 %v3059, %v3115
        %v3120 = vmul.f32 %v3060, %v3115
        %v3121 = vmul.f32 %v3061, %v3115
        %v3122 = vmul.f32 %v3062, %v3115
        %v3123 = vmul.f32 %v3063, %v3115
        %v3124 = vmul.f32 %v3064, %v3115
        %v3125 = vmul.f32 %v3065, %v3115
        %v3126 = vmul.f32 %v3066, %v3115
        %v3127 = vmul.f32 %v3067, %v3115
        %v3128 = vmul.f32 %v3068, %v3115
        %v3129 = vmul.f32 %v3069, %v3115
        %v3130 = vmul.f32 %v3070, %v3115
        %v3131 = vmul.f32 %v3071, %v3115
        %v3132 = vmul.f32 %v3072, %v3115
        %3149 = vrot.lane.b32.xlu0 %v3117, 120
        %v3150 = vpop.permute.xlu0 %3149
        %3151 = vrot.lane.b32.xlu0 %v3118, 120
        %v3152 = vpop.permute.xlu0 %3151
        %3153 = vrot.lane.b32.xlu0 %v3119, 120
        %v3154 = vpop.permute.xlu0 %3153
        %3155 = vrot.lane.b32.xlu0 %v3120, 120
        %v3156 = vpop.permute.xlu0 %3155
        %3157 = vrot.lane.b32.xlu0 %v3121, 120
        %v3158 = vpop.permute.xlu0 %3157
        %3159 = vrot.lane.b32.xlu0 %v3122, 120
        %v3160 = vpop.permute.xlu0 %3159
        %3161 = vrot.lane.b32.xlu0 %v3123, 120
        %v3162 = vpop.permute.xlu0 %3161
        %3163 = vrot.lane.b32.xlu0 %v3124, 120
        %v3164 = vpop.permute.xlu0 %3163
        %3165 = vrot.lane.b32.xlu0 %v3125, 120
        %v3166 = vpop.permute.xlu0 %3165
        %3167 = vrot.lane.b32.xlu0 %v3126, 120
        %v3168 = vpop.permute.xlu0 %3167
        %3169 = vrot.lane.b32.xlu0 %v3127, 120
        %v3170 = vpop.permute.xlu0 %3169
        %3171 = vrot.lane.b32.xlu0 %v3128, 120
        %v3172 = vpop.permute.xlu0 %3171
        %3173 = vrot.lane.b32.xlu0 %v3129, 120
        %v3174 = vpop.permute.xlu0 %3173
        %3175 = vrot.lane.b32.xlu0 %v3130, 120
        %v3176 = vpop.permute.xlu0 %3175
        %3177 = vrot.lane.b32.xlu0 %v3131, 120
        %v3178 = vpop.permute.xlu0 %3177
        %3179 = vrot.lane.b32.xlu0 %v3132, 120
        %v3180 = vpop.permute.xlu0 %3179
        %v3197 = vadd.f32 %v3093, %v3150
        %v3198 = vadd.f32 %v3094, %v3152
        %v3199 = vadd.f32 %v3095, %v3154
        %v3200 = vadd.f32 %v3096, %v3156
        %v3201 = vadd.f32 %v3097, %v3158
        %v3202 = vadd.f32 %v3098, %v3160
        %v3203 = vadd.f32 %v3099, %v3162
        %v3204 = vadd.f32 %v3100, %v3164
        %v3205 = vadd.f32 %v3101, %v3166
        %v3206 = vadd.f32 %v3102, %v3168
        %v3207 = vadd.f32 %v3103, %v3170
        %v3208 = vadd.f32 %v3104, %v3172
        %v3209 = vadd.f32 %v3105, %v3174
        %v3210 = vadd.f32 %v3106, %v3176
        %v3211 = vadd.f32 %v3107, %v3178
        %v3212 = vadd.f32 %v3108, %v3180
        %v3213 = vlaneseq
        %v3214 = vshrl.u32 %v3213, 7
        %v3215 = vsub.s32 1, %v3214
        %v3216 = vrot.slane %v1755, %v3215
        %3218 = vrot.lane.b32.xlu0 %v3216, 16
        %v3219 = vpop.permute.xlu0 %3218
        %v3221 = vmul.f32 %v3057, %v3219
        %v3222 = vmul.f32 %v3058, %v3219
        %v3223 = vmul.f32 %v3059, %v3219
        %v3224 = vmul.f32 %v3060, %v3219
        %v3225 = vmul.f32 %v3061, %v3219
        %v3226 = vmul.f32 %v3062, %v3219
        %v3227 = vmul.f32 %v3063, %v3219
        %v3228 = vmul.f32 %v3064, %v3219
        %v3229 = vmul.f32 %v3065, %v3219
        %v3230 = vmul.f32 %v3066, %v3219
        %v3231 = vmul.f32 %v3067, %v3219
        %v3232 = vmul.f32 %v3068, %v3219
        %v3233 = vmul.f32 %v3069, %v3219
        %v3234 = vmul.f32 %v3070, %v3219
        %v3235 = vmul.f32 %v3071, %v3219
        %v3236 = vmul.f32 %v3072, %v3219
        %3253 = vrot.lane.b32.xlu0 %v3221, 112
        %v3254 = vpop.permute.xlu0 %3253
        %3255 = vrot.lane.b32.xlu0 %v3222, 112
        %v3256 = vpop.permute.xlu0 %3255
        %3257 = vrot.lane.b32.xlu0 %v3223, 112
        %v3258 = vpop.permute.xlu0 %3257
        %3259 = vrot.lane.b32.xlu0 %v3224, 112
        %v3260 = vpop.permute.xlu0 %3259
        %3261 = vrot.lane.b32.xlu0 %v3225, 112
        %v3262 = vpop.permute.xlu0 %3261
        %3263 = vrot.lane.b32.xlu0 %v3226, 112
        %v3264 = vpop.permute.xlu0 %3263
        %3265 = vrot.lane.b32.xlu0 %v3227, 112
        %v3266 = vpop.permute.xlu0 %3265
        %3267 = vrot.lane.b32.xlu0 %v3228, 112
        %v3268 = vpop.permute.xlu0 %3267
        %3269 = vrot.lane.b32.xlu0 %v3229, 112
        %v3270 = vpop.permute.xlu0 %3269
        %3271 = vrot.lane.b32.xlu0 %v3230, 112
        %v3272 = vpop.permute.xlu0 %3271
        %3273 = vrot.lane.b32.xlu0 %v3231, 112
        %v3274 = vpop.permute.xlu0 %3273
        %3275 = vrot.lane.b32.xlu0 %v3232, 112
        %v3276 = vpop.permute.xlu0 %3275
        %3277 = vrot.lane.b32.xlu0 %v3233, 112
        %v3278 = vpop.permute.xlu0 %3277
        %3279 = vrot.lane.b32.xlu0 %v3234, 112
        %v3280 = vpop.permute.xlu0 %3279
        %3281 = vrot.lane.b32.xlu0 %v3235, 112
        %v3282 = vpop.permute.xlu0 %3281
        %3283 = vrot.lane.b32.xlu0 %v3236, 112
        %v3284 = vpop.permute.xlu0 %3283
        %v3301 = vadd.f32 %v3197, %v3254
        %v3302 = vadd.f32 %v3198, %v3256
        %v3303 = vadd.f32 %v3199, %v3258
        %v3304 = vadd.f32 %v3200, %v3260
        %v3305 = vadd.f32 %v3201, %v3262
        %v3306 = vadd.f32 %v3202, %v3264
        %v3307 = vadd.f32 %v3203, %v3266
        %v3308 = vadd.f32 %v3204, %v3268
        %v3309 = vadd.f32 %v3205, %v3270
        %v3310 = vadd.f32 %v3206, %v3272
        %v3311 = vadd.f32 %v3207, %v3274
        %v3312 = vadd.f32 %v3208, %v3276
        %v3313 = vadd.f32 %v3209, %v3278
        %v3314 = vadd.f32 %v3210, %v3280
        %v3315 = vadd.f32 %v3211, %v3282
        %v3316 = vadd.f32 %v3212, %v3284
        %s3317 = scalar_lea.vmem [#allocation2], 32
        %v3318 = vld [vmem:[%s3317] sm:$0xff]
        %v3319 = vld [vmem:[%s3317 + $0x10] sm:$0xff]
        %v3320 = vld [vmem:[%s3317 + $0x20] sm:$0xff]
        %v3321 = vld [vmem:[%s3317 + $0x30] sm:$0xff]
        %v3322 = vld [vmem:[%s3317 + $0x40] sm:$0xff]
        %v3323 = vld [vmem:[%s3317 + $0x50] sm:$0xff]
        %v3324 = vld [vmem:[%s3317 + $0x60] sm:$0xff]
        %v3325 = vld [vmem:[%s3317 + $0x70] sm:$0xff]
        %v3326 = vld [vmem:[%s3317 + $0x80] sm:$0xff]
        %v3327 = vld [vmem:[%s3317 + $0x90] sm:$0xff]
        %v3328 = vld [vmem:[%s3317 + $0xa0] sm:$0xff]
        %v3329 = vld [vmem:[%s3317 + $0xb0] sm:$0xff]
        %v3330 = vld [vmem:[%s3317 + $0xc0] sm:$0xff]
        %v3331 = vld [vmem:[%s3317 + $0xd0] sm:$0xff]
        %v3332 = vld [vmem:[%s3317 + $0xe0] sm:$0xff]
        %v3333 = vld [vmem:[%s3317 + $0xf0] sm:$0xff]
        %v3334 = vlaneseq
        %v3335 = vshrl.u32 %v3334, 7
        %v3336 = vsub.s32 2, %v3335
        %v3337 = vrot.slane %v1755, %v3336
        %v3338 = vmul.f32 %v3318, %v3337
        %v3339 = vmul.f32 %v3319, %v3337
        %v3340 = vmul.f32 %v3320, %v3337
        %v3341 = vmul.f32 %v3321, %v3337
        %v3342 = vmul.f32 %v3322, %v3337
        %v3343 = vmul.f32 %v3323, %v3337
        %v3344 = vmul.f32 %v3324, %v3337
        %v3345 = vmul.f32 %v3325, %v3337
        %v3346 = vmul.f32 %v3326, %v3337
        %v3347 = vmul.f32 %v3327, %v3337
        %v3348 = vmul.f32 %v3328, %v3337
        %v3349 = vmul.f32 %v3329, %v3337
        %v3350 = vmul.f32 %v3330, %v3337
        %v3351 = vmul.f32 %v3331, %v3337
        %v3352 = vmul.f32 %v3332, %v3337
        %v3353 = vmul.f32 %v3333, %v3337
        %v3354 = vadd.f32 %v3301, %v3338
        %v3355 = vadd.f32 %v3302, %v3339
        %v3356 = vadd.f32 %v3303, %v3340
        %v3357 = vadd.f32 %v3304, %v3341
        %v3358 = vadd.f32 %v3305, %v3342
        %v3359 = vadd.f32 %v3306, %v3343
        %v3360 = vadd.f32 %v3307, %v3344
        %v3361 = vadd.f32 %v3308, %v3345
        %v3362 = vadd.f32 %v3309, %v3346
        %v3363 = vadd.f32 %v3310, %v3347
        %v3364 = vadd.f32 %v3311, %v3348
        %v3365 = vadd.f32 %v3312, %v3349
        %v3366 = vadd.f32 %v3313, %v3350
        %v3367 = vadd.f32 %v3314, %v3351
        %v3368 = vadd.f32 %v3315, %v3352
        %v3369 = vadd.f32 %v3316, %v3353
        %v3370 = vlaneseq
        %v3371 = vshrl.u32 %v3370, 7
        %v3372 = vsub.s32 3, %v3371
        %v3373 = vrot.slane %v1755, %v3372
        %3375 = vrot.lane.b32.xlu0 %v3373, 8
        %v3376 = vpop.permute.xlu0 %3375
        %v3378 = vmul.f32 %v3318, %v3376
        %v3379 = vmul.f32 %v3319, %v3376
        %v3380 = vmul.f32 %v3320, %v3376
        %v3381 = vmul.f32 %v3321, %v3376
        %v3382 = vmul.f32 %v3322, %v3376
        %v3383 = vmul.f32 %v3323, %v3376
        %v3384 = vmul.f32 %v3324, %v3376
        %v3385 = vmul.f32 %v3325, %v3376
        %v3386 = vmul.f32 %v3326, %v3376
        %v3387 = vmul.f32 %v3327, %v3376
        %v3388 = vmul.f32 %v3328, %v3376
        %v3389 = vmul.f32 %v3329, %v3376
        %v3390 = vmul.f32 %v3330, %v3376
        %v3391 = vmul.f32 %v3331, %v3376
        %v3392 = vmul.f32 %v3332, %v3376
        %v3393 = vmul.f32 %v3333, %v3376
        %3410 = vrot.lane.b32.xlu0 %v3378, 120
        %v3411 = vpop.permute.xlu0 %3410
        %3412 = vrot.lane.b32.xlu0 %v3379, 120
        %v3413 = vpop.permute.xlu0 %3412
        %3414 = vrot.lane.b32.xlu0 %v3380, 120
        %v3415 = vpop.permute.xlu0 %3414
        %3416 = vrot.lane.b32.xlu0 %v3381, 120
        %v3417 = vpop.permute.xlu0 %3416
        %3418 = vrot.lane.b32.xlu0 %v3382, 120
        %v3419 = vpop.permute.xlu0 %3418
        %3420 = vrot.lane.b32.xlu0 %v3383, 120
        %v3421 = vpop.permute.xlu0 %3420
        %3422 = vrot.lane.b32.xlu0 %v3384, 120
        %v3423 = vpop.permute.xlu0 %3422
        %3424 = vrot.lane.b32.xlu0 %v3385, 120
        %v3425 = vpop.permute.xlu0 %3424
        %3426 = vrot.lane.b32.xlu0 %v3386, 120
        %v3427 = vpop.permute.xlu0 %3426
        %3428 = vrot.lane.b32.xlu0 %v3387, 120
        %v3429 = vpop.permute.xlu0 %3428
        %3430 = vrot.lane.b32.xlu0 %v3388, 120
        %v3431 = vpop.permute.xlu0 %3430
        %3432 = vrot.lane.b32.xlu0 %v3389, 120
        %v3433 = vpop.permute.xlu0 %3432
        %3434 = vrot.lane.b32.xlu0 %v3390, 120
        %v3435 = vpop.permute.xlu0 %3434
        %3436 = vrot.lane.b32.xlu0 %v3391, 120
        %v3437 = vpop.permute.xlu0 %3436
        %3438 = vrot.lane.b32.xlu0 %v3392, 120
        %v3439 = vpop.permute.xlu0 %3438
        %3440 = vrot.lane.b32.xlu0 %v3393, 120
        %v3441 = vpop.permute.xlu0 %3440
        %v3458 = vadd.f32 %v3354, %v3411
        %v3459 = vadd.f32 %v3355, %v3413
        %v3460 = vadd.f32 %v3356, %v3415
        %v3461 = vadd.f32 %v3357, %v3417
        %v3462 = vadd.f32 %v3358, %v3419
        %v3463 = vadd.f32 %v3359, %v3421
        %v3464 = vadd.f32 %v3360, %v3423
        %v3465 = vadd.f32 %v3361, %v3425
        %v3466 = vadd.f32 %v3362, %v3427
        %v3467 = vadd.f32 %v3363, %v3429
        %v3468 = vadd.f32 %v3364, %v3431
        %v3469 = vadd.f32 %v3365, %v3433
        %v3470 = vadd.f32 %v3366, %v3435
        %v3471 = vadd.f32 %v3367, %v3437
        %v3472 = vadd.f32 %v3368, %v3439
        %v3473 = vadd.f32 %v3369, %v3441
        %v3474 = vlaneseq
        %v3475 = vshrl.u32 %v3474, 7
        %v3476 = vsub.s32 4, %v3475
        %v3477 = vrot.slane %v1755, %v3476
        %3479 = vrot.lane.b32.xlu0 %v3477, 16
        %v3480 = vpop.permute.xlu0 %3479
        %v3482 = vmul.f32 %v3318, %v3480
        %v3483 = vmul.f32 %v3319, %v3480
        %v3484 = vmul.f32 %v3320, %v3480
        %v3485 = vmul.f32 %v3321, %v3480
        %v3486 = vmul.f32 %v3322, %v3480
        %v3487 = vmul.f32 %v3323, %v3480
        %v3488 = vmul.f32 %v3324, %v3480
        %v3489 = vmul.f32 %v3325, %v3480
        %v3490 = vmul.f32 %v3326, %v3480
        %v3491 = vmul.f32 %v3327, %v3480
        %v3492 = vmul.f32 %v3328, %v3480
        %v3493 = vmul.f32 %v3329, %v3480
        %v3494 = vmul.f32 %v3330, %v3480
        %v3495 = vmul.f32 %v3331, %v3480
        %v3496 = vmul.f32 %v3332, %v3480
        %v3497 = vmul.f32 %v3333, %v3480
        %3514 = vrot.lane.b32.xlu0 %v3482, 112
        %v3515 = vpop.permute.xlu0 %3514
        %3516 = vrot.lane.b32.xlu0 %v3483, 112
        %v3517 = vpop.permute.xlu0 %3516
        %3518 = vrot.lane.b32.xlu0 %v3484, 112
        %v3519 = vpop.permute.xlu0 %3518
        %3520 = vrot.lane.b32.xlu0 %v3485, 112
        %v3521 = vpop.permute.xlu0 %3520
        %3522 = vrot.lane.b32.xlu0 %v3486, 112
        %v3523 = vpop.permute.xlu0 %3522
        %3524 = vrot.lane.b32.xlu0 %v3487, 112
        %v3525 = vpop.permute.xlu0 %3524
        %3526 = vrot.lane.b32.xlu0 %v3488, 112
        %v3527 = vpop.permute.xlu0 %3526
        %3528 = vrot.lane.b32.xlu0 %v3489, 112
        %v3529 = vpop.permute.xlu0 %3528
        %3530 = vrot.lane.b32.xlu0 %v3490, 112
        %v3531 = vpop.permute.xlu0 %3530
        %3532 = vrot.lane.b32.xlu0 %v3491, 112
        %v3533 = vpop.permute.xlu0 %3532
        %3534 = vrot.lane.b32.xlu0 %v3492, 112
        %v3535 = vpop.permute.xlu0 %3534
        %3536 = vrot.lane.b32.xlu0 %v3493, 112
        %v3537 = vpop.permute.xlu0 %3536
        %3538 = vrot.lane.b32.xlu0 %v3494, 112
        %v3539 = vpop.permute.xlu0 %3538
        %3540 = vrot.lane.b32.xlu0 %v3495, 112
        %v3541 = vpop.permute.xlu0 %3540
        %3542 = vrot.lane.b32.xlu0 %v3496, 112
        %v3543 = vpop.permute.xlu0 %3542
        %3544 = vrot.lane.b32.xlu0 %v3497, 112
        %v3545 = vpop.permute.xlu0 %3544
        %v3562 = vadd.f32 %v3458, %v3515
        %v3563 = vadd.f32 %v3459, %v3517
        %v3564 = vadd.f32 %v3460, %v3519
        %v3565 = vadd.f32 %v3461, %v3521
        %v3566 = vadd.f32 %v3462, %v3523
        %v3567 = vadd.f32 %v3463, %v3525
        %v3568 = vadd.f32 %v3464, %v3527
        %v3569 = vadd.f32 %v3465, %v3529
        %v3570 = vadd.f32 %v3466, %v3531
        %v3571 = vadd.f32 %v3467, %v3533
        %v3572 = vadd.f32 %v3468, %v3535
        %v3573 = vadd.f32 %v3469, %v3537
        %v3574 = vadd.f32 %v3470, %v3539
        %v3575 = vadd.f32 %v3471, %v3541
        %v3576 = vadd.f32 %v3472, %v3543
        %v3577 = vadd.f32 %v3473, %v3545
        %v3578 = vld [vmem:[%s3317 + $0x1] sm:$0xff]
        %v3579 = vld [vmem:[%s3317 + $0x11] sm:$0xff]
        %v3580 = vld [vmem:[%s3317 + $0x21] sm:$0xff]
        %v3581 = vld [vmem:[%s3317 + $0x31] sm:$0xff]
        %v3582 = vld [vmem:[%s3317 + $0x41] sm:$0xff]
        %v3583 = vld [vmem:[%s3317 + $0x51] sm:$0xff]
        %v3584 = vld [vmem:[%s3317 + $0x61] sm:$0xff]
        %v3585 = vld [vmem:[%s3317 + $0x71] sm:$0xff]
        %v3586 = vld [vmem:[%s3317 + $0x81] sm:$0xff]
        %v3587 = vld [vmem:[%s3317 + $0x91] sm:$0xff]
        %v3588 = vld [vmem:[%s3317 + $0xa1] sm:$0xff]
        %v3589 = vld [vmem:[%s3317 + $0xb1] sm:$0xff]
        %v3590 = vld [vmem:[%s3317 + $0xc1] sm:$0xff]
        %v3591 = vld [vmem:[%s3317 + $0xd1] sm:$0xff]
        %v3592 = vld [vmem:[%s3317 + $0xe1] sm:$0xff]
        %v3593 = vld [vmem:[%s3317 + $0xf1] sm:$0xff]
        %v3594 = vlaneseq
        %v3595 = vshrl.u32 %v3594, 7
        %v3596 = vsub.s32 5, %v3595
        %v3597 = vrot.slane %v1755, %v3596
        %v3598 = vmul.f32 %v3578, %v3597
        %v3599 = vmul.f32 %v3579, %v3597
        %v3600 = vmul.f32 %v3580, %v3597
        %v3601 = vmul.f32 %v3581, %v3597
        %v3602 = vmul.f32 %v3582, %v3597
        %v3603 = vmul.f32 %v3583, %v3597
        %v3604 = vmul.f32 %v3584, %v3597
        %v3605 = vmul.f32 %v3585, %v3597
        %v3606 = vmul.f32 %v3586, %v3597
        %v3607 = vmul.f32 %v3587, %v3597
        %v3608 = vmul.f32 %v3588, %v3597
        %v3609 = vmul.f32 %v3589, %v3597
        %v3610 = vmul.f32 %v3590, %v3597
        %v3611 = vmul.f32 %v3591, %v3597
        %v3612 = vmul.f32 %v3592, %v3597
        %v3613 = vmul.f32 %v3593, %v3597
        %v3614 = vadd.f32 %v3562, %v3598
        %v3615 = vadd.f32 %v3563, %v3599
        %v3616 = vadd.f32 %v3564, %v3600
        %v3617 = vadd.f32 %v3565, %v3601
        %v3618 = vadd.f32 %v3566, %v3602
        %v3619 = vadd.f32 %v3567, %v3603
        %v3620 = vadd.f32 %v3568, %v3604
        %v3621 = vadd.f32 %v3569, %v3605
        %v3622 = vadd.f32 %v3570, %v3606
        %v3623 = vadd.f32 %v3571, %v3607
        %v3624 = vadd.f32 %v3572, %v3608
        %v3625 = vadd.f32 %v3573, %v3609
        %v3626 = vadd.f32 %v3574, %v3610
        %v3627 = vadd.f32 %v3575, %v3611
        %v3628 = vadd.f32 %v3576, %v3612
        %v3629 = vadd.f32 %v3577, %v3613
        %v3630 = vlaneseq
        %v3631 = vshrl.u32 %v3630, 7
        %v3632 = vsub.s32 6, %v3631
        %v3633 = vrot.slane %v1755, %v3632
        %3635 = vrot.lane.b32.xlu0 %v3633, 8
        %v3636 = vpop.permute.xlu0 %3635
        %v3638 = vmul.f32 %v3578, %v3636
        %v3639 = vmul.f32 %v3579, %v3636
        %v3640 = vmul.f32 %v3580, %v3636
        %v3641 = vmul.f32 %v3581, %v3636
        %v3642 = vmul.f32 %v3582, %v3636
        %v3643 = vmul.f32 %v3583, %v3636
        %v3644 = vmul.f32 %v3584, %v3636
        %v3645 = vmul.f32 %v3585, %v3636
        %v3646 = vmul.f32 %v3586, %v3636
        %v3647 = vmul.f32 %v3587, %v3636
        %v3648 = vmul.f32 %v3588, %v3636
        %v3649 = vmul.f32 %v3589, %v3636
        %v3650 = vmul.f32 %v3590, %v3636
        %v3651 = vmul.f32 %v3591, %v3636
        %v3652 = vmul.f32 %v3592, %v3636
        %v3653 = vmul.f32 %v3593, %v3636
        %3670 = vrot.lane.b32.xlu0 %v3638, 120
        %v3671 = vpop.permute.xlu0 %3670
        %3672 = vrot.lane.b32.xlu0 %v3639, 120
        %v3673 = vpop.permute.xlu0 %3672
        %3674 = vrot.lane.b32.xlu0 %v3640, 120
        %v3675 = vpop.permute.xlu0 %3674
        %3676 = vrot.lane.b32.xlu0 %v3641, 120
        %v3677 = vpop.permute.xlu0 %3676
        %3678 = vrot.lane.b32.xlu0 %v3642, 120
        %v3679 = vpop.permute.xlu0 %3678
        %3680 = vrot.lane.b32.xlu0 %v3643, 120
        %v3681 = vpop.permute.xlu0 %3680
        %3682 = vrot.lane.b32.xlu0 %v3644, 120
        %v3683 = vpop.permute.xlu0 %3682
        %3684 = vrot.lane.b32.xlu0 %v3645, 120
        %v3685 = vpop.permute.xlu0 %3684
        %3686 = vrot.lane.b32.xlu0 %v3646, 120
        %v3687 = vpop.permute.xlu0 %3686
        %3688 = vrot.lane.b32.xlu0 %v3647, 120
        %v3689 = vpop.permute.xlu0 %3688
        %3690 = vrot.lane.b32.xlu0 %v3648, 120
        %v3691 = vpop.permute.xlu0 %3690
        %3692 = vrot.lane.b32.xlu0 %v3649, 120
        %v3693 = vpop.permute.xlu0 %3692
        %3694 = vrot.lane.b32.xlu0 %v3650, 120
        %v3695 = vpop.permute.xlu0 %3694
        %3696 = vrot.lane.b32.xlu0 %v3651, 120
        %v3697 = vpop.permute.xlu0 %3696
        %3698 = vrot.lane.b32.xlu0 %v3652, 120
        %v3699 = vpop.permute.xlu0 %3698
        %3700 = vrot.lane.b32.xlu0 %v3653, 120
        %v3701 = vpop.permute.xlu0 %3700
        %v3718 = vadd.f32 %v3614, %v3671
        %v3719 = vadd.f32 %v3615, %v3673
        %v3720 = vadd.f32 %v3616, %v3675
        %v3721 = vadd.f32 %v3617, %v3677
        %v3722 = vadd.f32 %v3618, %v3679
        %v3723 = vadd.f32 %v3619, %v3681
        %v3724 = vadd.f32 %v3620, %v3683
        %v3725 = vadd.f32 %v3621, %v3685
        %v3726 = vadd.f32 %v3622, %v3687
        %v3727 = vadd.f32 %v3623, %v3689
        %v3728 = vadd.f32 %v3624, %v3691
        %v3729 = vadd.f32 %v3625, %v3693
        %v3730 = vadd.f32 %v3626, %v3695
        %v3731 = vadd.f32 %v3627, %v3697
        %v3732 = vadd.f32 %v3628, %v3699
        %v3733 = vadd.f32 %v3629, %v3701
        %v3734 = vlaneseq
        %v3735 = vshrl.u32 %v3734, 7
        %v3736 = vsub.s32 7, %v3735
        %v3737 = vrot.slane %v1755, %v3736
        %3739 = vrot.lane.b32.xlu0 %v3737, 16
        %v3740 = vpop.permute.xlu0 %3739
        %v3742 = vmul.f32 %v3578, %v3740
        %v3743 = vmul.f32 %v3579, %v3740
        %v3744 = vmul.f32 %v3580, %v3740
        %v3745 = vmul.f32 %v3581, %v3740
        %v3746 = vmul.f32 %v3582, %v3740
        %v3747 = vmul.f32 %v3583, %v3740
        %v3748 = vmul.f32 %v3584, %v3740
        %v3749 = vmul.f32 %v3585, %v3740
        %v3750 = vmul.f32 %v3586, %v3740
        %v3751 = vmul.f32 %v3587, %v3740
        %v3752 = vmul.f32 %v3588, %v3740
        %v3753 = vmul.f32 %v3589, %v3740
        %v3754 = vmul.f32 %v3590, %v3740
        %v3755 = vmul.f32 %v3591, %v3740
        %v3756 = vmul.f32 %v3592, %v3740
        %v3757 = vmul.f32 %v3593, %v3740
        %3774 = vrot.lane.b32.xlu0 %v3742, 112
        %v3775 = vpop.permute.xlu0 %3774
        %3776 = vrot.lane.b32.xlu0 %v3743, 112
        %v3777 = vpop.permute.xlu0 %3776
        %3778 = vrot.lane.b32.xlu0 %v3744, 112
        %v3779 = vpop.permute.xlu0 %3778
        %3780 = vrot.lane.b32.xlu0 %v3745, 112
        %v3781 = vpop.permute.xlu0 %3780
        %3782 = vrot.lane.b32.xlu0 %v3746, 112
        %v3783 = vpop.permute.xlu0 %3782
        %3784 = vrot.lane.b32.xlu0 %v3747, 112
        %v3785 = vpop.permute.xlu0 %3784
        %3786 = vrot.lane.b32.xlu0 %v3748, 112
        %v3787 = vpop.permute.xlu0 %3786
        %3788 = vrot.lane.b32.xlu0 %v3749, 112
        %v3789 = vpop.permute.xlu0 %3788
        %3790 = vrot.lane.b32.xlu0 %v3750, 112
        %v3791 = vpop.permute.xlu0 %3790
        %3792 = vrot.lane.b32.xlu0 %v3751, 112
        %v3793 = vpop.permute.xlu0 %3792
        %3794 = vrot.lane.b32.xlu0 %v3752, 112
        %v3795 = vpop.permute.xlu0 %3794
        %3796 = vrot.lane.b32.xlu0 %v3753, 112
        %v3797 = vpop.permute.xlu0 %3796
        %3798 = vrot.lane.b32.xlu0 %v3754, 112
        %v3799 = vpop.permute.xlu0 %3798
        %3800 = vrot.lane.b32.xlu0 %v3755, 112
        %v3801 = vpop.permute.xlu0 %3800
        %3802 = vrot.lane.b32.xlu0 %v3756, 112
        %v3803 = vpop.permute.xlu0 %3802
        %3804 = vrot.lane.b32.xlu0 %v3757, 112
        %v3805 = vpop.permute.xlu0 %3804
        %v3822 = vadd.f32 %v3718, %v3775
        %v3823 = vadd.f32 %v3719, %v3777
        %v3824 = vadd.f32 %v3720, %v3779
        %v3825 = vadd.f32 %v3721, %v3781
        %v3826 = vadd.f32 %v3722, %v3783
        %v3827 = vadd.f32 %v3723, %v3785
        %v3828 = vadd.f32 %v3724, %v3787
        %v3829 = vadd.f32 %v3725, %v3789
        %v3830 = vadd.f32 %v3726, %v3791
        %v3831 = vadd.f32 %v3727, %v3793
        %v3832 = vadd.f32 %v3728, %v3795
        %v3833 = vadd.f32 %v3729, %v3797
        %v3834 = vadd.f32 %v3730, %v3799
        %v3835 = vadd.f32 %v3731, %v3801
        %v3836 = vadd.f32 %v3732, %v3803
        %v3837 = vadd.f32 %v3733, %v3805
        %v3838 = vld [vmem:[%s3317 + $0x2] sm:$0xff]
        %v3839 = vld [vmem:[%s3317 + $0x12] sm:$0xff]
        %v3840 = vld [vmem:[%s3317 + $0x22] sm:$0xff]
        %v3841 = vld [vmem:[%s3317 + $0x32] sm:$0xff]
        %v3842 = vld [vmem:[%s3317 + $0x42] sm:$0xff]
        %v3843 = vld [vmem:[%s3317 + $0x52] sm:$0xff]
        %v3844 = vld [vmem:[%s3317 + $0x62] sm:$0xff]
        %v3845 = vld [vmem:[%s3317 + $0x72] sm:$0xff]
        %v3846 = vld [vmem:[%s3317 + $0x82] sm:$0xff]
        %v3847 = vld [vmem:[%s3317 + $0x92] sm:$0xff]
        %v3848 = vld [vmem:[%s3317 + $0xa2] sm:$0xff]
        %v3849 = vld [vmem:[%s3317 + $0xb2] sm:$0xff]
        %v3850 = vld [vmem:[%s3317 + $0xc2] sm:$0xff]
        %v3851 = vld [vmem:[%s3317 + $0xd2] sm:$0xff]
        %v3852 = vld [vmem:[%s3317 + $0xe2] sm:$0xff]
        %v3853 = vld [vmem:[%s3317 + $0xf2] sm:$0xff]
        %v3854 = vlaneseq
        %v3855 = vshrl.u32 %v3854, 7
        %v3856 = vsub.s32 0, %v3855
        %v3857 = vrot.slane %v1756, %v3856
        %v3858 = vmul.f32 %v3838, %v3857
        %v3859 = vmul.f32 %v3839, %v3857
        %v3860 = vmul.f32 %v3840, %v3857
        %v3861 = vmul.f32 %v3841, %v3857
        %v3862 = vmul.f32 %v3842, %v3857
        %v3863 = vmul.f32 %v3843, %v3857
        %v3864 = vmul.f32 %v3844, %v3857
        %v3865 = vmul.f32 %v3845, %v3857
        %v3866 = vmul.f32 %v3846, %v3857
        %v3867 = vmul.f32 %v3847, %v3857
        %v3868 = vmul.f32 %v3848, %v3857
        %v3869 = vmul.f32 %v3849, %v3857
        %v3870 = vmul.f32 %v3850, %v3857
        %v3871 = vmul.f32 %v3851, %v3857
        %v3872 = vmul.f32 %v3852, %v3857
        %v3873 = vmul.f32 %v3853, %v3857
        %v3874 = vadd.f32 %v3822, %v3858
        %v3875 = vadd.f32 %v3823, %v3859
        %v3876 = vadd.f32 %v3824, %v3860
        %v3877 = vadd.f32 %v3825, %v3861
        %v3878 = vadd.f32 %v3826, %v3862
        %v3879 = vadd.f32 %v3827, %v3863
        %v3880 = vadd.f32 %v3828, %v3864
        %v3881 = vadd.f32 %v3829, %v3865
        %v3882 = vadd.f32 %v3830, %v3866
        %v3883 = vadd.f32 %v3831, %v3867
        %v3884 = vadd.f32 %v3832, %v3868
        %v3885 = vadd.f32 %v3833, %v3869
        %v3886 = vadd.f32 %v3834, %v3870
        %v3887 = vadd.f32 %v3835, %v3871
        %v3888 = vadd.f32 %v3836, %v3872
        %v3889 = vadd.f32 %v3837, %v3873
        %v3890 = vlaneseq
        %v3891 = vshrl.u32 %v3890, 7
        %v3892 = vsub.s32 1, %v3891
        %v3893 = vrot.slane %v1756, %v3892
        %3895 = vrot.lane.b32.xlu0 %v3893, 8
        %v3896 = vpop.permute.xlu0 %3895
        %v3898 = vmul.f32 %v3838, %v3896
        %v3899 = vmul.f32 %v3839, %v3896
        %v3900 = vmul.f32 %v3840, %v3896
        %v3901 = vmul.f32 %v3841, %v3896
        %v3902 = vmul.f32 %v3842, %v3896
        %v3903 = vmul.f32 %v3843, %v3896
        %v3904 = vmul.f32 %v3844, %v3896
        %v3905 = vmul.f32 %v3845, %v3896
        %v3906 = vmul.f32 %v3846, %v3896
        %v3907 = vmul.f32 %v3847, %v3896
        %v3908 = vmul.f32 %v3848, %v3896
        %v3909 = vmul.f32 %v3849, %v3896
        %v3910 = vmul.f32 %v3850, %v3896
        %v3911 = vmul.f32 %v3851, %v3896
        %v3912 = vmul.f32 %v3852, %v3896
        %v3913 = vmul.f32 %v3853, %v3896
        %3930 = vrot.lane.b32.xlu0 %v3898, 120
        %v3931 = vpop.permute.xlu0 %3930
        %3932 = vrot.lane.b32.xlu0 %v3899, 120
        %v3933 = vpop.permute.xlu0 %3932
        %3934 = vrot.lane.b32.xlu0 %v3900, 120
        %v3935 = vpop.permute.xlu0 %3934
        %3936 = vrot.lane.b32.xlu0 %v3901, 120
        %v3937 = vpop.permute.xlu0 %3936
        %3938 = vrot.lane.b32.xlu0 %v3902, 120
        %v3939 = vpop.permute.xlu0 %3938
        %3940 = vrot.lane.b32.xlu0 %v3903, 120
        %v3941 = vpop.permute.xlu0 %3940
        %3942 = vrot.lane.b32.xlu0 %v3904, 120
        %v3943 = vpop.permute.xlu0 %3942
        %3944 = vrot.lane.b32.xlu0 %v3905, 120
        %v3945 = vpop.permute.xlu0 %3944
        %3946 = vrot.lane.b32.xlu0 %v3906, 120
        %v3947 = vpop.permute.xlu0 %3946
        %3948 = vrot.lane.b32.xlu0 %v3907, 120
        %v3949 = vpop.permute.xlu0 %3948
        %3950 = vrot.lane.b32.xlu0 %v3908, 120
        %v3951 = vpop.permute.xlu0 %3950
        %3952 = vrot.lane.b32.xlu0 %v3909, 120
        %v3953 = vpop.permute.xlu0 %3952
        %3954 = vrot.lane.b32.xlu0 %v3910, 120
        %v3955 = vpop.permute.xlu0 %3954
        %3956 = vrot.lane.b32.xlu0 %v3911, 120
        %v3957 = vpop.permute.xlu0 %3956
        %3958 = vrot.lane.b32.xlu0 %v3912, 120
        %v3959 = vpop.permute.xlu0 %3958
        %3960 = vrot.lane.b32.xlu0 %v3913, 120
        %v3961 = vpop.permute.xlu0 %3960
        %v3978 = vadd.f32 %v3874, %v3931
        %v3979 = vadd.f32 %v3875, %v3933
        %v3980 = vadd.f32 %v3876, %v3935
        %v3981 = vadd.f32 %v3877, %v3937
        %v3982 = vadd.f32 %v3878, %v3939
        %v3983 = vadd.f32 %v3879, %v3941
        %v3984 = vadd.f32 %v3880, %v3943
        %v3985 = vadd.f32 %v3881, %v3945
        %v3986 = vadd.f32 %v3882, %v3947
        %v3987 = vadd.f32 %v3883, %v3949
        %v3988 = vadd.f32 %v3884, %v3951
        %v3989 = vadd.f32 %v3885, %v3953
        %v3990 = vadd.f32 %v3886, %v3955
        %v3991 = vadd.f32 %v3887, %v3957
        %v3992 = vadd.f32 %v3888, %v3959
        %v3993 = vadd.f32 %v3889, %v3961
        %v3994 = vlaneseq
        %v3995 = vshrl.u32 %v3994, 7
        %v3996 = vsub.s32 2, %v3995
        %v3997 = vrot.slane %v1756, %v3996
        %3999 = vrot.lane.b32.xlu0 %v3997, 16
        %v4000 = vpop.permute.xlu0 %3999
        %v4002 = vmul.f32 %v3838, %v4000
        %v4003 = vmul.f32 %v3839, %v4000
        %v4004 = vmul.f32 %v3840, %v4000
        %v4005 = vmul.f32 %v3841, %v4000
        %v4006 = vmul.f32 %v3842, %v4000
        %v4007 = vmul.f32 %v3843, %v4000
        %v4008 = vmul.f32 %v3844, %v4000
        %v4009 = vmul.f32 %v3845, %v4000
        %v4010 = vmul.f32 %v3846, %v4000
        %v4011 = vmul.f32 %v3847, %v4000
        %v4012 = vmul.f32 %v3848, %v4000
        %v4013 = vmul.f32 %v3849, %v4000
        %v4014 = vmul.f32 %v3850, %v4000
        %v4015 = vmul.f32 %v3851, %v4000
        %v4016 = vmul.f32 %v3852, %v4000
        %v4017 = vmul.f32 %v3853, %v4000
        %4034 = vrot.lane.b32.xlu0 %v4002, 112
        %v4035 = vpop.permute.xlu0 %4034
        %4036 = vrot.lane.b32.xlu0 %v4003, 112
        %v4037 = vpop.permute.xlu0 %4036
        %4038 = vrot.lane.b32.xlu0 %v4004, 112
        %v4039 = vpop.permute.xlu0 %4038
        %4040 = vrot.lane.b32.xlu0 %v4005, 112
        %v4041 = vpop.permute.xlu0 %4040
        %4042 = vrot.lane.b32.xlu0 %v4006, 112
        %v4043 = vpop.permute.xlu0 %4042
        %4044 = vrot.lane.b32.xlu0 %v4007, 112
        %v4045 = vpop.permute.xlu0 %4044
        %4046 = vrot.lane.b32.xlu0 %v4008, 112
        %v4047 = vpop.permute.xlu0 %4046
        %4048 = vrot.lane.b32.xlu0 %v4009, 112
        %v4049 = vpop.permute.xlu0 %4048
        %4050 = vrot.lane.b32.xlu0 %v4010, 112
        %v4051 = vpop.permute.xlu0 %4050
        %4052 = vrot.lane.b32.xlu0 %v4011, 112
        %v4053 = vpop.permute.xlu0 %4052
        %4054 = vrot.lane.b32.xlu0 %v4012, 112
        %v4055 = vpop.permute.xlu0 %4054
        %4056 = vrot.lane.b32.xlu0 %v4013, 112
        %v4057 = vpop.permute.xlu0 %4056
        %4058 = vrot.lane.b32.xlu0 %v4014, 112
        %v4059 = vpop.permute.xlu0 %4058
        %4060 = vrot.lane.b32.xlu0 %v4015, 112
        %v4061 = vpop.permute.xlu0 %4060
        %4062 = vrot.lane.b32.xlu0 %v4016, 112
        %v4063 = vpop.permute.xlu0 %4062
        %4064 = vrot.lane.b32.xlu0 %v4017, 112
        %v4065 = vpop.permute.xlu0 %4064
        %v4082 = vadd.f32 %v3978, %v4035
        %v4083 = vadd.f32 %v3979, %v4037
        %v4084 = vadd.f32 %v3980, %v4039
        %v4085 = vadd.f32 %v3981, %v4041
        %v4086 = vadd.f32 %v3982, %v4043
        %v4087 = vadd.f32 %v3983, %v4045
        %v4088 = vadd.f32 %v3984, %v4047
        %v4089 = vadd.f32 %v3985, %v4049
        %v4090 = vadd.f32 %v3986, %v4051
        %v4091 = vadd.f32 %v3987, %v4053
        %v4092 = vadd.f32 %v3988, %v4055
        %v4093 = vadd.f32 %v3989, %v4057
        %v4094 = vadd.f32 %v3990, %v4059
        %v4095 = vadd.f32 %v3991, %v4061
        %v4096 = vadd.f32 %v3992, %v4063
        %v4097 = vadd.f32 %v3993, %v4065
        %v4098 = vld [vmem:[%s4] sm:$0x1]
        %v4100 = vlaneseq
        %v4101 = vshrl.u32 %v4100, 7
        %v4102 = vsub.s32 0, %v4101
        %v4103 = vrot.slane %v4098, %v4102
        %v4105 = vadd.f32 %v4082, %v4103
        %v4106 = vadd.f32 %v4083, %v4103
        %v4107 = vadd.f32 %v4084, %v4103
        %v4108 = vadd.f32 %v4085, %v4103
        %v4109 = vadd.f32 %v4086, %v4103
        %v4110 = vadd.f32 %v4087, %v4103
        %v4111 = vadd.f32 %v4088, %v4103
        %v4112 = vadd.f32 %v4089, %v4103
        %v4113 = vadd.f32 %v4090, %v4103
        %v4114 = vadd.f32 %v4091, %v4103
        %v4115 = vadd.f32 %v4092, %v4103
        %v4116 = vadd.f32 %v4093, %v4103
        %v4117 = vadd.f32 %v4094, %v4103
        %v4118 = vadd.f32 %v4095, %v4103
        %v4119 = vadd.f32 %v4096, %v4103
        %v4120 = vadd.f32 %v4097, %v4103
        %v4121 = vmax.f32 %v4105, 0.0
        %v4122 = vmax.f32 %v4106, 0.0
        %v4123 = vmax.f32 %v4107, 0.0
        %v4124 = vmax.f32 %v4108, 0.0
        %v4125 = vmax.f32 %v4109, 0.0
        %v4126 = vmax.f32 %v4110, 0.0
        %v4127 = vmax.f32 %v4111, 0.0
        %v4128 = vmax.f32 %v4112, 0.0
        %v4129 = vmax.f32 %v4113, 0.0
        %v4130 = vmax.f32 %v4114, 0.0
        %v4131 = vmax.f32 %v4115, 0.0
        %v4132 = vmax.f32 %v4116, 0.0
        %v4133 = vmax.f32 %v4117, 0.0
        %v4134 = vmax.f32 %v4118, 0.0
        %v4135 = vmax.f32 %v4119, 0.0
        %v4136 = vmax.f32 %v4120, 0.0
        %v4137 = vmin.f32 %v4121, 6.0
        %v4138 = vmin.f32 %v4122, 6.0
        %v4139 = vmin.f32 %v4123, 6.0
        %v4140 = vmin.f32 %v4124, 6.0
        %v4141 = vmin.f32 %v4125, 6.0
        %v4142 = vmin.f32 %v4126, 6.0
        %v4143 = vmin.f32 %v4127, 6.0
        %v4144 = vmin.f32 %v4128, 6.0
        %v4145 = vmin.f32 %v4129, 6.0
        %v4146 = vmin.f32 %v4130, 6.0
        %v4147 = vmin.f32 %v4131, 6.0
        %v4148 = vmin.f32 %v4132, 6.0
        %v4149 = vmin.f32 %v4133, 6.0
        %v4150 = vmin.f32 %v4134, 6.0
        %v4151 = vmin.f32 %v4135, 6.0
        %v4152 = vmin.f32 %v4136, 6.0
        %v4153 = vld [vmem:[%s5] sm:$0xff]
        %v4154 = vld [vmem:[%s5 + $0x8] sm:$0xff]
        %v4155 = vld [vmem:[%s5 + $0x10] sm:$0xff]
        %v4156 = vld [vmem:[%s5 + $0x18] sm:$0xff]
        %v4157 = vld [vmem:[%s5 + $0x20] sm:$0xff]
        %v4158 = vld [vmem:[%s5 + $0x28] sm:$0xff]
        %v4159 = vld [vmem:[%s5 + $0x30] sm:$0xff]
        %v4160 = vld [vmem:[%s5 + $0x38] sm:$0xff]
        %v4161 = vld [vmem:[%s6] sm:$0x1]
        %v4163 = vlaneseq
        %v4164 = vshrl.u32 %v4163, 7
        %v4165 = vsub.s32 0, %v4164
        %v4166 = vrot.slane %v4161, %v4165
        %vm4168 = vcmask 523264
        %v4170 = vsel %vm4168, %v4137, 0
        %v4173 = vsel %vm4168, %v4138, 0
        %v4176 = vsel %vm4168, %v4139, 0
        %v4179 = vsel %vm4168, %v4140, 0
        %v4182 = vsel %vm4168, %v4141, 0
        %v4185 = vsel %vm4168, %v4142, 0
        %v4188 = vsel %vm4168, %v4143, 0
        %v4191 = vsel %vm4168, %v4144, 0
        %v4194 = vsel %vm4168, %v4145, 0
        %v4197 = vsel %vm4168, %v4146, 0
        %v4200 = vsel %vm4168, %v4147, 0
        %v4203 = vsel %vm4168, %v4148, 0
        %v4206 = vsel %vm4168, %v4149, 0
        %v4209 = vsel %vm4168, %v4150, 0
        %v4212 = vsel %vm4168, %v4151, 0
        %v4215 = vsel %vm4168, %v4152, 0
        %4217 = vmatprep.subr.mxu0 0.0
        %v4218 = vand.u32 %v4153, 4294901760
        %4219 = vmatpush1.msra.mxu0 %v4218
        %4220 = vmatprep.subr.mxu0 0.0
        %v4221 = vand.u32 %v4154, 4294901760
        %4222 = vmatpush1.msra.mxu0 %v4221
        %4223 = vmatprep.subr.mxu0 0.0
        %v4224 = vand.u32 %v4155, 4294901760
        %4225 = vmatpush1.msra.mxu0 %v4224
        %4226 = vmatprep.subr.mxu0 0.0
        %v4227 = vand.u32 %v4156, 4294901760
        %4228 = vmatpush1.msra.mxu0 %v4227
        %4229 = vmatprep.subr.mxu0 0.0
        %v4230 = vand.u32 %v4157, 4294901760
        %4231 = vmatpush1.msra.mxu0 %v4230
        %4232 = vmatprep.subr.mxu0 0.0
        %v4233 = vand.u32 %v4158, 4294901760
        %4234 = vmatpush1.msra.mxu0 %v4233
        %4235 = vmatprep.subr.mxu0 0.0
        %v4236 = vand.u32 %v4159, 4294901760
        %4237 = vmatpush1.msra.mxu0 %v4236
        %4238 = vmatprep.subr.mxu0 0.0
        %v4239 = vand.u32 %v4160, 4294901760
        %4240 = vmatpush1.msra.mxu0 %v4239
        %4241 = vmatprep.subr.mxu0 0.0
        %4242 = vmatpush1.msra.mxu0 0.0
        %4243 = vmatprep.subr.mxu0 0.0
        %4244 = vmatpush1.msra.mxu0 0.0
        %4245 = vmatprep.subr.mxu0 0.0
        %4246 = vmatpush1.msra.mxu0 0.0
        %4247 = vmatprep.subr.mxu0 0.0
        %4248 = vmatpush1.msra.mxu0 0.0
        %4249 = vmatprep.subr.mxu0 0.0
        %4250 = vmatpush1.msra.mxu0 0.0
        %4251 = vmatprep.subr.mxu0 0.0
        %4252 = vmatpush1.msra.mxu0 0.0
        %4253 = vmatprep.subr.mxu0 0.0
        %4254 = vmatpush1.msra.mxu0 0.0
        %4255 = vmatprep.subr.mxu0 0.0
        %4256 = vmatpush1.msra.mxu0 0.0
        %4257 = vmatprep.subr.mxu0 0.0
        %4258 = vmatpush1.msra.mxu0 0.0
        %4259 = vmatprep.subr.mxu0 0.0
        %4260 = vmatpush1.msra.mxu0 0.0
        %4261 = vmatprep.subr.mxu0 0.0
        %4262 = vmatpush1.msra.mxu0 0.0
        %4263 = vmatprep.subr.mxu0 0.0
        %4264 = vmatpush1.msra.mxu0 0.0
        %4265 = vmatprep.subr.mxu0 0.0
        %4266 = vmatpush1.msra.mxu0 0.0
        %4267 = vmatprep.subr.mxu0 0.0
        %4268 = vmatpush1.msra.mxu0 0.0
        %4269 = vmatprep.subr.mxu0 0.0
        %4270 = vmatpush1.msra.mxu0 0.0
        %4271 = vmatprep.subr.mxu0 0.0
        %4272 = vmatpush1.msra.mxu0 0.0
        %4273 = vmatprep.subr.mxu0 0.0
        %4274 = vmatpush1.msra.mxu0 0.0
        %4275 = vmatprep.subr.mxu0 0.0
        %4276 = vmatpush1.msra.mxu0 0.0
        %4277 = vmatprep.subr.mxu0 0.0
        %4278 = vmatpush1.msra.mxu0 0.0
        %4279 = vmatprep.subr.mxu0 0.0
        %4280 = vmatpush1.msra.mxu0 0.0
        %4281 = vmatprep.subr.mxu0 0.0
        %4282 = vmatpush1.msra.mxu0 0.0
        %4283 = vmatprep.subr.mxu0 0.0
        %4284 = vmatpush1.msra.mxu0 0.0
        %4285 = vmatprep.subr.mxu0 0.0
        %4286 = vmatpush1.msra.mxu0 0.0
        %4287 = vmatprep.subr.mxu0 0.0
        %4288 = vmatpush1.msra.mxu0 0.0
        %4289 = vmatprep.mubr.f32.mxu0 0.0
        %v4290 = vand.u32 %v4170, 4294901760
        %v4291 = vsub.f32 %v4170, %v4290
        %v4292 = vand.u32 %v4291, 4294901760
        %v4293 = vsub.f32 %v4291, %v4292
        %v4294 = vand.u32 %v4293, 4294901760
        %4295 = vmatmul.mubr.f32.gmra.mrb[0].mxu0 %v4294
        %v4296 = vpop.f32.mrb[0].mxu0
        %v4297 = vadd.f32 %v4166, %v4296
        %v4298 = vpop.f32.mrb[0].mxu0
        %4299 = vmatprep.mubr.f32.mxu0 0.0
        %v4300 = vand.u32 %v4173, 4294901760
        %v4301 = vsub.f32 %v4173, %v4300
        %v4302 = vand.u32 %v4301, 4294901760
        %v4303 = vsub.f32 %v4301, %v4302
        %v4304 = vand.u32 %v4303, 4294901760
        %4305 = vmatmul.mubr.f32.gmra.mrb[0].mxu0 %v4304
        %v4306 = vpop.f32.mrb[0].mxu0
        %v4307 = vadd.f32 %v4166, %v4306
        %v4308 = vpop.f32.mrb[0].mxu0
        %4309 = vmatprep.mubr.f32.mxu0 0.0
        %v4310 = vand.u32 %v4176, 4294901760
        %v4311 = vsub.f32 %v4176, %v4310
        %v4312 = vand.u32 %v4311, 4294901760
        %v4313 = vsub.f32 %v4311, %v4312
        %v4314 = vand.u32 %v4313, 4294901760
        %4315 = vmatmul.mubr.f32.gmra.mrb[0].mxu0 %v4314
        %v4316 = vpop.f32.mrb[0].mxu0
        %v4317 = vadd.f32 %v4166, %v4316
        %v4318 = vpop.f32.mrb[0].mxu0
        %4319 = vmatprep.mubr.f32.mxu0 0.0
        %v4320 = vand.u32 %v4179, 4294901760
        %v4321 = vsub.f32 %v4179, %v4320
        %v4322 = vand.u32 %v4321, 4294901760
        %v4323 = vsub.f32 %v4321, %v4322
        %v4324 = vand.u32 %v4323, 4294901760
        %4325 = vmatmul.mubr.f32.gmra.mrb[0].mxu0 %v4324
        %v4326 = vpop.f32.mrb[0].mxu0
        %v4327 = vadd.f32 %v4166, %v4326
        %v4328 = vpop.f32.mrb[0].mxu0
        %4329 = vmatprep.mubr.f32.mxu0 0.0
        %v4330 = vand.u32 %v4182, 4294901760
        %v4331 = vsub.f32 %v4182, %v4330
        %v4332 = vand.u32 %v4331, 4294901760
        %v4333 = vsub.f32 %v4331, %v4332
        %v4334 = vand.u32 %v4333, 4294901760
        %4335 = vmatmul.mubr.f32.gmra.mrb[0].mxu0 %v4334
        %v4336 = vpop.f32.mrb[0].mxu0
        %v4337 = vadd.f32 %v4166, %v4336
        %v4338 = vpop.f32.mrb[0].mxu0
        %4339 = vmatprep.mubr.f32.mxu0 0.0
        %v4340 = vand.u32 %v4185, 4294901760
        %v4341 = vsub.f32 %v4185, %v4340
        %v4342 = vand.u32 %v4341, 4294901760
        %v4343 = vsub.f32 %v4341, %v4342
        %v4344 = vand.u32 %v4343, 4294901760
        %4345 = vmatmul.mubr.f32.gmra.mrb[0].mxu0 %v4344
        %v4346 = vpop.f32.mrb[0].mxu0
        %v4347 = vadd.f32 %v4166, %v4346
        %v4348 = vpop.f32.mrb[0].mxu0
        %4349 = vmatprep.mubr.f32.mxu0 0.0
        %v4350 = vand.u32 %v4188, 4294901760
        %v4351 = vsub.f32 %v4188, %v4350
        %v4352 = vand.u32 %v4351, 4294901760
        %v4353 = vsub.f32 %v4351, %v4352
        %v4354 = vand.u32 %v4353, 4294901760
        %4355 = vmatmul.mubr.f32.gmra.mrb[0].mxu0 %v4354
        %v4356 = vpop.f32.mrb[0].mxu0
        %v4357 = vadd.f32 %v4166, %v4356
        %v4358 = vpop.f32.mrb[0].mxu0
        %4359 = vmatprep.mubr.f32.mxu0 0.0
        %v4360 = vand.u32 %v4191, 4294901760
        %v4361 = vsub.f32 %v4191, %v4360
        %v4362 = vand.u32 %v4361, 4294901760
        %v4363 = vsub.f32 %v4361, %v4362
        %v4364 = vand.u32 %v4363, 4294901760
        %4365 = vmatmul.mubr.f32.gmra.mrb[0].mxu0 %v4364
        %v4366 = vpop.f32.mrb[0].mxu0
        %v4367 = vadd.f32 %v4166, %v4366
        %v4368 = vpop.f32.mrb[0].mxu0
        %4369 = vmatprep.mubr.f32.mxu0 0.0
        %v4370 = vand.u32 %v4194, 4294901760
        %v4371 = vsub.f32 %v4194, %v4370
        %v4372 = vand.u32 %v4371, 4294901760
        %v4373 = vsub.f32 %v4371, %v4372
        %v4374 = vand.u32 %v4373, 4294901760
        %4375 = vmatmul.mubr.f32.gmra.mrb[0].mxu0 %v4374
        %v4376 = vpop.f32.mrb[0].mxu0
        %v4377 = vadd.f32 %v4166, %v4376
        %v4378 = vpop.f32.mrb[0].mxu0
        %4379 = vmatprep.mubr.f32.mxu0 0.0
        %v4380 = vand.u32 %v4197, 4294901760
        %v4381 = vsub.f32 %v4197, %v4380
        %v4382 = vand.u32 %v4381, 4294901760
        %v4383 = vsub.f32 %v4381, %v4382
        %v4384 = vand.u32 %v4383, 4294901760
        %4385 = vmatmul.mubr.f32.gmra.mrb[0].mxu0 %v4384
        %v4386 = vpop.f32.mrb[0].mxu0
        %v4387 = vadd.f32 %v4166, %v4386
        %v4388 = vpop.f32.mrb[0].mxu0
        %4389 = vmatprep.mubr.f32.mxu0 0.0
        %v4390 = vand.u32 %v4200, 4294901760
        %v4391 = vsub.f32 %v4200, %v4390
        %v4392 = vand.u32 %v4391, 4294901760
        %v4393 = vsub.f32 %v4391, %v4392
        %v4394 = vand.u32 %v4393, 4294901760
        %4395 = vmatmul.mubr.f32.gmra.mrb[0].mxu0 %v4394
        %v4396 = vpop.f32.mrb[0].mxu0
        %v4397 = vadd.f32 %v4166, %v4396
        %v4398 = vpop.f32.mrb[0].mxu0
        %4399 = vmatprep.mubr.f32.mxu0 0.0
        %v4400 = vand.u32 %v4203, 4294901760
        %v4401 = vsub.f32 %v4203, %v4400
        %v4402 = vand.u32 %v4401, 4294901760
        %v4403 = vsub.f32 %v4401, %v4402
        %v4404 = vand.u32 %v4403, 4294901760
        %4405 = vmatmul.mubr.f32.gmra.mrb[0].mxu0 %v4404
        %v4406 = vpop.f32.mrb[0].mxu0
        %v4407 = vadd.f32 %v4166, %v4406
        %v4408 = vpop.f32.mrb[0].mxu0
        %4409 = vmatprep.mubr.f32.mxu0 0.0
        %v4410 = vand.u32 %v4206, 4294901760
        %v4411 = vsub.f32 %v4206, %v4410
        %v4412 = vand.u32 %v4411, 4294901760
        %v4413 = vsub.f32 %v4411, %v4412
        %v4414 = vand.u32 %v4413, 4294901760
        %4415 = vmatmul.mubr.f32.gmra.mrb[0].mxu0 %v4414
        %v4416 = vpop.f32.mrb[0].mxu0
        %v4417 = vadd.f32 %v4166, %v4416
        %v4418 = vpop.f32.mrb[0].mxu0
        %4419 = vmatprep.mubr.f32.mxu0 0.0
        %v4420 = vand.u32 %v4209, 4294901760
        %v4421 = vsub.f32 %v4209, %v4420
        %v4422 = vand.u32 %v4421, 4294901760
        %v4423 = vsub.f32 %v4421, %v4422
        %v4424 = vand.u32 %v4423, 4294901760
        %4425 = vmatmul.mubr.f32.gmra.mrb[0].mxu0 %v4424
        %v4426 = vpop.f32.mrb[0].mxu0
        %v4427 = vadd.f32 %v4166, %v4426
        %v4428 = vpop.f32.mrb[0].mxu0
        %4429 = vmatprep.mubr.f32.mxu0 0.0
        %v4430 = vand.u32 %v4212, 4294901760
        %v4431 = vsub.f32 %v4212, %v4430
        %v4432 = vand.u32 %v4431, 4294901760
        %v4433 = vsub.f32 %v4431, %v4432
        %v4434 = vand.u32 %v4433, 4294901760
        %4435 = vmatmul.mubr.f32.gmra.mrb[0].mxu0 %v4434
        %v4436 = vpop.f32.mrb[0].mxu0
        %v4437 = vadd.f32 %v4166, %v4436
        %v4438 = vpop.f32.mrb[0].mxu0
        %4439 = vmatprep.mubr.f32.mxu0 0.0
        %v4440 = vand.u32 %v4215, 4294901760
        %v4441 = vsub.f32 %v4215, %v4440
        %v4442 = vand.u32 %v4441, 4294901760
        %v4443 = vsub.f32 %v4441, %v4442
        %v4444 = vand.u32 %v4443, 4294901760
        %4445 = vmatmul.mubr.f32.gmra.mrb[0].mxu0 %v4444
        %v4446 = vpop.f32.mrb[0].mxu0
        %v4447 = vadd.f32 %v4166, %v4446
        %v4448 = vpop.f32.mrb[0].mxu0
        %4449 = vdwg.mxu0
        %4450 = vmatprep.subr.mxu0 0.0
        %v4451 = vand.u32 %v4153, 4294901760
        %v4452 = vsub.f32 %v4153, %v4451
        %v4453 = vand.u32 %v4452, 4294901760
        %v4454 = vsub.f32 %v4452, %v4453
        %v4455 = vand.u32 %v4454, 4294901760
        %4456 = vmatpush1.msra.mxu0 %v4455
        %4457 = vmatprep.subr.mxu0 0.0
        %v4458 = vand.u32 %v4154, 4294901760
        %v4459 = vsub.f32 %v4154, %v4458
        %v4460 = vand.u32 %v4459, 4294901760
        %v4461 = vsub.f32 %v4459, %v4460
        %v4462 = vand.u32 %v4461, 4294901760
        %4463 = vmatpush1.msra.mxu0 %v4462
        %4464 = vmatprep.subr.mxu0 0.0
        %v4465 = vand.u32 %v4155, 4294901760
        %v4466 = vsub.f32 %v4155, %v4465
        %v4467 = vand.u32 %v4466, 4294901760
        %v4468 = vsub.f32 %v4466, %v4467
        %v4469 = vand.u32 %v4468, 4294901760
        %4470 = vmatpush1.msra.mxu0 %v4469
        %4471 = vmatprep.subr.mxu0 0.0
        %v4472 = vand.u32 %v4156, 4294901760
        %v4473 = vsub.f32 %v4156, %v4472
        %v4474 = vand.u32 %v4473, 4294901760
        %v4475 = vsub.f32 %v4473, %v4474
        %v4476 = vand.u32 %v4475, 4294901760
        %4477 = vmatpush1.msra.mxu0 %v4476
        %4478 = vmatprep.subr.mxu0 0.0
        %v4479 = vand.u32 %v4157, 4294901760
        %v4480 = vsub.f32 %v4157, %v4479
        %v4481 = vand.u32 %v4480, 4294901760
        %v4482 = vsub.f32 %v4480, %v4481
        %v4483 = vand.u32 %v4482, 4294901760
        %4484 = vmatpush1.msra.mxu0 %v4483
        %4485 = vmatprep.subr.mxu0 0.0
        %v4486 = vand.u32 %v4158, 4294901760
        %v4487 = vsub.f32 %v4158, %v4486
        %v4488 = vand.u32 %v4487, 4294901760
        %v4489 = vsub.f32 %v4487, %v4488
        %v4490 = vand.u32 %v4489, 4294901760
        %4491 = vmatpush1.msra.mxu0 %v4490
        %4492 = vmatprep.subr.mxu0 0.0
        %v4493 = vand.u32 %v4159, 4294901760
        %v4494 = vsub.f32 %v4159, %v4493
        %v4495 = vand.u32 %v4494, 4294901760
        %v4496 = vsub.f32 %v4494, %v4495
        %v4497 = vand.u32 %v4496, 4294901760
        %4498 = vmatpush1.msra.mxu0 %v4497
        %4499 = vmatprep.subr.mxu0 0.0
        %v4500 = vand.u32 %v4160, 4294901760
        %v4501 = vsub.f32 %v4160, %v4500
        %v4502 = vand.u32 %v4501, 4294901760
        %v4503 = vsub.f32 %v4501, %v4502
        %v4504 = vand.u32 %v4503, 4294901760
        %4505 = vmatpush1.msra.mxu0 %v4504
        %4506 = vmatprep.subr.mxu0 0.0
        %4507 = vmatpush1.msra.mxu0 0.0
        %4508 = vmatprep.subr.mxu0 0.0
        %4509 = vmatpush1.msra.mxu0 0.0
        %4510 = vmatprep.subr.mxu0 0.0
        %4511 = vmatpush1.msra.mxu0 0.0
        %4512 = vmatprep.subr.mxu0 0.0
        %4513 = vmatpush1.msra.mxu0 0.0
        %4514 = vmatprep.subr.mxu0 0.0
        %4515 = vmatpush1.msra.mxu0 0.0
        %4516 = vmatprep.subr.mxu0 0.0
        %4517 = vmatpush1.msra.mxu0 0.0
        %4518 = vmatprep.subr.mxu0 0.0
        %4519 = vmatpush1.msra.mxu0 0.0
        %4520 = vmatprep.subr.mxu0 0.0
        %4521 = vmatpush1.msra.mxu0 0.0
        %4522 = vmatprep.subr.mxu0 0.0
        %4523 = vmatpush1.msra.mxu0 0.0
        %4524 = vmatprep.subr.mxu0 0.0
        %4525 = vmatpush1.msra.mxu0 0.0
        %4526 = vmatprep.subr.mxu0 0.0
        %4527 = vmatpush1.msra.mxu0 0.0
        %4528 = vmatprep.subr.mxu0 0.0
        %4529 = vmatpush1.msra.mxu0 0.0
        %4530 = vmatprep.subr.mxu0 0.0
        %4531 = vmatpush1.msra.mxu0 0.0
        %4532 = vmatprep.subr.mxu0 0.0
        %4533 = vmatpush1.msra.mxu0 0.0
        %4534 = vmatprep.subr.mxu0 0.0
        %4535 = vmatpush1.msra.mxu0 0.0
        %4536 = vmatprep.subr.mxu0 0.0
        %4537 = vmatpush1.msra.mxu0 0.0
        %4538 = vmatprep.subr.mxu0 0.0
        %4539 = vmatpush1.msra.mxu0 0.0
        %4540 = vmatprep.subr.mxu0 0.0
        %4541 = vmatpush1.msra.mxu0 0.0
        %4542 = vmatprep.subr.mxu0 0.0
        %4543 = vmatpush1.msra.mxu0 0.0
        %4544 = vmatprep.subr.mxu0 0.0
        %4545 = vmatpush1.msra.mxu0 0.0
        %4546 = vmatprep.subr.mxu0 0.0
        %4547 = vmatpush1.msra.mxu0 0.0
        %4548 = vmatprep.subr.mxu0 0.0
        %4549 = vmatpush1.msra.mxu0 0.0
        %4550 = vmatprep.subr.mxu0 0.0
        %4551 = vmatpush1.msra.mxu0 0.0
        %4552 = vmatprep.subr.mxu0 0.0
        %4553 = vmatpush1.msra.mxu0 0.0
        %4554 = vmatprep.mubr.f32.mxu0 0.0
        %v4555 = vand.u32 %v4170, 4294901760
        %4556 = vmatmul.mubr.f32.gmra.mrb[0].mxu0 %v4555
        %v4557 = vpop.f32.mrb[0].mxu0
        %v4558 = vadd.f32 %v4297, %v4557
        %v4559 = vpop.f32.mrb[0].mxu0
        %4560 = vmatprep.mubr.f32.mxu0 0.0
        %v4561 = vand.u32 %v4173, 4294901760
        %4562 = vmatmul.mubr.f32.gmra.mrb[0].mxu0 %v4561
        %v4563 = vpop.f32.mrb[0].mxu0
        %v4564 = vadd.f32 %v4307, %v4563
        %v4565 = vpop.f32.mrb[0].mxu0
        %4566 = vmatprep.mubr.f32.mxu0 0.0
        %v4567 = vand.u32 %v4176, 4294901760
        %4568 = vmatmul.mubr.f32.gmra.mrb[0].mxu0 %v4567
        %v4569 = vpop.f32.mrb[0].mxu0
        %v4570 = vadd.f32 %v4317, %v4569
        %v4571 = vpop.f32.mrb[0].mxu0
        %4572 = vmatprep.mubr.f32.mxu0 0.0
        %v4573 = vand.u32 %v4179, 4294901760
        %4574 = vmatmul.mubr.f32.gmra.mrb[0].mxu0 %v4573
        %v4575 = vpop.f32.mrb[0].mxu0
        %v4576 = vadd.f32 %v4327, %v4575
        %v4577 = vpop.f32.mrb[0].mxu0
        %4578 = vmatprep.mubr.f32.mxu0 0.0
        %v4579 = vand.u32 %v4182, 4294901760
        %4580 = vmatmul.mubr.f32.gmra.mrb[0].mxu0 %v4579
        %v4581 = vpop.f32.mrb[0].mxu0
        %v4582 = vadd.f32 %v4337, %v4581
        %v4583 = vpop.f32.mrb[0].mxu0
        %4584 = vmatprep.mubr.f32.mxu0 0.0
        %v4585 = vand.u32 %v4185, 4294901760
        %4586 = vmatmul.mubr.f32.gmra.mrb[0].mxu0 %v4585
        %v4587 = vpop.f32.mrb[0].mxu0
        %v4588 = vadd.f32 %v4347, %v4587
        %v4589 = vpop.f32.mrb[0].mxu0
        %4590 = vmatprep.mubr.f32.mxu0 0.0
        %v4591 = vand.u32 %v4188, 4294901760
        %4592 = vmatmul.mubr.f32.gmra.mrb[0].mxu0 %v4591
        %v4593 = vpop.f32.mrb[0].mxu0
        %v4594 = vadd.f32 %v4357, %v4593
        %v4595 = vpop.f32.mrb[0].mxu0
        %4596 = vmatprep.mubr.f32.mxu0 0.0
        %v4597 = vand.u32 %v4191, 4294901760
        %4598 = vmatmul.mubr.f32.gmra.mrb[0].mxu0 %v4597
        %v4599 = vpop.f32.mrb[0].mxu0
        %v4600 = vadd.f32 %v4367, %v4599
        %v4601 = vpop.f32.mrb[0].mxu0
        %4602 = vmatprep.mubr.f32.mxu0 0.0
        %v4603 = vand.u32 %v4194, 4294901760
        %4604 = vmatmul.mubr.f32.gmra.mrb[0].mxu0 %v4603
        %v4605 = vpop.f32.mrb[0].mxu0
        %v4606 = vadd.f32 %v4377, %v4605
        %v4607 = vpop.f32.mrb[0].mxu0
        %4608 = vmatprep.mubr.f32.mxu0 0.0
        %v4609 = vand.u32 %v4197, 4294901760
        %4610 = vmatmul.mubr.f32.gmra.mrb[0].mxu0 %v4609
        %v4611 = vpop.f32.mrb[0].mxu0
        %v4612 = vadd.f32 %v4387, %v4611
        %v4613 = vpop.f32.mrb[0].mxu0
        %4614 = vmatprep.mubr.f32.mxu0 0.0
        %v4615 = vand.u32 %v4200, 4294901760
        %4616 = vmatmul.mubr.f32.gmra.mrb[0].mxu0 %v4615
        %v4617 = vpop.f32.mrb[0].mxu0
        %v4618 = vadd.f32 %v4397, %v4617
        %v4619 = vpop.f32.mrb[0].mxu0
        %4620 = vmatprep.mubr.f32.mxu0 0.0
        %v4621 = vand.u32 %v4203, 4294901760
        %4622 = vmatmul.mubr.f32.gmra.mrb[0].mxu0 %v4621
        %v4623 = vpop.f32.mrb[0].mxu0
        %v4624 = vadd.f32 %v4407, %v4623
        %v4625 = vpop.f32.mrb[0].mxu0
        %4626 = vmatprep.mubr.f32.mxu0 0.0
        %v4627 = vand.u32 %v4206, 4294901760
        %4628 = vmatmul.mubr.f32.gmra.mrb[0].mxu0 %v4627
        %v4629 = vpop.f32.mrb[0].mxu0
        %v4630 = vadd.f32 %v4417, %v4629
        %v4631 = vpop.f32.mrb[0].mxu0
        %4632 = vmatprep.mubr.f32.mxu0 0.0
        %v4633 = vand.u32 %v4209, 4294901760
        %4634 = vmatmul.mubr.f32.gmra.mrb[0].mxu0 %v4633
        %v4635 = vpop.f32.mrb[0].mxu0
        %v4636 = vadd.f32 %v4427, %v4635
        %v4637 = vpop.f32.mrb[0].mxu0
        %4638 = vmatprep.mubr.f32.mxu0 0.0
        %v4639 = vand.u32 %v4212, 4294901760
        %4640 = vmatmul.mubr.f32.gmra.mrb[0].mxu0 %v4639
        %v4641 = vpop.f32.mrb[0].mxu0
        %v4642 = vadd.f32 %v4437, %v4641
        %v4643 = vpop.f32.mrb[0].mxu0
        %4644 = vmatprep.mubr.f32.mxu0 0.0
        %v4645 = vand.u32 %v4215, 4294901760
        %4646 = vmatmul.mubr.f32.gmra.mrb[0].mxu0 %v4645
        %v4647 = vpop.f32.mrb[0].mxu0
        %v4648 = vadd.f32 %v4447, %v4647
        %v4649 = vpop.f32.mrb[0].mxu0
        %4650 = vdwg.mxu0
        %4651 = vmatprep.subr.mxu0 0.0
        %v4652 = vand.u32 %v4153, 4294901760
        %v4653 = vsub.f32 %v4153, %v4652
        %4654 = vmatpush1.msra.mxu0 %v4653
        %4655 = vmatprep.subr.mxu0 0.0
        %v4656 = vand.u32 %v4154, 4294901760
        %v4657 = vsub.f32 %v4154, %v4656
        %4658 = vmatpush1.msra.mxu0 %v4657
        %4659 = vmatprep.subr.mxu0 0.0
        %v4660 = vand.u32 %v4155, 4294901760
        %v4661 = vsub.f32 %v4155, %v4660
        %4662 = vmatpush1.msra.mxu0 %v4661
        %4663 = vmatprep.subr.mxu0 0.0
        %v4664 = vand.u32 %v4156, 4294901760
        %v4665 = vsub.f32 %v4156, %v4664
        %4666 = vmatpush1.msra.mxu0 %v4665
        %4667 = vmatprep.subr.mxu0 0.0
        %v4668 = vand.u32 %v4157, 4294901760
        %v4669 = vsub.f32 %v4157, %v4668
        %4670 = vmatpush1.msra.mxu0 %v4669
        %4671 = vmatprep.subr.mxu0 0.0
        %v4672 = vand.u32 %v4158, 4294901760
        %v4673 = vsub.f32 %v4158, %v4672
        %4674 = vmatpush1.msra.mxu0 %v4673
        %4675 = vmatprep.subr.mxu0 0.0
        %v4676 = vand.u32 %v4159, 4294901760
        %v4677 = vsub.f32 %v4159, %v4676
        %4678 = vmatpush1.msra.mxu0 %v4677
        %4679 = vmatprep.subr.mxu0 0.0
        %v4680 = vand.u32 %v4160, 4294901760
        %v4681 = vsub.f32 %v4160, %v4680
        %4682 = vmatpush1.msra.mxu0 %v4681
        %4683 = vmatprep.subr.mxu0 0.0
        %4684 = vmatpush1.msra.mxu0 0.0
        %4685 = vmatprep.subr.mxu0 0.0
        %4686 = vmatpush1.msra.mxu0 0.0
        %4687 = vmatprep.subr.mxu0 0.0
        %4688 = vmatpush1.msra.mxu0 0.0
        %4689 = vmatprep.subr.mxu0 0.0
        %4690 = vmatpush1.msra.mxu0 0.0
        %4691 = vmatprep.subr.mxu0 0.0
        %4692 = vmatpush1.msra.mxu0 0.0
        %4693 = vmatprep.subr.mxu0 0.0
        %4694 = vmatpush1.msra.mxu0 0.0
        %4695 = vmatprep.subr.mxu0 0.0
        %4696 = vmatpush1.msra.mxu0 0.0
        %4697 = vmatprep.subr.mxu0 0.0
        %4698 = vmatpush1.msra.mxu0 0.0
        %4699 = vmatprep.subr.mxu0 0.0
        %4700 = vmatpush1.msra.mxu0 0.0
        %4701 = vmatprep.subr.mxu0 0.0
        %4702 = vmatpush1.msra.mxu0 0.0
        %4703 = vmatprep.subr.mxu0 0.0
        %4704 = vmatpush1.msra.mxu0 0.0
        %4705 = vmatprep.subr.mxu0 0.0
        %4706 = vmatpush1.msra.mxu0 0.0
        %4707 = vmatprep.subr.mxu0 0.0
        %4708 = vmatpush1.msra.mxu0 0.0
        %4709 = vmatprep.subr.mxu0 0.0
        %4710 = vmatpush1.msra.mxu0 0.0
        %4711 = vmatprep.subr.mxu0 0.0
        %4712 = vmatpush1.msra.mxu0 0.0
        %4713 = vmatprep.subr.mxu0 0.0
        %4714 = vmatpush1.msra.mxu0 0.0
        %4715 = vmatprep.subr.mxu0 0.0
        %4716 = vmatpush1.msra.mxu0 0.0
        %4717 = vmatprep.subr.mxu0 0.0
        %4718 = vmatpush1.msra.mxu0 0.0
        %4719 = vmatprep.subr.mxu0 0.0
        %4720 = vmatpush1.msra.mxu0 0.0
        %4721 = vmatprep.subr.mxu0 0.0
        %4722 = vmatpush1.msra.mxu0 0.0
        %4723 = vmatprep.subr.mxu0 0.0
        %4724 = vmatpush1.msra.mxu0 0.0
        %4725 = vmatprep.subr.mxu0 0.0
        %4726 = vmatpush1.msra.mxu0 0.0
        %4727 = vmatprep.subr.mxu0 0.0
        %4728 = vmatpush1.msra.mxu0 0.0
        %4729 = vmatprep.subr.mxu0 0.0
        %4730 = vmatpush1.msra.mxu0 0.0
        %4731 = vmatprep.mubr.f32.mxu0 0.0
        %v4732 = vand.u32 %v4170, 4294901760
        %v4733 = vsub.f32 %v4170, %v4732
        %4734 = vmatmul.mubr.f32.gmra.mrb[0].mxu0 %v4733
        %v4735 = vpop.f32.mrb[0].mxu0
        %v4736 = vadd.f32 %v4558, %v4735
        %v4737 = vpop.f32.mrb[0].mxu0
        %4738 = vmatprep.mubr.f32.mxu0 0.0
        %v4739 = vand.u32 %v4173, 4294901760
        %v4740 = vsub.f32 %v4173, %v4739
        %4741 = vmatmul.mubr.f32.gmra.mrb[0].mxu0 %v4740
        %v4742 = vpop.f32.mrb[0].mxu0
        %v4743 = vadd.f32 %v4564, %v4742
        %v4744 = vpop.f32.mrb[0].mxu0
        %4745 = vmatprep.mubr.f32.mxu0 0.0
        %v4746 = vand.u32 %v4176, 4294901760
        %v4747 = vsub.f32 %v4176, %v4746
        %4748 = vmatmul.mubr.f32.gmra.mrb[0].mxu0 %v4747
        %v4749 = vpop.f32.mrb[0].mxu0
        %v4750 = vadd.f32 %v4570, %v4749
        %v4751 = vpop.f32.mrb[0].mxu0
        %4752 = vmatprep.mubr.f32.mxu0 0.0
        %v4753 = vand.u32 %v4179, 4294901760
        %v4754 = vsub.f32 %v4179, %v4753
        %4755 = vmatmul.mubr.f32.gmra.mrb[0].mxu0 %v4754
        %v4756 = vpop.f32.mrb[0].mxu0
        %v4757 = vadd.f32 %v4576, %v4756
        %v4758 = vpop.f32.mrb[0].mxu0
        %4759 = vmatprep.mubr.f32.mxu0 0.0
        %v4760 = vand.u32 %v4182, 4294901760
        %v4761 = vsub.f32 %v4182, %v4760
        %4762 = vmatmul.mubr.f32.gmra.mrb[0].mxu0 %v4761
        %v4763 = vpop.f32.mrb[0].mxu0
        %v4764 = vadd.f32 %v4582, %v4763
        %v4765 = vpop.f32.mrb[0].mxu0
        %4766 = vmatprep.mubr.f32.mxu0 0.0
        %v4767 = vand.u32 %v4185, 4294901760
        %v4768 = vsub.f32 %v4185, %v4767
        %4769 = vmatmul.mubr.f32.gmra.mrb[0].mxu0 %v4768
        %v4770 = vpop.f32.mrb[0].mxu0
        %v4771 = vadd.f32 %v4588, %v4770
        %v4772 = vpop.f32.mrb[0].mxu0
        %4773 = vmatprep.mubr.f32.mxu0 0.0
        %v4774 = vand.u32 %v4188, 4294901760
        %v4775 = vsub.f32 %v4188, %v4774
        %4776 = vmatmul.mubr.f32.gmra.mrb[0].mxu0 %v4775
        %v4777 = vpop.f32.mrb[0].mxu0
        %v4778 = vadd.f32 %v4594, %v4777
        %v4779 = vpop.f32.mrb[0].mxu0
        %4780 = vmatprep.mubr.f32.mxu0 0.0
        %v4781 = vand.u32 %v4191, 4294901760
        %v4782 = vsub.f32 %v4191, %v4781
        %4783 = vmatmul.mubr.f32.gmra.mrb[0].mxu0 %v4782
        %v4784 = vpop.f32.mrb[0].mxu0
        %v4785 = vadd.f32 %v4600, %v4784
        %v4786 = vpop.f32.mrb[0].mxu0
        %4787 = vmatprep.mubr.f32.mxu0 0.0
        %v4788 = vand.u32 %v4194, 4294901760
        %v4789 = vsub.f32 %v4194, %v4788
        %4790 = vmatmul.mubr.f32.gmra.mrb[0].mxu0 %v4789
        %v4791 = vpop.f32.mrb[0].mxu0
        %v4792 = vadd.f32 %v4606, %v4791
        %v4793 = vpop.f32.mrb[0].mxu0
        %4794 = vmatprep.mubr.f32.mxu0 0.0
        %v4795 = vand.u32 %v4197, 4294901760
        %v4796 = vsub.f32 %v4197, %v4795
        %4797 = vmatmul.mubr.f32.gmra.mrb[0].mxu0 %v4796
        %v4798 = vpop.f32.mrb[0].mxu0
        %v4799 = vadd.f32 %v4612, %v4798
        %v4800 = vpop.f32.mrb[0].mxu0
        %4801 = vmatprep.mubr.f32.mxu0 0.0
        %v4802 = vand.u32 %v4200, 4294901760
        %v4803 = vsub.f32 %v4200, %v4802
        %4804 = vmatmul.mubr.f32.gmra.mrb[0].mxu0 %v4803
        %v4805 = vpop.f32.mrb[0].mxu0
        %v4806 = vadd.f32 %v4618, %v4805
        %v4807 = vpop.f32.mrb[0].mxu0
        %4808 = vmatprep.mubr.f32.mxu0 0.0
        %v4809 = vand.u32 %v4203, 4294901760
        %v4810 = vsub.f32 %v4203, %v4809
        %4811 = vmatmul.mubr.f32.gmra.mrb[0].mxu0 %v4810
        %v4812 = vpop.f32.mrb[0].mxu0
        %v4813 = vadd.f32 %v4624, %v4812
        %v4814 = vpop.f32.mrb[0].mxu0
        %4815 = vmatprep.mubr.f32.mxu0 0.0
        %v4816 = vand.u32 %v4206, 4294901760
        %v4817 = vsub.f32 %v4206, %v4816
        %4818 = vmatmul.mubr.f32.gmra.mrb[0].mxu0 %v4817
        %v4819 = vpop.f32.mrb[0].mxu0
        %v4820 = vadd.f32 %v4630, %v4819
        %v4821 = vpop.f32.mrb[0].mxu0
        %4822 = vmatprep.mubr.f32.mxu0 0.0
        %v4823 = vand.u32 %v4209, 4294901760
        %v4824 = vsub.f32 %v4209, %v4823
        %4825 = vmatmul.mubr.f32.gmra.mrb[0].mxu0 %v4824
        %v4826 = vpop.f32.mrb[0].mxu0
        %v4827 = vadd.f32 %v4636, %v4826
        %v4828 = vpop.f32.mrb[0].mxu0
        %4829 = vmatprep.mubr.f32.mxu0 0.0
        %v4830 = vand.u32 %v4212, 4294901760
        %v4831 = vsub.f32 %v4212, %v4830
        %4832 = vmatmul.mubr.f32.gmra.mrb[0].mxu0 %v4831
        %v4833 = vpop.f32.mrb[0].mxu0
        %v4834 = vadd.f32 %v4642, %v4833
        %v4835 = vpop.f32.mrb[0].mxu0
        %4836 = vmatprep.mubr.f32.mxu0 0.0
        %v4837 = vand.u32 %v4215, 4294901760
        %v4838 = vsub.f32 %v4215, %v4837
        %4839 = vmatmul.mubr.f32.gmra.mrb[0].mxu0 %v4838
        %v4840 = vpop.f32.mrb[0].mxu0
        %v4841 = vadd.f32 %v4648, %v4840
        %v4842 = vpop.f32.mrb[0].mxu0
        %4843 = vdwg.mxu0
        %4844 = vmatprep.subr.mxu0 0.0
        %v4845 = vand.u32 %v4153, 4294901760
        %4846 = vmatpush1.msra.mxu0 %v4845
        %4847 = vmatprep.subr.mxu0 0.0
        %v4848 = vand.u32 %v4154, 4294901760
        %4849 = vmatpush1.msra.mxu0 %v4848
        %4850 = vmatprep.subr.mxu0 0.0
        %v4851 = vand.u32 %v4155, 4294901760
        %4852 = vmatpush1.msra.mxu0 %v4851
        %4853 = vmatprep.subr.mxu0 0.0
        %v4854 = vand.u32 %v4156, 4294901760
        %4855 = vmatpush1.msra.mxu0 %v4854
        %4856 = vmatprep.subr.mxu0 0.0
        %v4857 = vand.u32 %v4157, 4294901760
        %4858 = vmatpush1.msra.mxu0 %v4857
        %4859 = vmatprep.subr.mxu0 0.0
        %v4860 = vand.u32 %v4158, 4294901760
        %4861 = vmatpush1.msra.mxu0 %v4860
        %4862 = vmatprep.subr.mxu0 0.0
        %v4863 = vand.u32 %v4159, 4294901760
        %4864 = vmatpush1.msra.mxu0 %v4863
        %4865 = vmatprep.subr.mxu0 0.0
        %v4866 = vand.u32 %v4160, 4294901760
        %4867 = vmatpush1.msra.mxu0 %v4866
        %4868 = vmatprep.subr.mxu0 0.0
        %4869 = vmatpush1.msra.mxu0 0.0
        %4870 = vmatprep.subr.mxu0 0.0
        %4871 = vmatpush1.msra.mxu0 0.0
        %4872 = vmatprep.subr.mxu0 0.0
        %4873 = vmatpush1.msra.mxu0 0.0
        %4874 = vmatprep.subr.mxu0 0.0
        %4875 = vmatpush1.msra.mxu0 0.0
        %4876 = vmatprep.subr.mxu0 0.0
        %4877 = vmatpush1.msra.mxu0 0.0
        %4878 = vmatprep.subr.mxu0 0.0
        %4879 = vmatpush1.msra.mxu0 0.0
        %4880 = vmatprep.subr.mxu0 0.0
        %4881 = vmatpush1.msra.mxu0 0.0
        %4882 = vmatprep.subr.mxu0 0.0
        %4883 = vmatpush1.msra.mxu0 0.0
        %4884 = vmatprep.subr.mxu0 0.0
        %4885 = vmatpush1.msra.mxu0 0.0
        %4886 = vmatprep.subr.mxu0 0.0
        %4887 = vmatpush1.msra.mxu0 0.0
        %4888 = vmatprep.subr.mxu0 0.0
        %4889 = vmatpush1.msra.mxu0 0.0
        %4890 = vmatprep.subr.mxu0 0.0
        %4891 = vmatpush1.msra.mxu0 0.0
        %4892 = vmatprep.subr.mxu0 0.0
        %4893 = vmatpush1.msra.mxu0 0.0
        %4894 = vmatprep.subr.mxu0 0.0
        %4895 = vmatpush1.msra.mxu0 0.0
        %4896 = vmatprep.subr.mxu0 0.0
        %4897 = vmatpush1.msra.mxu0 0.0
        %4898 = vmatprep.subr.mxu0 0.0
        %4899 = vmatpush1.msra.mxu0 0.0
        %4900 = vmatprep.subr.mxu0 0.0
        %4901 = vmatpush1.msra.mxu0 0.0
        %4902 = vmatprep.subr.mxu0 0.0
        %4903 = vmatpush1.msra.mxu0 0.0
        %4904 = vmatprep.subr.mxu0 0.0
        %4905 = vmatpush1.msra.mxu0 0.0
        %4906 = vmatprep.subr.mxu0 0.0
        %4907 = vmatpush1.msra.mxu0 0.0
        %4908 = vmatprep.subr.mxu0 0.0
        %4909 = vmatpush1.msra.mxu0 0.0
        %4910 = vmatprep.subr.mxu0 0.0
        %4911 = vmatpush1.msra.mxu0 0.0
        %4912 = vmatprep.subr.mxu0 0.0
        %4913 = vmatpush1.msra.mxu0 0.0
        %4914 = vmatprep.subr.mxu0 0.0
        %4915 = vmatpush1.msra.mxu0 0.0
        %4916 = vmatprep.mubr.f32.mxu0 0.0
        %v4917 = vand.u32 %v4170, 4294901760
        %v4918 = vsub.f32 %v4170, %v4917
        %v4919 = vand.u32 %v4918, 4294901760
        %4920 = vmatmul.mubr.f32.gmra.mrb[0].mxu0 %v4919
        %v4921 = vpop.f32.mrb[0].mxu0
        %v4922 = vadd.f32 %v4736, %v4921
        %v4923 = vpop.f32.mrb[0].mxu0
        %4924 = vmatprep.mubr.f32.mxu0 0.0
        %v4925 = vand.u32 %v4173, 4294901760
        %v4926 = vsub.f32 %v4173, %v4925
        %v4927 = vand.u32 %v4926, 4294901760
        %4928 = vmatmul.mubr.f32.gmra.mrb[0].mxu0 %v4927
        %v4929 = vpop.f32.mrb[0].mxu0
        %v4930 = vadd.f32 %v4743, %v4929
        %v4931 = vpop.f32.mrb[0].mxu0
        %4932 = vmatprep.mubr.f32.mxu0 0.0
        %v4933 = vand.u32 %v4176, 4294901760
        %v4934 = vsub.f32 %v4176, %v4933
        %v4935 = vand.u32 %v4934, 4294901760
        %4936 = vmatmul.mubr.f32.gmra.mrb[0].mxu0 %v4935
        %v4937 = vpop.f32.mrb[0].mxu0
        %v4938 = vadd.f32 %v4750, %v4937
        %v4939 = vpop.f32.mrb[0].mxu0
        %4940 = vmatprep.mubr.f32.mxu0 0.0
        %v4941 = vand.u32 %v4179, 4294901760
        %v4942 = vsub.f32 %v4179, %v4941
        %v4943 = vand.u32 %v4942, 4294901760
        %4944 = vmatmul.mubr.f32.gmra.mrb[0].mxu0 %v4943
        %v4945 = vpop.f32.mrb[0].mxu0
        %v4946 = vadd.f32 %v4757, %v4945
        %v4947 = vpop.f32.mrb[0].mxu0
        %4948 = vmatprep.mubr.f32.mxu0 0.0
        %v4949 = vand.u32 %v4182, 4294901760
        %v4950 = vsub.f32 %v4182, %v4949
        %v4951 = vand.u32 %v4950, 4294901760
        %4952 = vmatmul.mubr.f32.gmra.mrb[0].mxu0 %v4951
        %v4953 = vpop.f32.mrb[0].mxu0
        %v4954 = vadd.f32 %v4764, %v4953
        %v4955 = vpop.f32.mrb[0].mxu0
        %4956 = vmatprep.mubr.f32.mxu0 0.0
        %v4957 = vand.u32 %v4185, 4294901760
        %v4958 = vsub.f32 %v4185, %v4957
        %v4959 = vand.u32 %v4958, 4294901760
        %4960 = vmatmul.mubr.f32.gmra.mrb[0].mxu0 %v4959
        %v4961 = vpop.f32.mrb[0].mxu0
        %v4962 = vadd.f32 %v4771, %v4961
        %v4963 = vpop.f32.mrb[0].mxu0
        %4964 = vmatprep.mubr.f32.mxu0 0.0
        %v4965 = vand.u32 %v4188, 4294901760
        %v4966 = vsub.f32 %v4188, %v4965
        %v4967 = vand.u32 %v4966, 4294901760
        %4968 = vmatmul.mubr.f32.gmra.mrb[0].mxu0 %v4967
        %v4969 = vpop.f32.mrb[0].mxu0
        %v4970 = vadd.f32 %v4778, %v4969
        %v4971 = vpop.f32.mrb[0].mxu0
        %4972 = vmatprep.mubr.f32.mxu0 0.0
        %v4973 = vand.u32 %v4191, 4294901760
        %v4974 = vsub.f32 %v4191, %v4973
        %v4975 = vand.u32 %v4974, 4294901760
        %4976 = vmatmul.mubr.f32.gmra.mrb[0].mxu0 %v4975
        %v4977 = vpop.f32.mrb[0].mxu0
        %v4978 = vadd.f32 %v4785, %v4977
        %v4979 = vpop.f32.mrb[0].mxu0
        %4980 = vmatprep.mubr.f32.mxu0 0.0
        %v4981 = vand.u32 %v4194, 4294901760
        %v4982 = vsub.f32 %v4194, %v4981
        %v4983 = vand.u32 %v4982, 4294901760
        %4984 = vmatmul.mubr.f32.gmra.mrb[0].mxu0 %v4983
        %v4985 = vpop.f32.mrb[0].mxu0
        %v4986 = vadd.f32 %v4792, %v4985
        %v4987 = vpop.f32.mrb[0].mxu0
        %4988 = vmatprep.mubr.f32.mxu0 0.0
        %v4989 = vand.u32 %v4197, 4294901760
        %v4990 = vsub.f32 %v4197, %v4989
        %v4991 = vand.u32 %v4990, 4294901760
        %4992 = vmatmul.mubr.f32.gmra.mrb[0].mxu0 %v4991
        %v4993 = vpop.f32.mrb[0].mxu0
        %v4994 = vadd.f32 %v4799, %v4993
        %v4995 = vpop.f32.mrb[0].mxu0
        %4996 = vmatprep.mubr.f32.mxu0 0.0
        %v4997 = vand.u32 %v4200, 4294901760
        %v4998 = vsub.f32 %v4200, %v4997
        %v4999 = vand.u32 %v4998, 4294901760
        %5000 = vmatmul.mubr.f32.gmra.mrb[0].mxu0 %v4999
        %v5001 = vpop.f32.mrb[0].mxu0
        %v5002 = vadd.f32 %v4806, %v5001
        %v5003 = vpop.f32.mrb[0].mxu0
        %5004 = vmatprep.mubr.f32.mxu0 0.0
        %v5005 = vand.u32 %v4203, 4294901760
        %v5006 = vsub.f32 %v4203, %v5005
        %v5007 = vand.u32 %v5006, 4294901760
        %5008 = vmatmul.mubr.f32.gmra.mrb[0].mxu0 %v5007
        %v5009 = vpop.f32.mrb[0].mxu0
        %v5010 = vadd.f32 %v4813, %v5009
        %v5011 = vpop.f32.mrb[0].mxu0
        %5012 = vmatprep.mubr.f32.mxu0 0.0
        %v5013 = vand.u32 %v4206, 4294901760
        %v5014 = vsub.f32 %v4206, %v5013
        %v5015 = vand.u32 %v5014, 4294901760
        %5016 = vmatmul.mubr.f32.gmra.mrb[0].mxu0 %v5015
        %v5017 = vpop.f32.mrb[0].mxu0
        %v5018 = vadd.f32 %v4820, %v5017
        %v5019 = vpop.f32.mrb[0].mxu0
        %5020 = vmatprep.mubr.f32.mxu0 0.0
        %v5021 = vand.u32 %v4209, 4294901760
        %v5022 = vsub.f32 %v4209, %v5021
        %v5023 = vand.u32 %v5022, 4294901760
        %5024 = vmatmul.mubr.f32.gmra.mrb[0].mxu0 %v5023
        %v5025 = vpop.f32.mrb[0].mxu0
        %v5026 = vadd.f32 %v4827, %v5025
        %v5027 = vpop.f32.mrb[0].mxu0
        %5028 = vmatprep.mubr.f32.mxu0 0.0
        %v5029 = vand.u32 %v4212, 4294901760
        %v5030 = vsub.f32 %v4212, %v5029
        %v5031 = vand.u32 %v5030, 4294901760
        %5032 = vmatmul.mubr.f32.gmra.mrb[0].mxu0 %v5031
        %v5033 = vpop.f32.mrb[0].mxu0
        %v5034 = vadd.f32 %v4834, %v5033
        %v5035 = vpop.f32.mrb[0].mxu0
        %5036 = vmatprep.mubr.f32.mxu0 0.0
        %v5037 = vand.u32 %v4215, 4294901760
        %v5038 = vsub.f32 %v4215, %v5037
        %v5039 = vand.u32 %v5038, 4294901760
        %5040 = vmatmul.mubr.f32.gmra.mrb[0].mxu0 %v5039
        %v5041 = vpop.f32.mrb[0].mxu0
        %v5042 = vadd.f32 %v4841, %v5041
        %v5043 = vpop.f32.mrb[0].mxu0
        %5044 = vdwg.mxu0
        %5045 = vmatprep.subr.mxu0 0.0
        %v5046 = vand.u32 %v4153, 4294901760
        %v5047 = vsub.f32 %v4153, %v5046
        %v5048 = vand.u32 %v5047, 4294901760
        %5049 = vmatpush1.msra.mxu0 %v5048
        %5050 = vmatprep.subr.mxu0 0.0
        %v5051 = vand.u32 %v4154, 4294901760
        %v5052 = vsub.f32 %v4154, %v5051
        %v5053 = vand.u32 %v5052, 4294901760
        %5054 = vmatpush1.msra.mxu0 %v5053
        %5055 = vmatprep.subr.mxu0 0.0
        %v5056 = vand.u32 %v4155, 4294901760
        %v5057 = vsub.f32 %v4155, %v5056
        %v5058 = vand.u32 %v5057, 4294901760
        %5059 = vmatpush1.msra.mxu0 %v5058
        %5060 = vmatprep.subr.mxu0 0.0
        %v5061 = vand.u32 %v4156, 4294901760
        %v5062 = vsub.f32 %v4156, %v5061
        %v5063 = vand.u32 %v5062, 4294901760
        %5064 = vmatpush1.msra.mxu0 %v5063
        %5065 = vmatprep.subr.mxu0 0.0
        %v5066 = vand.u32 %v4157, 4294901760
        %v5067 = vsub.f32 %v4157, %v5066
        %v5068 = vand.u32 %v5067, 4294901760
        %5069 = vmatpush1.msra.mxu0 %v5068
        %5070 = vmatprep.subr.mxu0 0.0
        %v5071 = vand.u32 %v4158, 4294901760
        %v5072 = vsub.f32 %v4158, %v5071
        %v5073 = vand.u32 %v5072, 4294901760
        %5074 = vmatpush1.msra.mxu0 %v5073
        %5075 = vmatprep.subr.mxu0 0.0
        %v5076 = vand.u32 %v4159, 4294901760
        %v5077 = vsub.f32 %v4159, %v5076
        %v5078 = vand.u32 %v5077, 4294901760
        %5079 = vmatpush1.msra.mxu0 %v5078
        %5080 = vmatprep.subr.mxu0 0.0
        %v5081 = vand.u32 %v4160, 4294901760
        %v5082 = vsub.f32 %v4160, %v5081
        %v5083 = vand.u32 %v5082, 4294901760
        %5084 = vmatpush1.msra.mxu0 %v5083
        %5085 = vmatprep.subr.mxu0 0.0
        %5086 = vmatpush1.msra.mxu0 0.0
        %5087 = vmatprep.subr.mxu0 0.0
        %5088 = vmatpush1.msra.mxu0 0.0
        %5089 = vmatprep.subr.mxu0 0.0
        %5090 = vmatpush1.msra.mxu0 0.0
        %5091 = vmatprep.subr.mxu0 0.0
        %5092 = vmatpush1.msra.mxu0 0.0
        %5093 = vmatprep.subr.mxu0 0.0
        %5094 = vmatpush1.msra.mxu0 0.0
        %5095 = vmatprep.subr.mxu0 0.0
        %5096 = vmatpush1.msra.mxu0 0.0
        %5097 = vmatprep.subr.mxu0 0.0
        %5098 = vmatpush1.msra.mxu0 0.0
        %5099 = vmatprep.subr.mxu0 0.0
        %5100 = vmatpush1.msra.mxu0 0.0
        %5101 = vmatprep.subr.mxu0 0.0
        %5102 = vmatpush1.msra.mxu0 0.0
        %5103 = vmatprep.subr.mxu0 0.0
        %5104 = vmatpush1.msra.mxu0 0.0
        %5105 = vmatprep.subr.mxu0 0.0
        %5106 = vmatpush1.msra.mxu0 0.0
        %5107 = vmatprep.subr.mxu0 0.0
        %5108 = vmatpush1.msra.mxu0 0.0
        %5109 = vmatprep.subr.mxu0 0.0
        %5110 = vmatpush1.msra.mxu0 0.0
        %5111 = vmatprep.subr.mxu0 0.0
        %5112 = vmatpush1.msra.mxu0 0.0
        %5113 = vmatprep.subr.mxu0 0.0
        %5114 = vmatpush1.msra.mxu0 0.0
        %5115 = vmatprep.subr.mxu0 0.0
        %5116 = vmatpush1.msra.mxu0 0.0
        %5117 = vmatprep.subr.mxu0 0.0
        %5118 = vmatpush1.msra.mxu0 0.0
        %5119 = vmatprep.subr.mxu0 0.0
        %5120 = vmatpush1.msra.mxu0 0.0
        %5121 = vmatprep.subr.mxu0 0.0
        %5122 = vmatpush1.msra.mxu0 0.0
        %5123 = vmatprep.subr.mxu0 0.0
        %5124 = vmatpush1.msra.mxu0 0.0
        %5125 = vmatprep.subr.mxu0 0.0
        %5126 = vmatpush1.msra.mxu0 0.0
        %5127 = vmatprep.subr.mxu0 0.0
        %5128 = vmatpush1.msra.mxu0 0.0
        %5129 = vmatprep.subr.mxu0 0.0
        %5130 = vmatpush1.msra.mxu0 0.0
        %5131 = vmatprep.subr.mxu0 0.0
        %5132 = vmatpush1.msra.mxu0 0.0
        %5133 = vmatprep.mubr.f32.mxu0 0.0
        %v5134 = vand.u32 %v4170, 4294901760
        %5135 = vmatmul.mubr.f32.gmra.mrb[0].mxu0 %v5134
        %v5136 = vpop.f32.mrb[0].mxu0
        %v5137 = vadd.f32 %v4922, %v5136
        %v5138 = vpop.f32.mrb[0].mxu0
        %5139 = vmatprep.mubr.f32.mxu0 0.0
        %v5140 = vand.u32 %v4173, 4294901760
        %5141 = vmatmul.mubr.f32.gmra.mrb[0].mxu0 %v5140
        %v5142 = vpop.f32.mrb[0].mxu0
        %v5143 = vadd.f32 %v4930, %v5142
        %v5144 = vpop.f32.mrb[0].mxu0
        %5145 = vmatprep.mubr.f32.mxu0 0.0
        %v5146 = vand.u32 %v4176, 4294901760
        %5147 = vmatmul.mubr.f32.gmra.mrb[0].mxu0 %v5146
        %v5148 = vpop.f32.mrb[0].mxu0
        %v5149 = vadd.f32 %v4938, %v5148
        %v5150 = vpop.f32.mrb[0].mxu0
        %5151 = vmatprep.mubr.f32.mxu0 0.0
        %v5152 = vand.u32 %v4179, 4294901760
        %5153 = vmatmul.mubr.f32.gmra.mrb[0].mxu0 %v5152
        %v5154 = vpop.f32.mrb[0].mxu0
        %v5155 = vadd.f32 %v4946, %v5154
        %v5156 = vpop.f32.mrb[0].mxu0
        %5157 = vmatprep.mubr.f32.mxu0 0.0
        %v5158 = vand.u32 %v4182, 4294901760
        %5159 = vmatmul.mubr.f32.gmra.mrb[0].mxu0 %v5158
        %v5160 = vpop.f32.mrb[0].mxu0
        %v5161 = vadd.f32 %v4954, %v5160
        %v5162 = vpop.f32.mrb[0].mxu0
        %5163 = vmatprep.mubr.f32.mxu0 0.0
        %v5164 = vand.u32 %v4185, 4294901760
        %5165 = vmatmul.mubr.f32.gmra.mrb[0].mxu0 %v5164
        %v5166 = vpop.f32.mrb[0].mxu0
        %v5167 = vadd.f32 %v4962, %v5166
        %v5168 = vpop.f32.mrb[0].mxu0
        %5169 = vmatprep.mubr.f32.mxu0 0.0
        %v5170 = vand.u32 %v4188, 4294901760
        %5171 = vmatmul.mubr.f32.gmra.mrb[0].mxu0 %v5170
        %v5172 = vpop.f32.mrb[0].mxu0
        %v5173 = vadd.f32 %v4970, %v5172
        %v5174 = vpop.f32.mrb[0].mxu0
        %5175 = vmatprep.mubr.f32.mxu0 0.0
        %v5176 = vand.u32 %v4191, 4294901760
        %5177 = vmatmul.mubr.f32.gmra.mrb[0].mxu0 %v5176
        %v5178 = vpop.f32.mrb[0].mxu0
        %v5179 = vadd.f32 %v4978, %v5178
        %v5180 = vpop.f32.mrb[0].mxu0
        %5181 = vmatprep.mubr.f32.mxu0 0.0
        %v5182 = vand.u32 %v4194, 4294901760
        %5183 = vmatmul.mubr.f32.gmra.mrb[0].mxu0 %v5182
        %v5184 = vpop.f32.mrb[0].mxu0
        %v5185 = vadd.f32 %v4986, %v5184
        %v5186 = vpop.f32.mrb[0].mxu0
        %5187 = vmatprep.mubr.f32.mxu0 0.0
        %v5188 = vand.u32 %v4197, 4294901760
        %5189 = vmatmul.mubr.f32.gmra.mrb[0].mxu0 %v5188
        %v5190 = vpop.f32.mrb[0].mxu0
        %v5191 = vadd.f32 %v4994, %v5190
        %v5192 = vpop.f32.mrb[0].mxu0
        %5193 = vmatprep.mubr.f32.mxu0 0.0
        %v5194 = vand.u32 %v4200, 4294901760
        %5195 = vmatmul.mubr.f32.gmra.mrb[0].mxu0 %v5194
        %v5196 = vpop.f32.mrb[0].mxu0
        %v5197 = vadd.f32 %v5002, %v5196
        %v5198 = vpop.f32.mrb[0].mxu0
        %5199 = vmatprep.mubr.f32.mxu0 0.0
        %v5200 = vand.u32 %v4203, 4294901760
        %5201 = vmatmul.mubr.f32.gmra.mrb[0].mxu0 %v5200
        %v5202 = vpop.f32.mrb[0].mxu0
        %v5203 = vadd.f32 %v5010, %v5202
        %v5204 = vpop.f32.mrb[0].mxu0
        %5205 = vmatprep.mubr.f32.mxu0 0.0
        %v5206 = vand.u32 %v4206, 4294901760
        %5207 = vmatmul.mubr.f32.gmra.mrb[0].mxu0 %v5206
        %v5208 = vpop.f32.mrb[0].mxu0
        %v5209 = vadd.f32 %v5018, %v5208
        %v5210 = vpop.f32.mrb[0].mxu0
        %5211 = vmatprep.mubr.f32.mxu0 0.0
        %v5212 = vand.u32 %v4209, 4294901760
        %5213 = vmatmul.mubr.f32.gmra.mrb[0].mxu0 %v5212
        %v5214 = vpop.f32.mrb[0].mxu0
        %v5215 = vadd.f32 %v5026, %v5214
        %v5216 = vpop.f32.mrb[0].mxu0
        %5217 = vmatprep.mubr.f32.mxu0 0.0
        %v5218 = vand.u32 %v4212, 4294901760
        %5219 = vmatmul.mubr.f32.gmra.mrb[0].mxu0 %v5218
        %v5220 = vpop.f32.mrb[0].mxu0
        %v5221 = vadd.f32 %v5034, %v5220
        %v5222 = vpop.f32.mrb[0].mxu0
        %5223 = vmatprep.mubr.f32.mxu0 0.0
        %v5224 = vand.u32 %v4215, 4294901760
        %5225 = vmatmul.mubr.f32.gmra.mrb[0].mxu0 %v5224
        %v5226 = vpop.f32.mrb[0].mxu0
        %v5227 = vadd.f32 %v5042, %v5226
        %v5228 = vpop.f32.mrb[0].mxu0
        %5229 = vdwg.mxu0
        %5230 = vmatprep.subr.mxu0 0.0
        %v5231 = vand.u32 %v4153, 4294901760
        %5232 = vmatpush1.msra.mxu0 %v5231
        %5233 = vmatprep.subr.mxu0 0.0
        %v5234 = vand.u32 %v4154, 4294901760
        %5235 = vmatpush1.msra.mxu0 %v5234
        %5236 = vmatprep.subr.mxu0 0.0
        %v5237 = vand.u32 %v4155, 4294901760
        %5238 = vmatpush1.msra.mxu0 %v5237
        %5239 = vmatprep.subr.mxu0 0.0
        %v5240 = vand.u32 %v4156, 4294901760
        %5241 = vmatpush1.msra.mxu0 %v5240
        %5242 = vmatprep.subr.mxu0 0.0
        %v5243 = vand.u32 %v4157, 4294901760
        %5244 = vmatpush1.msra.mxu0 %v5243
        %5245 = vmatprep.subr.mxu0 0.0
        %v5246 = vand.u32 %v4158, 4294901760
        %5247 = vmatpush1.msra.mxu0 %v5246
        %5248 = vmatprep.subr.mxu0 0.0
        %v5249 = vand.u32 %v4159, 4294901760
        %5250 = vmatpush1.msra.mxu0 %v5249
        %5251 = vmatprep.subr.mxu0 0.0
        %v5252 = vand.u32 %v4160, 4294901760
        %5253 = vmatpush1.msra.mxu0 %v5252
        %5254 = vmatprep.subr.mxu0 0.0
        %5255 = vmatpush1.msra.mxu0 0.0
        %5256 = vmatprep.subr.mxu0 0.0
        %5257 = vmatpush1.msra.mxu0 0.0
        %5258 = vmatprep.subr.mxu0 0.0
        %5259 = vmatpush1.msra.mxu0 0.0
        %5260 = vmatprep.subr.mxu0 0.0
        %5261 = vmatpush1.msra.mxu0 0.0
        %5262 = vmatprep.subr.mxu0 0.0
        %5263 = vmatpush1.msra.mxu0 0.0
        %5264 = vmatprep.subr.mxu0 0.0
        %5265 = vmatpush1.msra.mxu0 0.0
        %5266 = vmatprep.subr.mxu0 0.0
        %5267 = vmatpush1.msra.mxu0 0.0
        %5268 = vmatprep.subr.mxu0 0.0
        %5269 = vmatpush1.msra.mxu0 0.0
        %5270 = vmatprep.subr.mxu0 0.0
        %5271 = vmatpush1.msra.mxu0 0.0
        %5272 = vmatprep.subr.mxu0 0.0
        %5273 = vmatpush1.msra.mxu0 0.0
        %5274 = vmatprep.subr.mxu0 0.0
        %5275 = vmatpush1.msra.mxu0 0.0
        %5276 = vmatprep.subr.mxu0 0.0
        %5277 = vmatpush1.msra.mxu0 0.0
        %5278 = vmatprep.subr.mxu0 0.0
        %5279 = vmatpush1.msra.mxu0 0.0
        %5280 = vmatprep.subr.mxu0 0.0
        %5281 = vmatpush1.msra.mxu0 0.0
        %5282 = vmatprep.subr.mxu0 0.0
        %5283 = vmatpush1.msra.mxu0 0.0
        %5284 = vmatprep.subr.mxu0 0.0
        %5285 = vmatpush1.msra.mxu0 0.0
        %5286 = vmatprep.subr.mxu0 0.0
        %5287 = vmatpush1.msra.mxu0 0.0
        %5288 = vmatprep.subr.mxu0 0.0
        %5289 = vmatpush1.msra.mxu0 0.0
        %5290 = vmatprep.subr.mxu0 0.0
        %5291 = vmatpush1.msra.mxu0 0.0
        %5292 = vmatprep.subr.mxu0 0.0
        %5293 = vmatpush1.msra.mxu0 0.0
        %5294 = vmatprep.subr.mxu0 0.0
        %5295 = vmatpush1.msra.mxu0 0.0
        %5296 = vmatprep.subr.mxu0 0.0
        %5297 = vmatpush1.msra.mxu0 0.0
        %5298 = vmatprep.subr.mxu0 0.0
        %5299 = vmatpush1.msra.mxu0 0.0
        %5300 = vmatprep.subr.mxu0 0.0
        %5301 = vmatpush1.msra.mxu0 0.0
        %5302 = vmatprep.mubr.f32.mxu0 0.0
        %v5303 = vand.u32 %v4170, 4294901760
        %5304 = vmatmul.mubr.f32.gmra.mrb[0].mxu0 %v5303
        %v5305 = vpop.f32.mrb[0].mxu0
        %v5306 = vadd.f32 %v5137, %v5305
        %v5307 = vpop.f32.mrb[0].mxu0
        %5308 = vmatprep.mubr.f32.mxu0 0.0
        %v5309 = vand.u32 %v4173, 4294901760
        %5310 = vmatmul.mubr.f32.gmra.mrb[0].mxu0 %v5309
        %v5311 = vpop.f32.mrb[0].mxu0
        %v5312 = vadd.f32 %v5143, %v5311
        %v5313 = vpop.f32.mrb[0].mxu0
        %5314 = vmatprep.mubr.f32.mxu0 0.0
        %v5315 = vand.u32 %v4176, 4294901760
        %5316 = vmatmul.mubr.f32.gmra.mrb[0].mxu0 %v5315
        %v5317 = vpop.f32.mrb[0].mxu0
        %v5318 = vadd.f32 %v5149, %v5317
        %v5319 = vpop.f32.mrb[0].mxu0
        %5320 = vmatprep.mubr.f32.mxu0 0.0
        %v5321 = vand.u32 %v4179, 4294901760
        %5322 = vmatmul.mubr.f32.gmra.mrb[0].mxu0 %v5321
        %v5323 = vpop.f32.mrb[0].mxu0
        %v5324 = vadd.f32 %v5155, %v5323
        %v5325 = vpop.f32.mrb[0].mxu0
        %5326 = vmatprep.mubr.f32.mxu0 0.0
        %v5327 = vand.u32 %v4182, 4294901760
        %5328 = vmatmul.mubr.f32.gmra.mrb[0].mxu0 %v5327
        %v5329 = vpop.f32.mrb[0].mxu0
        %v5330 = vadd.f32 %v5161, %v5329
        %v5331 = vpop.f32.mrb[0].mxu0
        %5332 = vmatprep.mubr.f32.mxu0 0.0
        %v5333 = vand.u32 %v4185, 4294901760
        %5334 = vmatmul.mubr.f32.gmra.mrb[0].mxu0 %v5333
        %v5335 = vpop.f32.mrb[0].mxu0
        %v5336 = vadd.f32 %v5167, %v5335
        %v5337 = vpop.f32.mrb[0].mxu0
        %5338 = vmatprep.mubr.f32.mxu0 0.0
        %v5339 = vand.u32 %v4188, 4294901760
        %5340 = vmatmul.mubr.f32.gmra.mrb[0].mxu0 %v5339
        %v5341 = vpop.f32.mrb[0].mxu0
        %v5342 = vadd.f32 %v5173, %v5341
        %v5343 = vpop.f32.mrb[0].mxu0
        %5344 = vmatprep.mubr.f32.mxu0 0.0
        %v5345 = vand.u32 %v4191, 4294901760
        %5346 = vmatmul.mubr.f32.gmra.mrb[0].mxu0 %v5345
        %v5347 = vpop.f32.mrb[0].mxu0
        %v5348 = vadd.f32 %v5179, %v5347
        %v5349 = vpop.f32.mrb[0].mxu0
        %5350 = vmatprep.mubr.f32.mxu0 0.0
        %v5351 = vand.u32 %v4194, 4294901760
        %5352 = vmatmul.mubr.f32.gmra.mrb[0].mxu0 %v5351
        %v5353 = vpop.f32.mrb[0].mxu0
        %v5354 = vadd.f32 %v5185, %v5353
        %v5355 = vpop.f32.mrb[0].mxu0
        %5356 = vmatprep.mubr.f32.mxu0 0.0
        %v5357 = vand.u32 %v4197, 4294901760
        %5358 = vmatmul.mubr.f32.gmra.mrb[0].mxu0 %v5357
        %v5359 = vpop.f32.mrb[0].mxu0
        %v5360 = vadd.f32 %v5191, %v5359
        %v5361 = vpop.f32.mrb[0].mxu0
        %5362 = vmatprep.mubr.f32.mxu0 0.0
        %v5363 = vand.u32 %v4200, 4294901760
        %5364 = vmatmul.mubr.f32.gmra.mrb[0].mxu0 %v5363
        %v5365 = vpop.f32.mrb[0].mxu0
        %v5366 = vadd.f32 %v5197, %v5365
        %v5367 = vpop.f32.mrb[0].mxu0
        %5368 = vmatprep.mubr.f32.mxu0 0.0
        %v5369 = vand.u32 %v4203, 4294901760
        %5370 = vmatmul.mubr.f32.gmra.mrb[0].mxu0 %v5369
        %v5371 = vpop.f32.mrb[0].mxu0
        %v5372 = vadd.f32 %v5203, %v5371
        %v5373 = vpop.f32.mrb[0].mxu0
        %5374 = vmatprep.mubr.f32.mxu0 0.0
        %v5375 = vand.u32 %v4206, 4294901760
        %5376 = vmatmul.mubr.f32.gmra.mrb[0].mxu0 %v5375
        %v5377 = vpop.f32.mrb[0].mxu0
        %v5378 = vadd.f32 %v5209, %v5377
        %v5379 = vpop.f32.mrb[0].mxu0
        %5380 = vmatprep.mubr.f32.mxu0 0.0
        %v5381 = vand.u32 %v4209, 4294901760
        %5382 = vmatmul.mubr.f32.gmra.mrb[0].mxu0 %v5381
        %v5383 = vpop.f32.mrb[0].mxu0
        %v5384 = vadd.f32 %v5215, %v5383
        %v5385 = vpop.f32.mrb[0].mxu0
        %5386 = vmatprep.mubr.f32.mxu0 0.0
        %v5387 = vand.u32 %v4212, 4294901760
        %5388 = vmatmul.mubr.f32.gmra.mrb[0].mxu0 %v5387
        %v5389 = vpop.f32.mrb[0].mxu0
        %v5390 = vadd.f32 %v5221, %v5389
        %v5391 = vpop.f32.mrb[0].mxu0
        %5392 = vmatprep.mubr.f32.mxu0 0.0
        %v5393 = vand.u32 %v4215, 4294901760
        %5394 = vmatmul.mubr.f32.gmra.mrb[0].mxu0 %v5393
        %v5395 = vpop.f32.mrb[0].mxu0
        %v5396 = vadd.f32 %v5227, %v5395
        %v5397 = vpop.f32.mrb[0].mxu0
        %5398 = vdwg.mxu0
        %v5399 = vadd.f32 %v5306, %v430
        %v5400 = vadd.f32 %v5312, %v431
        %v5401 = vadd.f32 %v5318, %v432
        %v5402 = vadd.f32 %v5324, %v433
        %v5403 = vadd.f32 %v5330, %v434
        %v5404 = vadd.f32 %v5336, %v435
        %v5405 = vadd.f32 %v5342, %v436
        %v5406 = vadd.f32 %v5348, %v437
        %v5407 = vadd.f32 %v5354, %v438
        %v5408 = vadd.f32 %v5360, %v439
        %v5409 = vadd.f32 %v5366, %v440
        %v5410 = vadd.f32 %v5372, %v441
        %v5411 = vadd.f32 %v5378, %v442
        %v5412 = vadd.f32 %v5384, %v443
        %v5413 = vadd.f32 %v5390, %v444
        %v5414 = vadd.f32 %v5396, %v445
        %5415 = vst.msk [vmem:[%s314] sm:$0xff] %vm457, %v5399
        %5416 = vst.msk [vmem:[%s314 + $0x8] sm:$0xff] %vm457, %v5400
        %5417 = vst.msk [vmem:[%s314 + $0x10] sm:$0xff] %vm457, %v5401
        %5418 = vst.msk [vmem:[%s314 + $0x18] sm:$0xff] %vm457, %v5402
        %5419 = vst.msk [vmem:[%s314 + $0x20] sm:$0xff] %vm457, %v5403
        %5420 = vst.msk [vmem:[%s314 + $0x28] sm:$0xff] %vm457, %v5404
        %5421 = vst.msk [vmem:[%s314 + $0x30] sm:$0xff] %vm457, %v5405
        %5422 = vst.msk [vmem:[%s314 + $0x38] sm:$0xff] %vm457, %v5406
        %5423 = vst.msk [vmem:[%s314 + $0x40] sm:$0xff] %vm457, %v5407
        %5424 = vst.msk [vmem:[%s314 + $0x48] sm:$0xff] %vm457, %v5408
        %5425 = vst.msk [vmem:[%s314 + $0x50] sm:$0xff] %vm457, %v5409
        %5426 = vst.msk [vmem:[%s314 + $0x58] sm:$0xff] %vm457, %v5410
        %5427 = vst.msk [vmem:[%s314 + $0x60] sm:$0xff] %vm457, %v5411
        %5428 = vst.msk [vmem:[%s314 + $0x68] sm:$0xff] %vm457, %v5412
        %5429 = vst.msk [vmem:[%s314 + $0x70] sm:$0xff] %vm457, %v5413
        %5430 = vst.msk [vmem:[%s314 + $0x78] sm:$0xff] %vm457, %v5414
        %s5431 = sand.u32 %s200, 1
        %s5432 = scalar_lea.sflag [#allocation5], %s5431
        %s5433 = sand.u32 %s200, 1
        %s5434 = smul.addr %s5433, 128
        %s5435 = scalar_lea.vmem [#allocation6], %s5434
        // Predicated region
        $region53: #{tpu_custom_call.1} parent=47 // pred_check
          %p5436 = pneg %p210
        $region54: #{tpu_custom_call.1} parent=47 // pred_check_branch
          %5438 = sbr.rel (%p5436) target = $region56
        $region55: #{tpu_custom_call.1} parent=47 // pred_region
          %s5439 = smul.u32 16, %s29
          %s5441 = ssub.s32 2048, 2048
          %5442 = vsyncadd %s5432, %s5441
          %s5443 = smul.addr %s28, 16
          %s5444 = sadd.s32 %s5439, %s5443
          %s5445 = smul.addr %s5444, 128
          %s5446 = scalar_lea.hbm %s7, %s5445
          %s5447 = sshll.u32 %s5435, 4
          %s5448 = int_to_ptr.vmem [resolvable:$true] %s5447
          %5453 = dma.vmem_to_hbm [thread:$0]  %s5448, 2048, %s5446, %s5432, 128, 128, 8
        $region56: #{tpu_custom_call.1} parent=47 // pred_fallthru
          _
      $region48: #{tpu_custom_call.1} parent=5 // pred_fallthru
        _
      %p5454 = scmp.le.s32.totalorder 2, %s19
      // Predicated region
      $region57: #{tpu_custom_call.1} parent=5 // pred_check
        %p5455 = pneg %p5454
      $region58: #{tpu_custom_call.1} parent=5 // pred_check_branch
        %5457 = sbr.rel (%p5455) target = $region60
      $region59: #{tpu_custom_call.1} parent=5 // pred_region
        %s5458 = ssub.s32 %s19, 2
        // Predicated region
        $region61: #{tpu_custom_call.1} parent=59 // pred_check
          %p5459 = pneg %p216
        $region62: #{tpu_custom_call.1} parent=59 // pred_check_branch
          %5461 = sbr.rel (%p5459) target = $region64
        $region63: #{tpu_custom_call.1} parent=59 // pred_region
          %s5462 = sand.u32 %s201, 1
          %s5463 = scalar_lea.sflag [#allocation5], %s5462
          %s5464 = sand.u32 %s201, 1
          %s5465 = smul.addr %s5464, 128
          %s5466 = scalar_lea.vmem [#allocation6], %s5465
          %5467 = dma.done %s5463, 2048
        $region64: #{tpu_custom_call.1} parent=59 // pred_fallthru
          _
      $region60: #{tpu_custom_call.1} parent=5 // pred_fallthru
        _
    $region6: #{tpu_custom_call.1} parent=1 // loop_footer
      %s23 = sadd.s32 1, %s19
    $region7: #{tpu_custom_call.1} parent=1 // loop_footer_branch
      %18 = sbr.rel target = $region3
    $region8: #{tpu_custom_call.1} parent=1 // loop_exit
      _
    %5468 = vsyncpa [#allocation4], 1
    %s5469 = scalar_lea.sflag [#allocation4], 1
    %5470 = vsyncpa %s5469, 1
    %5471 = vsyncpa [#allocation5], 1
    %s5472 = scalar_lea.sflag [#allocation5], 1
    %5473 = vsyncpa %s5472, 1

</llo_original>
